<compile_context>
chip_gen: v7x
topology: tpu7x:2x2x1
jax: 0.10.0
libtpu: 0.0.40
codegen_flags: <defaults>
</compile_context>

<pallas_src>
import functools

import numpy as np
import jax
import jax.numpy as jnp
from jax import lax
from jax.experimental import pallas as pl
from jax.experimental.pallas import tpu as pltpu


def _rup(n, m):
    return ((n + m - 1) // m) * m


# ----------------------------------------------------------------------------- kernel
def _cnn_kernel(block_b, S, S1p, L2, L2p, WEp, Hnp, hmax, pad_l,
                x1_ref, x2_ref, w1_ref, b1_ref, w2_ref, b2_ref, out_ref,
                xpad1, xpad2):
    """One batch block: both branches stacked along M, all windows fused along N.

    x1_ref/x2_ref : (block_b, S, WEp)   word-flattened, lane-padded inputs
    w1_ref        : (hmax, WEp, Hnp)    fused layer-1 weights (mean + windows), per tap
    w2_ref        : (hmax, Hnp, Hnp)    fused block-diagonal layer-2 weights, per tap
    b1_ref/b2_ref : (1, Hnp)
    out_ref       : (1, block_b)        lane-dense clamped cosine similarity
    xpad1/xpad2   : VMEM scratch, zero-padded activations for the 'same' convs
    """
    M2 = 2 * block_b

    def same_conv_relu(xpad, w_ref, b_ref, Lp, Cin):
        # hmax statically-unrolled accumulating matmuls (no concat materialization).
        acc = jnp.dot(xpad[:, 0:Lp, :].reshape(M2 * Lp, Cin), w_ref[0],
                      preferred_element_type=jnp.float32)
        for t in range(1, hmax):
            acc = acc + jnp.dot(xpad[:, t:t + Lp, :].reshape(M2 * Lp, Cin),
                                w_ref[t], preferred_element_type=jnp.float32)
        return jnp.maximum(acc + b_ref[...], 0.0).reshape(M2, Lp, Hnp)

    # ---- stage stacked [x1; x2] into the zero-padded layer-1 scratch ----------
    # Zero fills are intentionally unconditional (megacore-safe under grid sharding).
    tail1 = (S1p + hmax - 1) - (pad_l + S)
    if pad_l > 0:
        xpad1[:, :pad_l, :] = jnp.zeros((M2, pad_l, WEp), jnp.float32)
    if tail1 > 0:
        xpad1[:, pad_l + S:, :] = jnp.zeros((M2, tail1, WEp), jnp.float32)
    xpad1[:block_b, pad_l:pad_l + S, :] = x1_ref[...]
    xpad1[block_b:, pad_l:pad_l + S, :] = x2_ref[...]

    # ---- layer 1: word-mean + taps + windows fused; S1p (8-aligned) rows -------
    y1 = same_conv_relu(xpad1, w1_ref, b1_ref, S1p, WEp)          # (M2, S1p, Hnp)

    # ---- MaxPool1d(kernel=2, stride=1) over the real S positions: S -> S-1 -----
    pooled = jnp.maximum(y1[:, :L2, :], y1[:, 1:L2 + 1, :])       # (M2, L2, Hnp)

    # ---- layer 2: block-diagonal per-window conv; L2p (8-aligned) rows ---------
    tail2 = (L2p + hmax - 1) - (pad_l + L2)
    if pad_l > 0:
        xpad2[:, :pad_l, :] = jnp.zeros((M2, pad_l, Hnp), jnp.float32)
    if tail2 > 0:
        xpad2[:, pad_l + L2:, :] = jnp.zeros((M2, tail2, Hnp), jnp.float32)
    xpad2[:, pad_l:pad_l + L2, :] = pooled

    y2 = same_conv_relu(xpad2, w2_ref, b2_ref, L2p, Hnp)          # (M2, L2p, Hnp)

    # ---- MaxPool1d(kernel = S-1) over the real L2 positions -> (M2, Hnp) -------
    feat = jnp.max(y2[:, :L2, :], axis=1)

    # ---- cosine similarity (rsqrt on EUP) + clamp(0,1), lane-dense store -------
    f1 = feat[:block_b]
    f2 = feat[block_b:]
    dot = jnp.sum(f1 * f2, axis=1)                                # (block_b,)
    n1 = jnp.maximum(jnp.sum(f1 * f1, axis=1), 1e-16)
    n2 = jnp.maximum(jnp.sum(f2 * f2, axis=1), 1e-16)
    cos = dot * lax.rsqrt(n1 * n2)
    out_ref[0, :] = jnp.clip(cos, 0.0, 1.0)


# ----------------------------------------------------------------------------- wrapper
def _fuse_params(params, windows, W, E, H, WEp, Hnp):
    """Build fused, lane-padded weights on the host.

    Layer 1: fold the word-mean (tile over W, scale 1/W), place each window's taps
    on a common slot grid of size hmax (PyTorch 'same' offsets, extra pad on the
    right for even kernels), concatenate windows along output channels, and pad the
    channel/input dims to 128 with zeros (zero columns -> exactly-zero features).
    Layer 2: same slot layout, block-diagonal across windows, padded to 128.
    """
    nw = len(windows)
    hmax = max(windows)
    pad_l_max = (hmax - 1) // 2
    WE = W * E

    w1_all = np.zeros((hmax, WEp, Hnp), np.float32)
    b1_all = np.zeros((1, Hnp), np.float32)
    w2_all = np.zeros((hmax, Hnp, Hnp), np.float32)
    b2_all = np.zeros((1, Hnp), np.float32)

    for wi, (h, (w1, b1, w2, b2)) in enumerate(zip(windows, params)):
        w1 = np.asarray(w1); b1 = np.asarray(b1)
        w2 = np.asarray(w2); b2 = np.asarray(b2)
        pad_l = (h - 1) // 2
        # fold mean over W words: x[..., w*E + ci] contributes w1[j, ci, :] / W
        w1_tiled = np.tile(w1, (1, W, 1)) / float(W)              # (h, W*E, H)
        for j in range(h):
            t = j - pad_l + pad_l_max                             # common tap slot
            w1_all[t, :WE, wi * H:(wi + 1) * H] = w1_tiled[j]
            w2_all[t, wi * H:(wi + 1) * H, wi * H:(wi + 1) * H] = w2[j]
        b1_all[0, wi * H:(wi + 1) * H] = b1[0]
        b2_all[0, wi * H:(wi + 1) * H] = b2[0]

    return (jnp.asarray(w1_all), jnp.asarray(b1_all),
            jnp.asarray(w2_all), jnp.asarray(b2_all), hmax, pad_l_max)


def cnn_forward(x1, x2, params, windows, *, block_b=None):
    """x1, x2: (B, max_n_sent, sent_length, emb_size). Returns (B,) clamped cosine."""
    B, S, W, E = x1.shape
    H = params[0][0].shape[-1]
    nw = len(windows)
    WE = W * E
    Hn = H * nw
    WEp = _rup(WE, 128)                   # pad input-feature lanes to 128
    Hnp = _rup(Hn, 128)                   # pad fused output channels to 128

    w1_all, b1_all, w2_all, b2_all, hmax, pad_l = _fuse_params(
        params, windows, W, E, H, WEp, Hnp)

    # Grid policy: one grid step (block_b = B) is best on single-TC v5e/v6e (the
    # grid is a serial loop).  On v7x (2 TCs/chip) pass block_b = B // 2 so both
    # TensorCores get a grid step ("parallel" axis).
    if block_b is None:
        block_b = B
    block_b = min(block_b, B)
    assert B % block_b == 0, "B must be divisible by block_b"
    assert block_b == B or block_b % 8 == 0, "block_b should be 8-aligned (or == B)"
    nb = B // block_b

    S1p = _rup(S, 8)                      # 8-aligned layer-1 conv rows (extras ignored)
    L2 = S - 1
    L2p = _rup(L2, 8)                     # 8-aligned layer-2 conv rows (extras ignored)

    # Flatten (W, E) -> W*E (word mean is folded into w1) and zero-pad lanes to 128.
    x1f = jnp.pad(x1.reshape(B, S, WE).astype(jnp.float32),
                  ((0, 0), (0, 0), (0, WEp - WE)))
    x2f = jnp.pad(x2.reshape(B, S, WE).astype(jnp.float32),
                  ((0, 0), (0, 0), (0, WEp - WE)))

    kernel = functools.partial(_cnn_kernel, block_b, S, S1p, L2, L2p, WEp, Hnp,
                               hmax, pad_l)

    # Derived (not guessed) VMEM budget: scratch + double-buffered x blocks + resident
    # (double-buffered) weights + output, x2 headroom, capped under v7x's 64 MiB.
    itemsize = 4
    vmem_est = itemsize * (
        2 * block_b * ((S1p + hmax - 1) * WEp + (L2p + hmax - 1) * Hnp)   # scratch
        + 2 * 2 * block_b * S * WEp                                       # x1+x2 blocks
        + 2 * (hmax * WEp * Hnp + hmax * Hnp * Hnp + 2 * Hnp)             # weights+biases
        + 2 * nb * block_b)                                               # output
    vmem_limit = int(min(48 * 1024 * 1024, max(32 * 1024 * 1024, 2 * vmem_est)))

    grid_spec = pltpu.PrefetchScalarGridSpec(
        num_scalar_prefetch=0,
        grid=(nb,),
        in_specs=[
            pl.BlockSpec((block_b, S, WEp), lambda i: (i, 0, 0)),   # x1 batch block
            pl.BlockSpec((block_b, S, WEp), lambda i: (i, 0, 0)),   # x2 batch block
            pl.BlockSpec((hmax, WEp, Hnp), lambda i: (0, 0, 0)),    # fused w1 (resident)
            pl.BlockSpec((1, Hnp), lambda i: (0, 0)),               # fused b1
            pl.BlockSpec((hmax, Hnp, Hnp), lambda i: (0, 0, 0)),    # fused w2 (resident)
            pl.BlockSpec((1, Hnp), lambda i: (0, 0)),               # fused b2
        ],
        out_specs=pl.BlockSpec((1, block_b), lambda i: (i, 0)),     # lane-dense output
        scratch_shapes=[
            pltpu.VMEM((2 * block_b, S1p + hmax - 1, WEp), jnp.float32),  # padded L1 input
            pltpu.VMEM((2 * block_b, L2p + hmax - 1, Hnp), jnp.float32),  # padded L2 input
        ],
    )

    out = pl.pallas_call(
        kernel,
        out_shape=jax.ShapeDtypeStruct((nb, block_b), jnp.float32),
        grid_spec=grid_spec,
        compiler_params=pltpu.CompilerParams(
            dimension_semantics=("parallel",),   # shards the batch grid on v7x megacore
            vmem_limit_bytes=vmem_limit,
        ),
    )(x1f, x2f, w1_all, b1_all, w2_all, b2_all)
    return out.reshape(B)


# ----------------------------------------------------------------------------- params & reference
def init_params(key, emb_size, n_hidden, windows):
    """Deterministic uniform init (PyTorch-like fan-in scaling); synthetic weights."""
    params = []
    for h in windows:
        key, k1, k2, k3, k4 = jax.random.split(key, 5)
        s1 = 1.0 / float(emb_size * h) ** 0.5
        s2 = 1.0 / float(n_hidden * h) ** 0.5
        w1 = jax.random.uniform(k1, (h, emb_size, n_hidden), jnp.float32, -s1, s1)
        b1 = jax.random.uniform(k2, (1, n_hidden), jnp.float32, -s1, s1)
        w2 = jax.random.uniform(k3, (h, n_hidden, n_hidden), jnp.float32, -s2, s2)
        b2 = jax.random.uniform(k4, (1, n_hidden), jnp.float32, -s2, s2)
        params.append((w1, b1, w2, b2))
    return params


def _ref_conv1d_same(x, w, b):
    """Reference Conv1d 'same' (cross-correlation), channels-last. x:(B,L,Cin)."""
    Bn, L, _ = x.shape
    h = w.shape[0]
    pad_l = (h - 1) // 2
    pad_r = (h - 1) - pad_l
    xp = jnp.pad(x, ((0, 0), (pad_l, pad_r), (0, 0)))
    acc = jnp.zeros((Bn, L, w.shape[-1]), jnp.float32)
    for j in range(h):
        acc = acc + jnp.einsum('blc,ch->blh', xp[:, j:j + L, :], w[j])
    return acc + b


def reference_forward(x1, x2, params, windows):
    """Pure-JAX reference mirroring the PyTorch module."""
    def branch(x):
        mid = jnp.mean(x, axis=2)                                    # (B, S, E)
        feats = []
        for (w1, b1, w2, b2), _h in zip(params, windows):
            y = _ref_conv1d_same(mid, w1, b1)
            y = jnp.maximum(y, 0.0)
            y = jnp.maximum(y[:, :-1, :], y[:, 1:, :])               # MaxPool1d(2, stride=1)
            y = _ref_conv1d_same(y, w2, b2)
            y = jnp.maximum(y, 0.0)
            feats.append(jnp.max(y, axis=1))                         # MaxPool1d(S-1)
        return jnp.concatenate(feats, axis=1)
    f1, f2 = branch(x1), branch(x2)
    dot = jnp.sum(f1 * f2, axis=1)
    n1 = jnp.sqrt(jnp.sum(f1 * f1, axis=1))
    n2 = jnp.sqrt(jnp.sum(f2 * f2, axis=1))
    cos = dot / jnp.maximum(n1 * n2, 1e-8)
    return jnp.clip(cos, 0.0, 1.0)


# ----------------------------------------------------------------------------- demo
if __name__ == "__main__":
    EMB_SIZE = 16        # emb_size
    MAX_N_SENT = 8       # max_n_sent  (Conv1d length axis)
    SENT_LENGTH = 6      # sent_length (folded into the layer-1 matmul)
    N_HIDDEN = 32        # n_hidden
    WINDOWS = (2, 3)     # CNN window sizes
    B = 16               # batch

    key = jax.random.PRNGKey(0)
    k_x1, k_x2, k_p = jax.random.split(key, 3)
    x1 = jax.random.normal(k_x1, (B, MAX_N_SENT, SENT_LENGTH, EMB_SIZE), jnp.float32)
    x2 = jax.random.normal(k_x2, (B, MAX_N_SENT, SENT_LENGTH, EMB_SIZE), jnp.float32)
    params = init_params(k_p, EMB_SIZE, N_HIDDEN, WINDOWS)

    y_ref = jax.block_until_ready(reference_forward(x1, x2, params, WINDOWS))

    # Default policy: single grid step (best on single-TC v5e/v6e).
    y_hat = jax.block_until_ready(cnn_forward(x1, x2, params, WINDOWS))
    assert y_hat.shape == (B,)
    assert bool(jnp.all(jnp.isfinite(y_hat)))
    assert bool(jnp.all((y_hat >= 0.0) & (y_hat <= 1.0)))
    assert np.allclose(np.asarray(y_hat), np.asarray(y_ref), rtol=1e-3, atol=1e-3), (
        np.asarray(y_hat), np.asarray(y_ref))

    # Two-step batch grid (the v7x megacore configuration) — same results.
    y_hat2 = jax.block_until_ready(cnn_forward(x1, x2, params, WINDOWS, block_b=B // 2))
    assert y_hat2.shape == (B,)
    assert np.allclose(np.asarray(y_hat2), np.asarray(y_ref), rtol=1e-3, atol=1e-3), (
        np.asarray(y_hat2), np.asarray(y_ref))

    print("KERNEL_OK")
</pallas_src>

<mosaic_0001>
module attributes {stable_mosaic.version = 11 : i64} {
  func.func @_cnn_kernel(%arg0: i32, %arg1: memref<16x8x128xf32, #tpu.memory_space<vmem>>, %arg2: memref<16x8x128xf32, #tpu.memory_space<vmem>>, %arg3: memref<3x128x128xf32, #tpu.memory_space<vmem>>, %arg4: memref<1x128xf32, #tpu.memory_space<vmem>>, %arg5: memref<3x128x128xf32, #tpu.memory_space<vmem>>, %arg6: memref<1x128xf32, #tpu.memory_space<vmem>>, %arg7: memref<1x16xf32, #tpu.memory_space<vmem>>, %arg8: memref<32x10x128xf32, #tpu.memory_space<vmem>>, %arg9: memref<32x10x128xf32, #tpu.memory_space<vmem>>) attributes {dimension_semantics = [#tpu.dimension_semantics<parallel>], iteration_bounds = array<i64: 1>, scalar_prefetch = 0 : i64, scratch_operands = 2 : i64, tpu.core_type = #tpu.core_type<tc>, window_params = [{transform_indices = @transform_0, window_bounds = array<i64: 16, 8, 128>}, {transform_indices = @transform_1, window_bounds = array<i64: 16, 8, 128>}, {pipeline_mode = #tpu.pipeline_mode<synchronous>, transform_indices = @transform_2, window_bounds = array<i64: 3, 128, 128>}, {pipeline_mode = #tpu.pipeline_mode<synchronous>, transform_indices = @transform_3, window_bounds = array<i64: 1, 128>}, {pipeline_mode = #tpu.pipeline_mode<synchronous>, transform_indices = @transform_4, window_bounds = array<i64: 3, 128, 128>}, {pipeline_mode = #tpu.pipeline_mode<synchronous>, transform_indices = @transform_5, window_bounds = array<i64: 1, 128>}, {transform_indices = @transform_6, window_bounds = array<i64: 1, 16>}]} {
    %cst = arith.constant 0.000000e+00 : f32
    %0 = vector.broadcast %cst : f32 to vector<32x1x128xf32>
    %c0 = arith.constant 0 : index
    %c0_0 = arith.constant 0 : index
    %c0_1 = arith.constant 0 : index
    %1 = vector.load %arg8[%c0, %c0_0, %c0_1] : memref<32x10x128xf32, #tpu.memory_space<vmem>>, vector<32x1x128xf32>
    tpu.vector_store %arg8[%c0, %c0_0, %c0_1], %0 {strides = array<i32>} : memref<32x10x128xf32, #tpu.memory_space<vmem>>, vector<32x1x128xf32>,
    %cst_2 = arith.constant 0.000000e+00 : f32
    %2 = vector.broadcast %cst_2 : f32 to vector<32x1x128xf32>
    %c0_3 = arith.constant 0 : index
    %c9 = arith.constant 9 : index
    %c0_4 = arith.constant 0 : index
    %3 = vector.load %arg8[%c0_3, %c9, %c0_4] : memref<32x10x128xf32, #tpu.memory_space<vmem>>, vector<32x1x128xf32>
    tpu.vector_store %arg8[%c0_3, %c9, %c0_4], %2 {strides = array<i32>} : memref<32x10x128xf32, #tpu.memory_space<vmem>>, vector<32x1x128xf32>,
    %c0_5 = arith.constant 0 : index
    %c0_6 = arith.constant 0 : index
    %c0_7 = arith.constant 0 : index
    %4 = vector.load %arg1[%c0_5, %c0_6, %c0_7] : memref<16x8x128xf32, #tpu.memory_space<vmem>>, vector<16x8x128xf32>
    %c0_8 = arith.constant 0 : index
    %c1 = arith.constant 1 : index
    %c0_9 = arith.constant 0 : index
    %5 = vector.load %arg8[%c0_8, %c1, %c0_9] : memref<32x10x128xf32, #tpu.memory_space<vmem>>, vector<16x8x128xf32>
    tpu.vector_store %arg8[%c0_8, %c1, %c0_9], %4 {strides = array<i32>} : memref<32x10x128xf32, #tpu.memory_space<vmem>>, vector<16x8x128xf32>,
    %c0_10 = arith.constant 0 : index
    %c0_11 = arith.constant 0 : index
    %c0_12 = arith.constant 0 : index
    %6 = vector.load %arg2[%c0_10, %c0_11, %c0_12] : memref<16x8x128xf32, #tpu.memory_space<vmem>>, vector<16x8x128xf32>
    %c16 = arith.constant 16 : index
    %c1_13 = arith.constant 1 : index
    %c0_14 = arith.constant 0 : index
    %7 = vector.load %arg8[%c16, %c1_13, %c0_14] : memref<32x10x128xf32, #tpu.memory_space<vmem>>, vector<16x8x128xf32>
    tpu.vector_store %arg8[%c16, %c1_13, %c0_14], %6 {strides = array<i32>} : memref<32x10x128xf32, #tpu.memory_space<vmem>>, vector<16x8x128xf32>,
    %c0_15 = arith.constant 0 : index
    %c0_16 = arith.constant 0 : index
    %c0_17 = arith.constant 0 : index
    %8 = vector.load %arg8[%c0_15, %c0_16, %c0_17] : memref<32x10x128xf32, #tpu.memory_space<vmem>>, vector<32x8x128xf32>
    %9 = vector.shape_cast %8 : vector<32x8x128xf32> to vector<256x128xf32>
    %c0_18 = arith.constant 0 : index
    %c0_19 = arith.constant 0 : index
    %c0_20 = arith.constant 0 : index
    %10 = vector.load %arg3[%c0_18, %c0_19, %c0_20] : memref<3x128x128xf32, #tpu.memory_space<vmem>>, vector<1x128x128xf32>
    %11 = vector.shape_cast %10 : vector<1x128x128xf32> to vector<128x128xf32>
    %cst_21 = arith.constant dense<0.000000e+00> : vector<256x128xf32>
    %12 = tpu.matmul %9, %11, %cst_21 {dimension_numbers = #tpu.dot_dimension_numbers<[1], [0], [0], [1], [0, 0, 1, 1], [], []>} : vector<256x128xf32>, vector<128x128xf32>, vector<256x128xf32> -> vector<256x128xf32>
    %c0_22 = arith.constant 0 : index
    %c1_23 = arith.constant 1 : index
    %c0_24 = arith.constant 0 : index
    %13 = vector.load %arg8[%c0_22, %c1_23, %c0_24] : memref<32x10x128xf32, #tpu.memory_space<vmem>>, vector<32x8x128xf32>
    %14 = vector.shape_cast %13 : vector<32x8x128xf32> to vector<256x128xf32>
    %c1_25 = arith.constant 1 : index
    %c0_26 = arith.constant 0 : index
    %c0_27 = arith.constant 0 : index
    %15 = vector.load %arg3[%c1_25, %c0_26, %c0_27] : memref<3x128x128xf32, #tpu.memory_space<vmem>>, vector<1x128x128xf32>
    %16 = vector.shape_cast %15 : vector<1x128x128xf32> to vector<128x128xf32>
    %cst_28 = arith.constant dense<0.000000e+00> : vector<256x128xf32>
    %17 = tpu.matmul %14, %16, %cst_28 {dimension_numbers = #tpu.dot_dimension_numbers<[1], [0], [0], [1], [0, 0, 1, 1], [], []>} : vector<256x128xf32>, vector<128x128xf32>, vector<256x128xf32> -> vector<256x128xf32>
    %18 = arith.addf %12, %17 : vector<256x128xf32>
    %c0_29 = arith.constant 0 : index
    %c2 = arith.constant 2 : index
    %c0_30 = arith.constant 0 : index
    %19 = vector.load %arg8[%c0_29, %c2, %c0_30] : memref<32x10x128xf32, #tpu.memory_space<vmem>>, vector<32x8x128xf32>
    %20 = vector.shape_cast %19 : vector<32x8x128xf32> to vector<256x128xf32>
    %c2_31 = arith.constant 2 : index
    %c0_32 = arith.constant 0 : index
    %c0_33 = arith.constant 0 : index
    %21 = vector.load %arg3[%c2_31, %c0_32, %c0_33] : memref<3x128x128xf32, #tpu.memory_space<vmem>>, vector<1x128x128xf32>
    %22 = vector.shape_cast %21 : vector<1x128x128xf32> to vector<128x128xf32>
    %cst_34 = arith.constant dense<0.000000e+00> : vector<256x128xf32>
    %23 = tpu.matmul %20, %22, %cst_34 {dimension_numbers = #tpu.dot_dimension_numbers<[1], [0], [0], [1], [0, 0, 1, 1], [], []>} : vector<256x128xf32>, vector<128x128xf32>, vector<256x128xf32> -> vector<256x128xf32>
    %24 = arith.addf %18, %23 : vector<256x128xf32>
    %c0_35 = arith.constant 0 : index
    %c0_36 = arith.constant 0 : index
    %25 = vector.load %arg4[%c0_35, %c0_36] : memref<1x128xf32, #tpu.memory_space<vmem>>, vector<1x128xf32>
    %26 = vector.broadcast %25 : vector<1x128xf32> to vector<256x128xf32>
    %27 = arith.addf %24, %26 : vector<256x128xf32>
    %cst_37 = arith.constant 0.000000e+00 : f32
    %28 = vector.broadcast %cst_37 : f32 to vector<256x128xf32>
    %29 = arith.maximumf %27, %28 : vector<256x128xf32>
    %30 = vector.shape_cast %29 : vector<256x128xf32> to vector<32x8x128xf32>
    %31 = vector.extract_strided_slice %30 {offsets = [0, 0, 0], sizes = [32, 7, 128], strides = [1, 1, 1]} : vector<32x8x128xf32> to vector<32x7x128xf32>
    %32 = vector.extract_strided_slice %30 {offsets = [0, 1, 0], sizes = [32, 7, 128], strides = [1, 1, 1]} : vector<32x8x128xf32> to vector<32x7x128xf32>
    %33 = arith.maximumf %31, %32 : vector<32x7x128xf32>
    %cst_38 = arith.constant 0.000000e+00 : f32
    %34 = vector.broadcast %cst_38 : f32 to vector<32x1x128xf32>
    %c0_39 = arith.constant 0 : index
    %c0_40 = arith.constant 0 : index
    %c0_41 = arith.constant 0 : index
    %35 = vector.load %arg9[%c0_39, %c0_40, %c0_41] : memref<32x10x128xf32, #tpu.memory_space<vmem>>, vector<32x1x128xf32>
    tpu.vector_store %arg9[%c0_39, %c0_40, %c0_41], %34 {strides = array<i32>} : memref<32x10x128xf32, #tpu.memory_space<vmem>>, vector<32x1x128xf32>,
    %cst_42 = arith.constant 0.000000e+00 : f32
    %36 = vector.broadcast %cst_42 : f32 to vector<32x2x128xf32>
    %c0_43 = arith.constant 0 : index
    %c8 = arith.constant 8 : index
    %c0_44 = arith.constant 0 : index
    %37 = vector.load %arg9[%c0_43, %c8, %c0_44] : memref<32x10x128xf32, #tpu.memory_space<vmem>>, vector<32x2x128xf32>
    tpu.vector_store %arg9[%c0_43, %c8, %c0_44], %36 {strides = array<i32>} : memref<32x10x128xf32, #tpu.memory_space<vmem>>, vector<32x2x128xf32>,
    %c0_45 = arith.constant 0 : index
    %c1_46 = arith.constant 1 : index
    %c0_47 = arith.constant 0 : index
    %38 = vector.load %arg9[%c0_45, %c1_46, %c0_47] : memref<32x10x128xf32, #tpu.memory_space<vmem>>, vector<32x7x128xf32>
    tpu.vector_store %arg9[%c0_45, %c1_46, %c0_47], %33 {strides = array<i32>} : memref<32x10x128xf32, #tpu.memory_space<vmem>>, vector<32x7x128xf32>,
    %c0_48 = arith.constant 0 : index
    %c0_49 = arith.constant 0 : index
    %c0_50 = arith.constant 0 : index
    %39 = vector.load %arg9[%c0_48, %c0_49, %c0_50] : memref<32x10x128xf32, #tpu.memory_space<vmem>>, vector<32x8x128xf32>
    %40 = vector.shape_cast %39 : vector<32x8x128xf32> to vector<256x128xf32>
    %c0_51 = arith.constant 0 : index
    %c0_52 = arith.constant 0 : index
    %c0_53 = arith.constant 0 : index
    %41 = vector.load %arg5[%c0_51, %c0_52, %c0_53] : memref<3x128x128xf32, #tpu.memory_space<vmem>>, vector<1x128x128xf32>
    %42 = vector.shape_cast %41 : vector<1x128x128xf32> to vector<128x128xf32>
    %cst_54 = arith.constant dense<0.000000e+00> : vector<256x128xf32>
    %43 = tpu.matmul %40, %42, %cst_54 {dimension_numbers = #tpu.dot_dimension_numbers<[1], [0], [0], [1], [0, 0, 1, 1], [], []>} : vector<256x128xf32>, vector<128x128xf32>, vector<256x128xf32> -> vector<256x128xf32>
    %c0_55 = arith.constant 0 : index
    %c1_56 = arith.constant 1 : index
    %c0_57 = arith.constant 0 : index
    %44 = vector.load %arg9[%c0_55, %c1_56, %c0_57] : memref<32x10x128xf32, #tpu.memory_space<vmem>>, vector<32x8x128xf32>
    %45 = vector.shape_cast %44 : vector<32x8x128xf32> to vector<256x128xf32>
    %c1_58 = arith.constant 1 : index
    %c0_59 = arith.constant 0 : index
    %c0_60 = arith.constant 0 : index
    %46 = vector.load %arg5[%c1_58, %c0_59, %c0_60] : memref<3x128x128xf32, #tpu.memory_space<vmem>>, vector<1x128x128xf32>
    %47 = vector.shape_cast %46 : vector<1x128x128xf32> to vector<128x128xf32>
    %cst_61 = arith.constant dense<0.000000e+00> : vector<256x128xf32>
    %48 = tpu.matmul %45, %47, %cst_61 {dimension_numbers = #tpu.dot_dimension_numbers<[1], [0], [0], [1], [0, 0, 1, 1], [], []>} : vector<256x128xf32>, vector<128x128xf32>, vector<256x128xf32> -> vector<256x128xf32>
    %49 = arith.addf %43, %48 : vector<256x128xf32>
    %c0_62 = arith.constant 0 : index
    %c2_63 = arith.constant 2 : index
    %c0_64 = arith.constant 0 : index
    %50 = vector.load %arg9[%c0_62, %c2_63, %c0_64] : memref<32x10x128xf32, #tpu.memory_space<vmem>>, vector<32x8x128xf32>
    %51 = vector.shape_cast %50 : vector<32x8x128xf32> to vector<256x128xf32>
    %c2_65 = arith.constant 2 : index
    %c0_66 = arith.constant 0 : index
    %c0_67 = arith.constant 0 : index
    %52 = vector.load %arg5[%c2_65, %c0_66, %c0_67] : memref<3x128x128xf32, #tpu.memory_space<vmem>>, vector<1x128x128xf32>
    %53 = vector.shape_cast %52 : vector<1x128x128xf32> to vector<128x128xf32>
    %cst_68 = arith.constant dense<0.000000e+00> : vector<256x128xf32>
    %54 = tpu.matmul %51, %53, %cst_68 {dimension_numbers = #tpu.dot_dimension_numbers<[1], [0], [0], [1], [0, 0, 1, 1], [], []>} : vector<256x128xf32>, vector<128x128xf32>, vector<256x128xf32> -> vector<256x128xf32>
    %55 = arith.addf %49, %54 : vector<256x128xf32>
    %c0_69 = arith.constant 0 : index
    %c0_70 = arith.constant 0 : index
    %56 = vector.load %arg6[%c0_69, %c0_70] : memref<1x128xf32, #tpu.memory_space<vmem>>, vector<1x128xf32>
    %57 = vector.broadcast %56 : vector<1x128xf32> to vector<256x128xf32>
    %58 = arith.addf %55, %57 : vector<256x128xf32>
    %cst_71 = arith.constant 0.000000e+00 : f32
    %59 = vector.broadcast %cst_71 : f32 to vector<256x128xf32>
    %60 = arith.maximumf %58, %59 : vector<256x128xf32>
    %61 = vector.shape_cast %60 : vector<256x128xf32> to vector<32x8x128xf32>
    %62 = vector.extract_strided_slice %61 {offsets = [0, 0, 0], sizes = [32, 7, 128], strides = [1, 1, 1]} : vector<32x8x128xf32> to vector<32x7x128xf32>
    %cst_72 = arith.constant dense<0xFF800000> : vector<32x128xf32>
    %63 = vector.multi_reduction <maximumf>, %62, %cst_72 [1] : vector<32x7x128xf32> to vector<32x128xf32>
    %64 = vector.extract_strided_slice %63 {offsets = [0, 0], sizes = [16, 128], strides = [1, 1]} : vector<32x128xf32> to vector<16x128xf32>
    %65 = vector.extract_strided_slice %63 {offsets = [16, 0], sizes = [16, 128], strides = [1, 1]} : vector<32x128xf32> to vector<16x128xf32>
    %66 = arith.mulf %64, %65 : vector<16x128xf32>
    %cst_73 = arith.constant dense<0.000000e+00> : vector<16xf32>
    %67 = vector.multi_reduction <add>, %66, %cst_73 [1] : vector<16x128xf32> to vector<16xf32>
    %68 = arith.mulf %64, %64 : vector<16x128xf32>
    %cst_74 = arith.constant dense<0.000000e+00> : vector<16xf32>
    %69 = vector.multi_reduction <add>, %68, %cst_74 [1] : vector<16x128xf32> to vector<16xf32>
    %cst_75 = arith.constant 1.000000e-16 : f32
    %70 = vector.broadcast %cst_75 : f32 to vector<16xf32>
    %71 = arith.maximumf %69, %70 : vector<16xf32>
    %72 = arith.mulf %65, %65 : vector<16x128xf32>
    %cst_76 = arith.constant dense<0.000000e+00> : vector<16xf32>
    %73 = vector.multi_reduction <add>, %72, %cst_76 [1] : vector<16x128xf32> to vector<16xf32>
    %cst_77 = arith.constant 1.000000e-16 : f32
    %74 = vector.broadcast %cst_77 : f32 to vector<16xf32>
    %75 = arith.maximumf %73, %74 : vector<16xf32>
    %76 = arith.mulf %71, %75 : vector<16xf32>
    %77 = math.rsqrt %76 : vector<16xf32>
    %78 = arith.mulf %67, %77 : vector<16xf32>
    %cst_78 = arith.constant 0.000000e+00 : f32
    %cst_79 = arith.constant 1.000000e+00 : f32
    %79 = vector.broadcast %cst_78 : f32 to vector<16xf32>
    %80 = arith.maximumf %79, %78 : vector<16xf32>
    %81 = vector.broadcast %cst_79 : f32 to vector<16xf32>
    %82 = arith.minimumf %81, %80 : vector<16xf32>
    %c0_80 = arith.constant 0 : index
    %c0_81 = arith.constant 0 : index
    %83 = vector.load %arg7[%c0_80, %c0_81] : memref<1x16xf32, #tpu.memory_space<vmem>>, vector<1x16xf32>
    %84 = vector.shape_cast %83 : vector<1x16xf32> to vector<16xf32>
    %85 = vector.shape_cast %82 : vector<16xf32> to vector<1x16xf32>
    tpu.vector_store %arg7[%c0_80, %c0_81], %85 {strides = array<i32>} : memref<1x16xf32, #tpu.memory_space<vmem>>, vector<1x16xf32>,
    return
  }
  func.func @transform_0(%arg0: i32) -> (i32, i32, i32) {
    %c0_i32 = arith.constant 0 : i32
    %c0_i32_0 = arith.constant 0 : i32
    %c0_i32_1 = arith.constant 0 : i32
    return %arg0, %c0_i32, %c0_i32_0 : i32, i32, i32
  }
  func.func @transform_1(%arg0: i32) -> (i32, i32, i32) {
    %c0_i32 = arith.constant 0 : i32
    %c0_i32_0 = arith.constant 0 : i32
    %c0_i32_1 = arith.constant 0 : i32
    return %arg0, %c0_i32, %c0_i32_0 : i32, i32, i32
  }
  func.func @transform_2(%arg0: i32) -> (i32, i32, i32) {
    %c0_i32 = arith.constant 0 : i32
    %c0_i32_0 = arith.constant 0 : i32
    %c0_i32_1 = arith.constant 0 : i32
    %c0_i32_2 = arith.constant 0 : i32
    return %c0_i32, %c0_i32_0, %c0_i32_1 : i32, i32, i32
  }
  func.func @transform_3(%arg0: i32) -> (i32, i32) {
    %c0_i32 = arith.constant 0 : i32
    %c0_i32_0 = arith.constant 0 : i32
    %c0_i32_1 = arith.constant 0 : i32
    return %c0_i32, %c0_i32_0 : i32, i32
  }
  func.func @transform_4(%arg0: i32) -> (i32, i32, i32) {
    %c0_i32 = arith.constant 0 : i32
    %c0_i32_0 = arith.constant 0 : i32
    %c0_i32_1 = arith.constant 0 : i32
    %c0_i32_2 = arith.constant 0 : i32
    return %c0_i32, %c0_i32_0, %c0_i32_1 : i32, i32, i32
  }
  func.func @transform_5(%arg0: i32) -> (i32, i32) {
    %c0_i32 = arith.constant 0 : i32
    %c0_i32_0 = arith.constant 0 : i32
    %c0_i32_1 = arith.constant 0 : i32
    return %c0_i32, %c0_i32_0 : i32, i32
  }
  func.func @transform_6(%arg0: i32) -> (i32, i32) {
    %c0_i32 = arith.constant 0 : i32
    %c0_i32_0 = arith.constant 0 : i32
    return %arg0, %c0_i32 : i32, i32
  }
}

</mosaic_0001>

<llo_original>
// kernel: tpu_custom_call.1
$region0: #{tpu_custom_call.1}
  #allocation0 [shape = 'u32[]', space=smem, size = 0x4, offset = 0x4, fixed_abs, tag = 'smem constant byte address 0x4 - core index']
  #allocation1 [shape = 'u32[144,128]{1,0:T(1,128)}', space=vmem, size = 0x12000, scoped, tag = 'internal scratch']
  #allocation2 [shape = 'f32[32,10,128]{2,1,0:T(8,128)}', space=vmem, size = 0x40000, scoped, tag = 'scratch operand']
  #allocation3 [shape = 'f32[32,10,128]{2,1,0:T(8,128)}', space=vmem, size = 0x40000, scoped, tag = 'scratch operand']
  %s0 = inlined_call_operand.hbm [shape: f32[16,8,128], index: 0, kind: input, shape index: {}]
  %s1 = inlined_call_operand.hbm [shape: f32[16,8,128], index: 1, kind: input, shape index: {}]
  %s2 = inlined_call_operand.hbm [shape: f32[3,128,128], index: 2, kind: input, shape index: {}]
  %s3 = inlined_call_operand.vmem [shape: f32[1,128], index: 3, kind: input, shape index: {}]
  %s4 = inlined_call_operand.hbm [shape: f32[3,128,128], index: 4, kind: input, shape index: {}]
  %s5 = inlined_call_operand.vmem [shape: f32[1,128], index: 5, kind: input, shape index: {}]
  %s6 = inlined_call_operand.hbm [shape: f32[1,16], index: 6, kind: output, shape index: {}]
  %s7 = sld [smem:[#allocation0]]
  $region50: #{tpu_custom_call.1} parent=0
    _
  %s9 = ssub.s32 1, %s7
  %s10 = scalar_select 0, %s9, %s7
  $region1: #{tpu_custom_call.1} parent=0
    #allocation4 [shape = 'u8[65536]{0}', space=vmem, size = 0x10000, scoped, tag = 'input window, operand 0, single buffered']
    #allocation5 [shape = 's32[1]{0}', space=sflag, size = 0x4, scoped, tag = 'scoped memory for tpu_custom_call.1']
    #allocation6 [shape = 's32[1]{0}', space=sflag, size = 0x4, scoped, tag = 'scoped memory for tpu_custom_call.1']
    #allocation7 [shape = 'u8[65536]{0}', space=vmem, size = 0x10000, scoped, tag = 'input window, operand 1, single buffered']
    #allocation8 [shape = 's32[1]{0}', space=sflag, size = 0x4, scoped, tag = 'scoped memory for tpu_custom_call.1']
    #allocation9 [shape = 'u8[196608]{0}', space=vmem, size = 0x30000, scoped, tag = 'input window, operand 2, single buffered']
    #allocation10 [shape = 'u8[196608]{0}', space=vmem, size = 0x30000, scoped, tag = 'input window, operand 4, single buffered']
    #allocation11 [shape = 's32[1]{0}', space=sflag, size = 0x4, scoped, tag = 'scoped memory for tpu_custom_call.1']
    #allocation12 [shape = 'u8[512]{0}', space=vmem, size = 0x400, scoped, tag = 'output window, operand 0, single buffered']
    %11 = vsyncpa [#allocation5], 0
    %12 = vsyncpa [#allocation8], 0
    %13 = vsyncpa [#allocation11], 0
    %14 = vsyncpa [#allocation6], 0
    // Predicated region
    $region2: #{tpu_custom_call.1} parent=1 // pred_check
      _
    $region3: #{tpu_custom_call.1} parent=1 // pred_check_branch
      %16 = sbr.rel (0) target = $region5
    $region4: #{tpu_custom_call.1} parent=1 // pred_region
      %s18 = ssub.s32 2048, 2048
      %19 = vsyncadd [#allocation5], %s18
      %s20 = sshll.u32 [#allocation4], 4
      %s21 = int_to_ptr.vmem [resolvable:$true] %s20
      %26 = dma.hbm_to_vmem [thread:$0]  %s0, 2048, %s21, [#allocation5], 128, 128, 8
    $region5: #{tpu_custom_call.1} parent=1 // pred_fallthru
      _
    // Predicated region
    $region6: #{tpu_custom_call.1} parent=1 // pred_check
      _
    $region7: #{tpu_custom_call.1} parent=1 // pred_check_branch
      %28 = sbr.rel (0) target = $region9
    $region8: #{tpu_custom_call.1} parent=1 // pred_region
      %s30 = ssub.s32 2048, 2048
      %31 = vsyncadd [#allocation8], %s30
      %s32 = sshll.u32 [#allocation7], 4
      %s33 = int_to_ptr.vmem [resolvable:$true] %s32
      %38 = dma.hbm_to_vmem [thread:$0]  %s1, 2048, %s33, [#allocation8], 128, 128, 8
    $region9: #{tpu_custom_call.1} parent=1 // pred_fallthru
      _
    // Predicated region
    $region10: #{tpu_custom_call.1} parent=1 // pred_check
      _
    $region11: #{tpu_custom_call.1} parent=1 // pred_check_branch
      %40 = sbr.rel (0) target = $region13
    $region12: #{tpu_custom_call.1} parent=1 // pred_region
      %s42 = ssub.s32 6144, 6144
      %43 = vsyncadd [#allocation8], %s42
      %s44 = sshll.u32 [#allocation9], 4
      %s45 = int_to_ptr.vmem [resolvable:$true] %s44
      %50 = dma.hbm_to_vmem [thread:$0]  %s2, 6144, %s45, [#allocation8], 128, 128, 8
    $region13: #{tpu_custom_call.1} parent=1 // pred_fallthru
      _
    // Predicated region
    $region14: #{tpu_custom_call.1} parent=1 // pred_check
      _
    $region15: #{tpu_custom_call.1} parent=1 // pred_check_branch
      %52 = sbr.rel (0) target = $region17
    $region16: #{tpu_custom_call.1} parent=1 // pred_region
      _
    $region17: #{tpu_custom_call.1} parent=1 // pred_fallthru
      _
    // Predicated region
    $region18: #{tpu_custom_call.1} parent=1 // pred_check
      _
    $region19: #{tpu_custom_call.1} parent=1 // pred_check_branch
      %54 = sbr.rel (0) target = $region21
    $region20: #{tpu_custom_call.1} parent=1 // pred_region
      %s56 = ssub.s32 6144, 6144
      %57 = vsyncadd [#allocation11], %s56
      %s58 = sshll.u32 [#allocation10], 4
      %s59 = int_to_ptr.vmem [resolvable:$true] %s58
      %64 = dma.hbm_to_vmem [thread:$0]  %s4, 6144, %s59, [#allocation11], 128, 128, 8
    $region21: #{tpu_custom_call.1} parent=1 // pred_fallthru
      _
    // Predicated region
    $region22: #{tpu_custom_call.1} parent=1 // pred_check
      _
    $region23: #{tpu_custom_call.1} parent=1 // pred_check_branch
      %66 = sbr.rel (0) target = $region25
    $region24: #{tpu_custom_call.1} parent=1 // pred_region
      _
    $region25: #{tpu_custom_call.1} parent=1 // pred_fallthru
      _
    // Predicated region
    $region26: #{tpu_custom_call.1} parent=1 // pred_check
      _
    $region27: #{tpu_custom_call.1} parent=1 // pred_check_branch
      %68 = sbr.rel (0) target = $region29
    $region28: #{tpu_custom_call.1} parent=1 // pred_region
      %69 = dma.done [#allocation5], 2048
    $region29: #{tpu_custom_call.1} parent=1 // pred_fallthru
      _
    // Predicated region
    $region30: #{tpu_custom_call.1} parent=1 // pred_check
      _
    $region31: #{tpu_custom_call.1} parent=1 // pred_check_branch
      %71 = sbr.rel (0) target = $region33
    $region32: #{tpu_custom_call.1} parent=1 // pred_region
      %72 = dma.done [#allocation8], 2048
    $region33: #{tpu_custom_call.1} parent=1 // pred_fallthru
      _
    // Predicated region
    $region34: #{tpu_custom_call.1} parent=1 // pred_check
      _
    $region35: #{tpu_custom_call.1} parent=1 // pred_check_branch
      %74 = sbr.rel (0) target = $region37
    $region36: #{tpu_custom_call.1} parent=1 // pred_region
      %75 = dma.done [#allocation8], 6144
    $region37: #{tpu_custom_call.1} parent=1 // pred_fallthru
      _
    // Predicated region
    $region38: #{tpu_custom_call.1} parent=1 // pred_check
      _
    $region39: #{tpu_custom_call.1} parent=1 // pred_check_branch
      %77 = sbr.rel (0) target = $region41
    $region40: #{tpu_custom_call.1} parent=1 // pred_region
      %78 = dma.done [#allocation11], 6144
    $region41: #{tpu_custom_call.1} parent=1 // pred_fallthru
      _
    %79 = vst [vmem:[#allocation2] sm:$0x1] 0.0
    %80 = vst [vmem:[#allocation2 + $0x10] sm:$0x1] 0.0
    %81 = vst [vmem:[#allocation2 + $0x20] sm:$0x1] 0.0
    %82 = vst [vmem:[#allocation2 + $0x30] sm:$0x1] 0.0
    %83 = vst [vmem:[#allocation2 + $0x40] sm:$0x1] 0.0
    %84 = vst [vmem:[#allocation2 + $0x50] sm:$0x1] 0.0
    %85 = vst [vmem:[#allocation2 + $0x60] sm:$0x1] 0.0
    %86 = vst [vmem:[#allocation2 + $0x70] sm:$0x1] 0.0
    %87 = vst [vmem:[#allocation2 + $0x80] sm:$0x1] 0.0
    %88 = vst [vmem:[#allocation2 + $0x90] sm:$0x1] 0.0
    %89 = vst [vmem:[#allocation2 + $0xa0] sm:$0x1] 0.0
    %90 = vst [vmem:[#allocation2 + $0xb0] sm:$0x1] 0.0
    %91 = vst [vmem:[#allocation2 + $0xc0] sm:$0x1] 0.0
    %92 = vst [vmem:[#allocation2 + $0xd0] sm:$0x1] 0.0
    %93 = vst [vmem:[#allocation2 + $0xe0] sm:$0x1] 0.0
    %94 = vst [vmem:[#allocation2 + $0xf0] sm:$0x1] 0.0
    %95 = vst [vmem:[#allocation2 + $0x100] sm:$0x1] 0.0
    %96 = vst [vmem:[#allocation2 + $0x110] sm:$0x1] 0.0
    %97 = vst [vmem:[#allocation2 + $0x120] sm:$0x1] 0.0
    %98 = vst [vmem:[#allocation2 + $0x130] sm:$0x1] 0.0
    %99 = vst [vmem:[#allocation2 + $0x140] sm:$0x1] 0.0
    %100 = vst [vmem:[#allocation2 + $0x150] sm:$0x1] 0.0
    %101 = vst [vmem:[#allocation2 + $0x160] sm:$0x1] 0.0
    %102 = vst [vmem:[#allocation2 + $0x170] sm:$0x1] 0.0
    %103 = vst [vmem:[#allocation2 + $0x180] sm:$0x1] 0.0
    %104 = vst [vmem:[#allocation2 + $0x190] sm:$0x1] 0.0
    %105 = vst [vmem:[#allocation2 + $0x1a0] sm:$0x1] 0.0
    %106 = vst [vmem:[#allocation2 + $0x1b0] sm:$0x1] 0.0
    %107 = vst [vmem:[#allocation2 + $0x1c0] sm:$0x1] 0.0
    %108 = vst [vmem:[#allocation2 + $0x1d0] sm:$0x1] 0.0
    %109 = vst [vmem:[#allocation2 + $0x1e0] sm:$0x1] 0.0
    %110 = vst [vmem:[#allocation2 + $0x1f0] sm:$0x1] 0.0
    %111 = vst [vmem:[#allocation2 + $0x9] sm:$0x1] 0.0
    %112 = vst [vmem:[#allocation2 + $0x19] sm:$0x1] 0.0
    %113 = vst [vmem:[#allocation2 + $0x29] sm:$0x1] 0.0
    %114 = vst [vmem:[#allocation2 + $0x39] sm:$0x1] 0.0
    %115 = vst [vmem:[#allocation2 + $0x49] sm:$0x1] 0.0
    %116 = vst [vmem:[#allocation2 + $0x59] sm:$0x1] 0.0
    %117 = vst [vmem:[#allocation2 + $0x69] sm:$0x1] 0.0
    %118 = vst [vmem:[#allocation2 + $0x79] sm:$0x1] 0.0
    %119 = vst [vmem:[#allocation2 + $0x89] sm:$0x1] 0.0
    %120 = vst [vmem:[#allocation2 + $0x99] sm:$0x1] 0.0
    %121 = vst [vmem:[#allocation2 + $0xa9] sm:$0x1] 0.0
    %122 = vst [vmem:[#allocation2 + $0xb9] sm:$0x1] 0.0
    %123 = vst [vmem:[#allocation2 + $0xc9] sm:$0x1] 0.0
    %124 = vst [vmem:[#allocation2 + $0xd9] sm:$0x1] 0.0
    %125 = vst [vmem:[#allocation2 + $0xe9] sm:$0x1] 0.0
    %126 = vst [vmem:[#allocation2 + $0xf9] sm:$0x1] 0.0
    %127 = vst [vmem:[#allocation2 + $0x109] sm:$0x1] 0.0
    %128 = vst [vmem:[#allocation2 + $0x119] sm:$0x1] 0.0
    %129 = vst [vmem:[#allocation2 + $0x129] sm:$0x1] 0.0
    %130 = vst [vmem:[#allocation2 + $0x139] sm:$0x1] 0.0
    %131 = vst [vmem:[#allocation2 + $0x149] sm:$0x1] 0.0
    %132 = vst [vmem:[#allocation2 + $0x159] sm:$0x1] 0.0
    %133 = vst [vmem:[#allocation2 + $0x169] sm:$0x1] 0.0
    %134 = vst [vmem:[#allocation2 + $0x179] sm:$0x1] 0.0
    %135 = vst [vmem:[#allocation2 + $0x189] sm:$0x1] 0.0
    %136 = vst [vmem:[#allocation2 + $0x199] sm:$0x1] 0.0
    %137 = vst [vmem:[#allocation2 + $0x1a9] sm:$0x1] 0.0
    %138 = vst [vmem:[#allocation2 + $0x1b9] sm:$0x1] 0.0
    %139 = vst [vmem:[#allocation2 + $0x1c9] sm:$0x1] 0.0
    %140 = vst [vmem:[#allocation2 + $0x1d9] sm:$0x1] 0.0
    %141 = vst [vmem:[#allocation2 + $0x1e9] sm:$0x1] 0.0
    %142 = vst [vmem:[#allocation2 + $0x1f9] sm:$0x1] 0.0
    %v143 = vld [vmem:[#allocation4] sm:$0xff]
    %v144 = vld [vmem:[#allocation4 + $0x8] sm:$0xff]
    %v145 = vld [vmem:[#allocation4 + $0x10] sm:$0xff]
    %v146 = vld [vmem:[#allocation4 + $0x18] sm:$0xff]
    %v147 = vld [vmem:[#allocation4 + $0x20] sm:$0xff]
    %v148 = vld [vmem:[#allocation4 + $0x28] sm:$0xff]
    %v149 = vld [vmem:[#allocation4 + $0x30] sm:$0xff]
    %v150 = vld [vmem:[#allocation4 + $0x38] sm:$0xff]
    %v151 = vld [vmem:[#allocation4 + $0x40] sm:$0xff]
    %v152 = vld [vmem:[#allocation4 + $0x48] sm:$0xff]
    %v153 = vld [vmem:[#allocation4 + $0x50] sm:$0xff]
    %v154 = vld [vmem:[#allocation4 + $0x58] sm:$0xff]
    %v155 = vld [vmem:[#allocation4 + $0x60] sm:$0xff]
    %v156 = vld [vmem:[#allocation4 + $0x68] sm:$0xff]
    %v157 = vld [vmem:[#allocation4 + $0x70] sm:$0xff]
    %v158 = vld [vmem:[#allocation4 + $0x78] sm:$0xff]
    %159 = vst [vmem:[#allocation2 + $0x1] sm:$0xff] %v143
    %160 = vst [vmem:[#allocation2 + $0x11] sm:$0xff] %v144
    %161 = vst [vmem:[#allocation2 + $0x21] sm:$0xff] %v145
    %162 = vst [vmem:[#allocation2 + $0x31] sm:$0xff] %v146
    %163 = vst [vmem:[#allocation2 + $0x41] sm:$0xff] %v147
    %164 = vst [vmem:[#allocation2 + $0x51] sm:$0xff] %v148
    %165 = vst [vmem:[#allocation2 + $0x61] sm:$0xff] %v149
    %166 = vst [vmem:[#allocation2 + $0x71] sm:$0xff] %v150
    %167 = vst [vmem:[#allocation2 + $0x81] sm:$0xff] %v151
    %168 = vst [vmem:[#allocation2 + $0x91] sm:$0xff] %v152
    %169 = vst [vmem:[#allocation2 + $0xa1] sm:$0xff] %v153
    %170 = vst [vmem:[#allocation2 + $0xb1] sm:$0xff] %v154
    %171 = vst [vmem:[#allocation2 + $0xc1] sm:$0xff] %v155
    %172 = vst [vmem:[#allocation2 + $0xd1] sm:$0xff] %v156
    %173 = vst [vmem:[#allocation2 + $0xe1] sm:$0xff] %v157
    %174 = vst [vmem:[#allocation2 + $0xf1] sm:$0xff] %v158
    %v175 = vld [vmem:[#allocation7] sm:$0xff]
    %v176 = vld [vmem:[#allocation7 + $0x8] sm:$0xff]
    %v177 = vld [vmem:[#allocation7 + $0x10] sm:$0xff]
    %v178 = vld [vmem:[#allocation7 + $0x18] sm:$0xff]
    %v179 = vld [vmem:[#allocation7 + $0x20] sm:$0xff]
    %v180 = vld [vmem:[#allocation7 + $0x28] sm:$0xff]
    %v181 = vld [vmem:[#allocation7 + $0x30] sm:$0xff]
    %v182 = vld [vmem:[#allocation7 + $0x38] sm:$0xff]
    %v183 = vld [vmem:[#allocation7 + $0x40] sm:$0xff]
    %v184 = vld [vmem:[#allocation7 + $0x48] sm:$0xff]
    %v185 = vld [vmem:[#allocation7 + $0x50] sm:$0xff]
    %v186 = vld [vmem:[#allocation7 + $0x58] sm:$0xff]
    %v187 = vld [vmem:[#allocation7 + $0x60] sm:$0xff]
    %v188 = vld [vmem:[#allocation7 + $0x68] sm:$0xff]
    %v189 = vld [vmem:[#allocation7 + $0x70] sm:$0xff]
    %v190 = vld [vmem:[#allocation7 + $0x78] sm:$0xff]
    %s191 = scalar_lea.vmem [#allocation2], 256
    %192 = vst [vmem:[%s191 + $0x1] sm:$0xff] %v175
    %193 = vst [vmem:[%s191 + $0x11] sm:$0xff] %v176
    %194 = vst [vmem:[%s191 + $0x21] sm:$0xff] %v177
    %195 = vst [vmem:[%s191 + $0x31] sm:$0xff] %v178
    %196 = vst [vmem:[%s191 + $0x41] sm:$0xff] %v179
    %197 = vst [vmem:[%s191 + $0x51] sm:$0xff] %v180
    %198 = vst [vmem:[%s191 + $0x61] sm:$0xff] %v181
    %199 = vst [vmem:[%s191 + $0x71] sm:$0xff] %v182
    %200 = vst [vmem:[%s191 + $0x81] sm:$0xff] %v183
    %201 = vst [vmem:[%s191 + $0x91] sm:$0xff] %v184
    %202 = vst [vmem:[%s191 + $0xa1] sm:$0xff] %v185
    %203 = vst [vmem:[%s191 + $0xb1] sm:$0xff] %v186
    %204 = vst [vmem:[%s191 + $0xc1] sm:$0xff] %v187
    %205 = vst [vmem:[%s191 + $0xd1] sm:$0xff] %v188
    %206 = vst [vmem:[%s191 + $0xe1] sm:$0xff] %v189
    %207 = vst [vmem:[%s191 + $0xf1] sm:$0xff] %v190
    %v208 = vld [vmem:[#allocation2] sm:$0xff]
    %v209 = vld [vmem:[#allocation2 + $0x10] sm:$0xff]
    %v210 = vld [vmem:[#allocation2 + $0x20] sm:$0xff]
    %v211 = vld [vmem:[#allocation2 + $0x30] sm:$0xff]
    %v212 = vld [vmem:[#allocation2 + $0x40] sm:$0xff]
    %v213 = vld [vmem:[#allocation2 + $0x50] sm:$0xff]
    %v214 = vld [vmem:[#allocation2 + $0x60] sm:$0xff]
    %v215 = vld [vmem:[#allocation2 + $0x70] sm:$0xff]
    %v216 = vld [vmem:[#allocation2 + $0x80] sm:$0xff]
    %v217 = vld [vmem:[#allocation2 + $0x90] sm:$0xff]
    %v218 = vld [vmem:[#allocation2 + $0xa0] sm:$0xff]
    %v219 = vld [vmem:[#allocation2 + $0xb0] sm:$0xff]
    %v220 = vld [vmem:[#allocation2 + $0xc0] sm:$0xff]
    %v221 = vld [vmem:[#allocation2 + $0xd0] sm:$0xff]
    %v222 = vld [vmem:[#allocation2 + $0xe0] sm:$0xff]
    %v223 = vld [vmem:[#allocation2 + $0xf0] sm:$0xff]
    %v224 = vld [vmem:[#allocation2 + $0x100] sm:$0xff]
    %v225 = vld [vmem:[#allocation2 + $0x110] sm:$0xff]
    %v226 = vld [vmem:[#allocation2 + $0x120] sm:$0xff]
    %v227 = vld [vmem:[#allocation2 + $0x130] sm:$0xff]
    %v228 = vld [vmem:[#allocation2 + $0x140] sm:$0xff]
    %v229 = vld [vmem:[#allocation2 + $0x150] sm:$0xff]
    %v230 = vld [vmem:[#allocation2 + $0x160] sm:$0xff]
    %v231 = vld [vmem:[#allocation2 + $0x170] sm:$0xff]
    %v232 = vld [vmem:[#allocation2 + $0x180] sm:$0xff]
    %v233 = vld [vmem:[#allocation2 + $0x190] sm:$0xff]
    %v234 = vld [vmem:[#allocation2 + $0x1a0] sm:$0xff]
    %v235 = vld [vmem:[#allocation2 + $0x1b0] sm:$0xff]
    %v236 = vld [vmem:[#allocation2 + $0x1c0] sm:$0xff]
    %v237 = vld [vmem:[#allocation2 + $0x1d0] sm:$0xff]
    %v238 = vld [vmem:[#allocation2 + $0x1e0] sm:$0xff]
    %v239 = vld [vmem:[#allocation2 + $0x1f0] sm:$0xff]
    %v240 = vld [vmem:[#allocation9] sm:$0xff]
    %v241 = vld [vmem:[#allocation9 + $0x8] sm:$0xff]
    %v242 = vld [vmem:[#allocation9 + $0x10] sm:$0xff]
    %v243 = vld [vmem:[#allocation9 + $0x18] sm:$0xff]
    %v244 = vld [vmem:[#allocation9 + $0x20] sm:$0xff]
    %v245 = vld [vmem:[#allocation9 + $0x28] sm:$0xff]
    %v246 = vld [vmem:[#allocation9 + $0x30] sm:$0xff]
    %v247 = vld [vmem:[#allocation9 + $0x38] sm:$0xff]
    %v248 = vld [vmem:[#allocation9 + $0x40] sm:$0xff]
    %v249 = vld [vmem:[#allocation9 + $0x48] sm:$0xff]
    %v250 = vld [vmem:[#allocation9 + $0x50] sm:$0xff]
    %v251 = vld [vmem:[#allocation9 + $0x58] sm:$0xff]
    %v252 = vld [vmem:[#allocation9 + $0x60] sm:$0xff]
    %v253 = vld [vmem:[#allocation9 + $0x68] sm:$0xff]
    %v254 = vld [vmem:[#allocation9 + $0x70] sm:$0xff]
    %v255 = vld [vmem:[#allocation9 + $0x78] sm:$0xff]
    %v256 = vld [vmem:[#allocation2 + $0x1] sm:$0xff]
    %v257 = vld [vmem:[#allocation2 + $0x11] sm:$0xff]
    %v258 = vld [vmem:[#allocation2 + $0x21] sm:$0xff]
    %v259 = vld [vmem:[#allocation2 + $0x31] sm:$0xff]
    %v260 = vld [vmem:[#allocation2 + $0x41] sm:$0xff]
    %v261 = vld [vmem:[#allocation2 + $0x51] sm:$0xff]
    %v262 = vld [vmem:[#allocation2 + $0x61] sm:$0xff]
    %v263 = vld [vmem:[#allocation2 + $0x71] sm:$0xff]
    %v264 = vld [vmem:[#allocation2 + $0x81] sm:$0xff]
    %v265 = vld [vmem:[#allocation2 + $0x91] sm:$0xff]
    %v266 = vld [vmem:[#allocation2 + $0xa1] sm:$0xff]
    %v267 = vld [vmem:[#allocation2 + $0xb1] sm:$0xff]
    %v268 = vld [vmem:[#allocation2 + $0xc1] sm:$0xff]
    %v269 = vld [vmem:[#allocation2 + $0xd1] sm:$0xff]
    %v270 = vld [vmem:[#allocation2 + $0xe1] sm:$0xff]
    %v271 = vld [vmem:[#allocation2 + $0xf1] sm:$0xff]
    %v272 = vld [vmem:[#allocation2 + $0x101] sm:$0xff]
    %v273 = vld [vmem:[#allocation2 + $0x111] sm:$0xff]
    %v274 = vld [vmem:[#allocation2 + $0x121] sm:$0xff]
    %v275 = vld [vmem:[#allocation2 + $0x131] sm:$0xff]
    %v276 = vld [vmem:[#allocation2 + $0x141] sm:$0xff]
    %v277 = vld [vmem:[#allocation2 + $0x151] sm:$0xff]
    %v278 = vld [vmem:[#allocation2 + $0x161] sm:$0xff]
    %v279 = vld [vmem:[#allocation2 + $0x171] sm:$0xff]
    %v280 = vld [vmem:[#allocation2 + $0x181] sm:$0xff]
    %v281 = vld [vmem:[#allocation2 + $0x191] sm:$0xff]
    %v282 = vld [vmem:[#allocation2 + $0x1a1] sm:$0xff]
    %v283 = vld [vmem:[#allocation2 + $0x1b1] sm:$0xff]
    %v284 = vld [vmem:[#allocation2 + $0x1c1] sm:$0xff]
    %v285 = vld [vmem:[#allocation2 + $0x1d1] sm:$0xff]
    %v286 = vld [vmem:[#allocation2 + $0x1e1] sm:$0xff]
    %v287 = vld [vmem:[#allocation2 + $0x1f1] sm:$0xff]
    %s288 = scalar_lea.vmem [#allocation9], 128
    %v289 = vld [vmem:[%s288] sm:$0xff]
    %v290 = vld [vmem:[%s288 + $0x8] sm:$0xff]
    %v291 = vld [vmem:[%s288 + $0x10] sm:$0xff]
    %v292 = vld [vmem:[%s288 + $0x18] sm:$0xff]
    %v293 = vld [vmem:[%s288 + $0x20] sm:$0xff]
    %v294 = vld [vmem:[%s288 + $0x28] sm:$0xff]
    %v295 = vld [vmem:[%s288 + $0x30] sm:$0xff]
    %v296 = vld [vmem:[%s288 + $0x38] sm:$0xff]
    %v297 = vld [vmem:[%s288 + $0x40] sm:$0xff]
    %v298 = vld [vmem:[%s288 + $0x48] sm:$0xff]
    %v299 = vld [vmem:[%s288 + $0x50] sm:$0xff]
    %v300 = vld [vmem:[%s288 + $0x58] sm:$0xff]
    %v301 = vld [vmem:[%s288 + $0x60] sm:$0xff]
    %v302 = vld [vmem:[%s288 + $0x68] sm:$0xff]
    %v303 = vld [vmem:[%s288 + $0x70] sm:$0xff]
    %v304 = vld [vmem:[%s288 + $0x78] sm:$0xff]
    %305 = vmatprep.subr.mxu0 0.0
    %306 = vmatpush1.msra.mxu0 %v289
    %307 = vmatprep.subr.mxu0 0.0
    %308 = vmatpush1.msra.mxu0 %v290
    %309 = vmatprep.subr.mxu0 0.0
    %310 = vmatpush1.msra.mxu0 %v291
    %311 = vmatprep.subr.mxu0 0.0
    %312 = vmatpush1.msra.mxu0 %v292
    %313 = vmatprep.subr.mxu0 0.0
    %314 = vmatpush1.msra.mxu0 %v293
    %315 = vmatprep.subr.mxu0 0.0
    %316 = vmatpush1.msra.mxu0 %v294
    %317 = vmatprep.subr.mxu0 0.0
    %318 = vmatpush1.msra.mxu0 %v295
    %319 = vmatprep.subr.mxu0 0.0
    %320 = vmatpush1.msra.mxu0 %v296
    %321 = vmatprep.subr.mxu0 0.0
    %322 = vmatpush1.msra.mxu0 %v297
    %323 = vmatprep.subr.mxu0 0.0
    %324 = vmatpush1.msra.mxu0 %v298
    %325 = vmatprep.subr.mxu0 0.0
    %326 = vmatpush1.msra.mxu0 %v299
    %327 = vmatprep.subr.mxu0 0.0
    %328 = vmatpush1.msra.mxu0 %v300
    %329 = vmatprep.subr.mxu0 0.0
    %330 = vmatpush1.msra.mxu0 %v301
    %331 = vmatprep.subr.mxu0 0.0
    %332 = vmatpush1.msra.mxu0 %v302
    %333 = vmatprep.subr.mxu0 0.0
    %334 = vmatpush1.msra.mxu0 %v303
    %335 = vmatprep.subr.mxu0 0.0
    %336 = vmatpush1.msra.mxu0 %v304
    %337 = vmatprep.subr.mxu0 0.0
    %338 = vmatpush1.msra.mxu0 0.0
    %339 = vmatprep.subr.mxu0 0.0
    %340 = vmatpush1.msra.mxu0 0.0
    %341 = vmatprep.subr.mxu0 0.0
    %342 = vmatpush1.msra.mxu0 0.0
    %343 = vmatprep.subr.mxu0 0.0
    %344 = vmatpush1.msra.mxu0 0.0
    %345 = vmatprep.subr.mxu0 0.0
    %346 = vmatpush1.msra.mxu0 0.0
    %347 = vmatprep.subr.mxu0 0.0
    %348 = vmatpush1.msra.mxu0 0.0
    %349 = vmatprep.subr.mxu0 0.0
    %350 = vmatpush1.msra.mxu0 0.0
    %351 = vmatprep.subr.mxu0 0.0
    %352 = vmatpush1.msra.mxu0 0.0
    %353 = vmatprep.subr.mxu0 0.0
    %354 = vmatpush1.msra.mxu0 0.0
    %355 = vmatprep.subr.mxu0 0.0
    %356 = vmatpush1.msra.mxu0 0.0
    %357 = vmatprep.subr.mxu0 0.0
    %358 = vmatpush1.msra.mxu0 0.0
    %359 = vmatprep.subr.mxu0 0.0
    %360 = vmatpush1.msra.mxu0 0.0
    %361 = vmatprep.subr.mxu0 0.0
    %362 = vmatpush1.msra.mxu0 0.0
    %363 = vmatprep.subr.mxu0 0.0
    %364 = vmatpush1.msra.mxu0 0.0
    %365 = vmatprep.subr.mxu0 0.0
    %366 = vmatpush1.msra.mxu0 0.0
    %367 = vmatprep.subr.mxu0 0.0
    %368 = vmatpush1.msra.mxu0 0.0
    %369 = vmatprep.mubr.f32.mxu0 0.0
    %370 = vmatmul.mubr.f32.gmra.mrb[0].mxu0 %v256
    %v371 = vpop.f32.mrb[0].mxu0
    %v372 = vadd.f32 0.0, %v371
    %v373 = vpop.f32.mrb[0].mxu0
    %374 = vmatprep.mubr.f32.mxu0 0.0
    %375 = vmatmul.mubr.f32.gmra.mrb[0].mxu0 %v257
    %v376 = vpop.f32.mrb[0].mxu0
    %v377 = vadd.f32 0.0, %v376
    %v378 = vpop.f32.mrb[0].mxu0
    %379 = vmatprep.mubr.f32.mxu0 0.0
    %380 = vmatmul.mubr.f32.gmra.mrb[0].mxu0 %v258
    %v381 = vpop.f32.mrb[0].mxu0
    %v382 = vadd.f32 0.0, %v381
    %v383 = vpop.f32.mrb[0].mxu0
    %384 = vmatprep.mubr.f32.mxu0 0.0
    %385 = vmatmul.mubr.f32.gmra.mrb[0].mxu0 %v259
    %v386 = vpop.f32.mrb[0].mxu0
    %v387 = vadd.f32 0.0, %v386
    %v388 = vpop.f32.mrb[0].mxu0
    %389 = vmatprep.mubr.f32.mxu0 0.0
    %390 = vmatmul.mubr.f32.gmra.mrb[0].mxu0 %v260
    %v391 = vpop.f32.mrb[0].mxu0
    %v392 = vadd.f32 0.0, %v391
    %v393 = vpop.f32.mrb[0].mxu0
    %394 = vmatprep.mubr.f32.mxu0 0.0
    %395 = vmatmul.mubr.f32.gmra.mrb[0].mxu0 %v261
    %v396 = vpop.f32.mrb[0].mxu0
    %v397 = vadd.f32 0.0, %v396
    %v398 = vpop.f32.mrb[0].mxu0
    %399 = vmatprep.mubr.f32.mxu0 0.0
    %400 = vmatmul.mubr.f32.gmra.mrb[0].mxu0 %v262
    %v401 = vpop.f32.mrb[0].mxu0
    %v402 = vadd.f32 0.0, %v401
    %v403 = vpop.f32.mrb[0].mxu0
    %404 = vmatprep.mubr.f32.mxu0 0.0
    %405 = vmatmul.mubr.f32.gmra.mrb[0].mxu0 %v263
    %v406 = vpop.f32.mrb[0].mxu0
    %v407 = vadd.f32 0.0, %v406
    %v408 = vpop.f32.mrb[0].mxu0
    %409 = vmatprep.mubr.f32.mxu0 0.0
    %410 = vmatmul.mubr.f32.gmra.mrb[0].mxu0 %v264
    %v411 = vpop.f32.mrb[0].mxu0
    %v412 = vadd.f32 0.0, %v411
    %v413 = vpop.f32.mrb[0].mxu0
    %414 = vmatprep.mubr.f32.mxu0 0.0
    %415 = vmatmul.mubr.f32.gmra.mrb[0].mxu0 %v265
    %v416 = vpop.f32.mrb[0].mxu0
    %v417 = vadd.f32 0.0, %v416
    %v418 = vpop.f32.mrb[0].mxu0
    %419 = vmatprep.mubr.f32.mxu0 0.0
    %420 = vmatmul.mubr.f32.gmra.mrb[0].mxu0 %v266
    %v421 = vpop.f32.mrb[0].mxu0
    %v422 = vadd.f32 0.0, %v421
    %v423 = vpop.f32.mrb[0].mxu0
    %424 = vmatprep.mubr.f32.mxu0 0.0
    %425 = vmatmul.mubr.f32.gmra.mrb[0].mxu0 %v267
    %v426 = vpop.f32.mrb[0].mxu0
    %v427 = vadd.f32 0.0, %v426
    %v428 = vpop.f32.mrb[0].mxu0
    %429 = vmatprep.mubr.f32.mxu0 0.0
    %430 = vmatmul.mubr.f32.gmra.mrb[0].mxu0 %v268
    %v431 = vpop.f32.mrb[0].mxu0
    %v432 = vadd.f32 0.0, %v431
    %v433 = vpop.f32.mrb[0].mxu0
    %434 = vmatprep.mubr.f32.mxu0 0.0
    %435 = vmatmul.mubr.f32.gmra.mrb[0].mxu0 %v269
    %v436 = vpop.f32.mrb[0].mxu0
    %v437 = vadd.f32 0.0, %v436
    %v438 = vpop.f32.mrb[0].mxu0
    %439 = vmatprep.mubr.f32.mxu0 0.0
    %440 = vmatmul.mubr.f32.gmra.mrb[0].mxu0 %v270
    %v441 = vpop.f32.mrb[0].mxu0
    %v442 = vadd.f32 0.0, %v441
    %v443 = vpop.f32.mrb[0].mxu0
    %444 = vmatprep.mubr.f32.mxu0 0.0
    %445 = vmatmul.mubr.f32.gmra.mrb[0].mxu0 %v271
    %v446 = vpop.f32.mrb[0].mxu0
    %v447 = vadd.f32 0.0, %v446
    %v448 = vpop.f32.mrb[0].mxu0
    %449 = vmatprep.mubr.f32.mxu0 0.0
    %450 = vmatmul.mubr.f32.gmra.mrb[0].mxu0 %v272
    %v451 = vpop.f32.mrb[0].mxu0
    %v452 = vadd.f32 0.0, %v451
    %v453 = vpop.f32.mrb[0].mxu0
    %454 = vmatprep.mubr.f32.mxu0 0.0
    %455 = vmatmul.mubr.f32.gmra.mrb[0].mxu0 %v273
    %v456 = vpop.f32.mrb[0].mxu0
    %v457 = vadd.f32 0.0, %v456
    %v458 = vpop.f32.mrb[0].mxu0
    %459 = vmatprep.mubr.f32.mxu0 0.0
    %460 = vmatmul.mubr.f32.gmra.mrb[0].mxu0 %v274
    %v461 = vpop.f32.mrb[0].mxu0
    %v462 = vadd.f32 0.0, %v461
    %v463 = vpop.f32.mrb[0].mxu0
    %464 = vmatprep.mubr.f32.mxu0 0.0
    %465 = vmatmul.mubr.f32.gmra.mrb[0].mxu0 %v275
    %v466 = vpop.f32.mrb[0].mxu0
    %v467 = vadd.f32 0.0, %v466
    %v468 = vpop.f32.mrb[0].mxu0
    %469 = vmatprep.mubr.f32.mxu0 0.0
    %470 = vmatmul.mubr.f32.gmra.mrb[0].mxu0 %v276
    %v471 = vpop.f32.mrb[0].mxu0
    %v472 = vadd.f32 0.0, %v471
    %v473 = vpop.f32.mrb[0].mxu0
    %474 = vmatprep.mubr.f32.mxu0 0.0
    %475 = vmatmul.mubr.f32.gmra.mrb[0].mxu0 %v277
    %v476 = vpop.f32.mrb[0].mxu0
    %v477 = vadd.f32 0.0, %v476
    %v478 = vpop.f32.mrb[0].mxu0
    %479 = vmatprep.mubr.f32.mxu0 0.0
    %480 = vmatmul.mubr.f32.gmra.mrb[0].mxu0 %v278
    %v481 = vpop.f32.mrb[0].mxu0
    %v482 = vadd.f32 0.0, %v481
    %v483 = vpop.f32.mrb[0].mxu0
    %484 = vmatprep.mubr.f32.mxu0 0.0
    %485 = vmatmul.mubr.f32.gmra.mrb[0].mxu0 %v279
    %v486 = vpop.f32.mrb[0].mxu0
    %v487 = vadd.f32 0.0, %v486
    %v488 = vpop.f32.mrb[0].mxu0
    %489 = vmatprep.mubr.f32.mxu0 0.0
    %490 = vmatmul.mubr.f32.gmra.mrb[0].mxu0 %v280
    %v491 = vpop.f32.mrb[0].mxu0
    %v492 = vadd.f32 0.0, %v491
    %v493 = vpop.f32.mrb[0].mxu0
    %494 = vmatprep.mubr.f32.mxu0 0.0
    %495 = vmatmul.mubr.f32.gmra.mrb[0].mxu0 %v281
    %v496 = vpop.f32.mrb[0].mxu0
    %v497 = vadd.f32 0.0, %v496
    %v498 = vpop.f32.mrb[0].mxu0
    %499 = vmatprep.mubr.f32.mxu0 0.0
    %500 = vmatmul.mubr.f32.gmra.mrb[0].mxu0 %v282
    %v501 = vpop.f32.mrb[0].mxu0
    %v502 = vadd.f32 0.0, %v501
    %v503 = vpop.f32.mrb[0].mxu0
    %504 = vmatprep.mubr.f32.mxu0 0.0
    %505 = vmatmul.mubr.f32.gmra.mrb[0].mxu0 %v283
    %v506 = vpop.f32.mrb[0].mxu0
    %v507 = vadd.f32 0.0, %v506
    %v508 = vpop.f32.mrb[0].mxu0
    %509 = vmatprep.mubr.f32.mxu0 0.0
    %510 = vmatmul.mubr.f32.gmra.mrb[0].mxu0 %v284
    %v511 = vpop.f32.mrb[0].mxu0
    %v512 = vadd.f32 0.0, %v511
    %v513 = vpop.f32.mrb[0].mxu0
    %514 = vmatprep.mubr.f32.mxu0 0.0
    %515 = vmatmul.mubr.f32.gmra.mrb[0].mxu0 %v285
    %v516 = vpop.f32.mrb[0].mxu0
    %v517 = vadd.f32 0.0, %v516
    %v518 = vpop.f32.mrb[0].mxu0
    %519 = vmatprep.mubr.f32.mxu0 0.0
    %520 = vmatmul.mubr.f32.gmra.mrb[0].mxu0 %v286
    %v521 = vpop.f32.mrb[0].mxu0
    %v522 = vadd.f32 0.0, %v521
    %v523 = vpop.f32.mrb[0].mxu0
    %524 = vmatprep.mubr.f32.mxu0 0.0
    %525 = vmatmul.mubr.f32.gmra.mrb[0].mxu0 %v287
    %v526 = vpop.f32.mrb[0].mxu0
    %v527 = vadd.f32 0.0, %v526
    %v528 = vpop.f32.mrb[0].mxu0
    %529 = vdwg.mxu0
    %530 = vmatprep.subr.mxu0 0.0
    %531 = vmatpush1.msra.mxu0 %v240
    %532 = vmatprep.subr.mxu0 0.0
    %533 = vmatpush1.msra.mxu0 %v241
    %534 = vmatprep.subr.mxu0 0.0
    %535 = vmatpush1.msra.mxu0 %v242
    %536 = vmatprep.subr.mxu0 0.0
    %537 = vmatpush1.msra.mxu0 %v243
    %538 = vmatprep.subr.mxu0 0.0
    %539 = vmatpush1.msra.mxu0 %v244
    %540 = vmatprep.subr.mxu0 0.0
    %541 = vmatpush1.msra.mxu0 %v245
    %542 = vmatprep.subr.mxu0 0.0
    %543 = vmatpush1.msra.mxu0 %v246
    %544 = vmatprep.subr.mxu0 0.0
    %545 = vmatpush1.msra.mxu0 %v247
    %546 = vmatprep.subr.mxu0 0.0
    %547 = vmatpush1.msra.mxu0 %v248
    %548 = vmatprep.subr.mxu0 0.0
    %549 = vmatpush1.msra.mxu0 %v249
    %550 = vmatprep.subr.mxu0 0.0
    %551 = vmatpush1.msra.mxu0 %v250
    %552 = vmatprep.subr.mxu0 0.0
    %553 = vmatpush1.msra.mxu0 %v251
    %554 = vmatprep.subr.mxu0 0.0
    %555 = vmatpush1.msra.mxu0 %v252
    %556 = vmatprep.subr.mxu0 0.0
    %557 = vmatpush1.msra.mxu0 %v253
    %558 = vmatprep.subr.mxu0 0.0
    %559 = vmatpush1.msra.mxu0 %v254
    %560 = vmatprep.subr.mxu0 0.0
    %561 = vmatpush1.msra.mxu0 %v255
    %562 = vmatprep.subr.mxu0 0.0
    %563 = vmatpush1.msra.mxu0 0.0
    %564 = vmatprep.subr.mxu0 0.0
    %565 = vmatpush1.msra.mxu0 0.0
    %566 = vmatprep.subr.mxu0 0.0
    %567 = vmatpush1.msra.mxu0 0.0
    %568 = vmatprep.subr.mxu0 0.0
    %569 = vmatpush1.msra.mxu0 0.0
    %570 = vmatprep.subr.mxu0 0.0
    %571 = vmatpush1.msra.mxu0 0.0
    %572 = vmatprep.subr.mxu0 0.0
    %573 = vmatpush1.msra.mxu0 0.0
    %574 = vmatprep.subr.mxu0 0.0
    %575 = vmatpush1.msra.mxu0 0.0
    %576 = vmatprep.subr.mxu0 0.0
    %577 = vmatpush1.msra.mxu0 0.0
    %578 = vmatprep.subr.mxu0 0.0
    %579 = vmatpush1.msra.mxu0 0.0
    %580 = vmatprep.subr.mxu0 0.0
    %581 = vmatpush1.msra.mxu0 0.0
    %582 = vmatprep.subr.mxu0 0.0
    %583 = vmatpush1.msra.mxu0 0.0
    %584 = vmatprep.subr.mxu0 0.0
    %585 = vmatpush1.msra.mxu0 0.0
    %586 = vmatprep.subr.mxu0 0.0
    %587 = vmatpush1.msra.mxu0 0.0
    %588 = vmatprep.subr.mxu0 0.0
    %589 = vmatpush1.msra.mxu0 0.0
    %590 = vmatprep.subr.mxu0 0.0
    %591 = vmatpush1.msra.mxu0 0.0
    %592 = vmatprep.subr.mxu0 0.0
    %593 = vmatpush1.msra.mxu0 0.0
    %594 = vmatprep.mubr.f32.mxu0 0.0
    %595 = vmatmul.mubr.f32.gmra.mrb[0].mxu0 %v208
    %v596 = vpop.f32.mrb[0].mxu0
    %v597 = vadd.f32 %v372, %v596
    %v598 = vpop.f32.mrb[0].mxu0
    %599 = vmatprep.mubr.f32.mxu0 0.0
    %600 = vmatmul.mubr.f32.gmra.mrb[0].mxu0 %v209
    %v601 = vpop.f32.mrb[0].mxu0
    %v602 = vadd.f32 %v377, %v601
    %v603 = vpop.f32.mrb[0].mxu0
    %604 = vmatprep.mubr.f32.mxu0 0.0
    %605 = vmatmul.mubr.f32.gmra.mrb[0].mxu0 %v210
    %v606 = vpop.f32.mrb[0].mxu0
    %v607 = vadd.f32 %v382, %v606
    %v608 = vpop.f32.mrb[0].mxu0
    %609 = vmatprep.mubr.f32.mxu0 0.0
    %610 = vmatmul.mubr.f32.gmra.mrb[0].mxu0 %v211
    %v611 = vpop.f32.mrb[0].mxu0
    %v612 = vadd.f32 %v387, %v611
    %v613 = vpop.f32.mrb[0].mxu0
    %614 = vmatprep.mubr.f32.mxu0 0.0
    %615 = vmatmul.mubr.f32.gmra.mrb[0].mxu0 %v212
    %v616 = vpop.f32.mrb[0].mxu0
    %v617 = vadd.f32 %v392, %v616
    %v618 = vpop.f32.mrb[0].mxu0
    %619 = vmatprep.mubr.f32.mxu0 0.0
    %620 = vmatmul.mubr.f32.gmra.mrb[0].mxu0 %v213
    %v621 = vpop.f32.mrb[0].mxu0
    %v622 = vadd.f32 %v397, %v621
    %v623 = vpop.f32.mrb[0].mxu0
    %624 = vmatprep.mubr.f32.mxu0 0.0
    %625 = vmatmul.mubr.f32.gmra.mrb[0].mxu0 %v214
    %v626 = vpop.f32.mrb[0].mxu0
    %v627 = vadd.f32 %v402, %v626
    %v628 = vpop.f32.mrb[0].mxu0
    %629 = vmatprep.mubr.f32.mxu0 0.0
    %630 = vmatmul.mubr.f32.gmra.mrb[0].mxu0 %v215
    %v631 = vpop.f32.mrb[0].mxu0
    %v632 = vadd.f32 %v407, %v631
    %v633 = vpop.f32.mrb[0].mxu0
    %634 = vmatprep.mubr.f32.mxu0 0.0
    %635 = vmatmul.mubr.f32.gmra.mrb[0].mxu0 %v216
    %v636 = vpop.f32.mrb[0].mxu0
    %v637 = vadd.f32 %v412, %v636
    %v638 = vpop.f32.mrb[0].mxu0
    %639 = vmatprep.mubr.f32.mxu0 0.0
    %640 = vmatmul.mubr.f32.gmra.mrb[0].mxu0 %v217
    %v641 = vpop.f32.mrb[0].mxu0
    %v642 = vadd.f32 %v417, %v641
    %v643 = vpop.f32.mrb[0].mxu0
    %644 = vmatprep.mubr.f32.mxu0 0.0
    %645 = vmatmul.mubr.f32.gmra.mrb[0].mxu0 %v218
    %v646 = vpop.f32.mrb[0].mxu0
    %v647 = vadd.f32 %v422, %v646
    %v648 = vpop.f32.mrb[0].mxu0
    %649 = vmatprep.mubr.f32.mxu0 0.0
    %650 = vmatmul.mubr.f32.gmra.mrb[0].mxu0 %v219
    %v651 = vpop.f32.mrb[0].mxu0
    %v652 = vadd.f32 %v427, %v651
    %v653 = vpop.f32.mrb[0].mxu0
    %654 = vmatprep.mubr.f32.mxu0 0.0
    %655 = vmatmul.mubr.f32.gmra.mrb[0].mxu0 %v220
    %v656 = vpop.f32.mrb[0].mxu0
    %v657 = vadd.f32 %v432, %v656
    %v658 = vpop.f32.mrb[0].mxu0
    %659 = vmatprep.mubr.f32.mxu0 0.0
    %660 = vmatmul.mubr.f32.gmra.mrb[0].mxu0 %v221
    %v661 = vpop.f32.mrb[0].mxu0
    %v662 = vadd.f32 %v437, %v661
    %v663 = vpop.f32.mrb[0].mxu0
    %664 = vmatprep.mubr.f32.mxu0 0.0
    %665 = vmatmul.mubr.f32.gmra.mrb[0].mxu0 %v222
    %v666 = vpop.f32.mrb[0].mxu0
    %v667 = vadd.f32 %v442, %v666
    %v668 = vpop.f32.mrb[0].mxu0
    %669 = vmatprep.mubr.f32.mxu0 0.0
    %670 = vmatmul.mubr.f32.gmra.mrb[0].mxu0 %v223
    %v671 = vpop.f32.mrb[0].mxu0
    %v672 = vadd.f32 %v447, %v671
    %v673 = vpop.f32.mrb[0].mxu0
    %674 = vmatprep.mubr.f32.mxu0 0.0
    %675 = vmatmul.mubr.f32.gmra.mrb[0].mxu0 %v224
    %v676 = vpop.f32.mrb[0].mxu0
    %v677 = vadd.f32 %v452, %v676
    %v678 = vpop.f32.mrb[0].mxu0
    %679 = vmatprep.mubr.f32.mxu0 0.0
    %680 = vmatmul.mubr.f32.gmra.mrb[0].mxu0 %v225
    %v681 = vpop.f32.mrb[0].mxu0
    %v682 = vadd.f32 %v457, %v681
    %v683 = vpop.f32.mrb[0].mxu0
    %684 = vmatprep.mubr.f32.mxu0 0.0
    %685 = vmatmul.mubr.f32.gmra.mrb[0].mxu0 %v226
    %v686 = vpop.f32.mrb[0].mxu0
    %v687 = vadd.f32 %v462, %v686
    %v688 = vpop.f32.mrb[0].mxu0
    %689 = vmatprep.mubr.f32.mxu0 0.0
    %690 = vmatmul.mubr.f32.gmra.mrb[0].mxu0 %v227
    %v691 = vpop.f32.mrb[0].mxu0
    %v692 = vadd.f32 %v467, %v691
    %v693 = vpop.f32.mrb[0].mxu0
    %694 = vmatprep.mubr.f32.mxu0 0.0
    %695 = vmatmul.mubr.f32.gmra.mrb[0].mxu0 %v228
    %v696 = vpop.f32.mrb[0].mxu0
    %v697 = vadd.f32 %v472, %v696
    %v698 = vpop.f32.mrb[0].mxu0
    %699 = vmatprep.mubr.f32.mxu0 0.0
    %700 = vmatmul.mubr.f32.gmra.mrb[0].mxu0 %v229
    %v701 = vpop.f32.mrb[0].mxu0
    %v702 = vadd.f32 %v477, %v701
    %v703 = vpop.f32.mrb[0].mxu0
    %704 = vmatprep.mubr.f32.mxu0 0.0
    %705 = vmatmul.mubr.f32.gmra.mrb[0].mxu0 %v230
    %v706 = vpop.f32.mrb[0].mxu0
    %v707 = vadd.f32 %v482, %v706
    %v708 = vpop.f32.mrb[0].mxu0
    %709 = vmatprep.mubr.f32.mxu0 0.0
    %710 = vmatmul.mubr.f32.gmra.mrb[0].mxu0 %v231
    %v711 = vpop.f32.mrb[0].mxu0
    %v712 = vadd.f32 %v487, %v711
    %v713 = vpop.f32.mrb[0].mxu0
    %714 = vmatprep.mubr.f32.mxu0 0.0
    %715 = vmatmul.mubr.f32.gmra.mrb[0].mxu0 %v232
    %v716 = vpop.f32.mrb[0].mxu0
    %v717 = vadd.f32 %v492, %v716
    %v718 = vpop.f32.mrb[0].mxu0
    %719 = vmatprep.mubr.f32.mxu0 0.0
    %720 = vmatmul.mubr.f32.gmra.mrb[0].mxu0 %v233
    %v721 = vpop.f32.mrb[0].mxu0
    %v722 = vadd.f32 %v497, %v721
    %v723 = vpop.f32.mrb[0].mxu0
    %724 = vmatprep.mubr.f32.mxu0 0.0
    %725 = vmatmul.mubr.f32.gmra.mrb[0].mxu0 %v234
    %v726 = vpop.f32.mrb[0].mxu0
    %v727 = vadd.f32 %v502, %v726
    %v728 = vpop.f32.mrb[0].mxu0
    %729 = vmatprep.mubr.f32.mxu0 0.0
    %730 = vmatmul.mubr.f32.gmra.mrb[0].mxu0 %v235
    %v731 = vpop.f32.mrb[0].mxu0
    %v732 = vadd.f32 %v507, %v731
    %v733 = vpop.f32.mrb[0].mxu0
    %734 = vmatprep.mubr.f32.mxu0 0.0
    %735 = vmatmul.mubr.f32.gmra.mrb[0].mxu0 %v236
    %v736 = vpop.f32.mrb[0].mxu0
    %v737 = vadd.f32 %v512, %v736
    %v738 = vpop.f32.mrb[0].mxu0
    %739 = vmatprep.mubr.f32.mxu0 0.0
    %740 = vmatmul.mubr.f32.gmra.mrb[0].mxu0 %v237
    %v741 = vpop.f32.mrb[0].mxu0
    %v742 = vadd.f32 %v517, %v741
    %v743 = vpop.f32.mrb[0].mxu0
    %744 = vmatprep.mubr.f32.mxu0 0.0
    %745 = vmatmul.mubr.f32.gmra.mrb[0].mxu0 %v238
    %v746 = vpop.f32.mrb[0].mxu0
    %v747 = vadd.f32 %v522, %v746
    %v748 = vpop.f32.mrb[0].mxu0
    %749 = vmatprep.mubr.f32.mxu0 0.0
    %750 = vmatmul.mubr.f32.gmra.mrb[0].mxu0 %v239
    %v751 = vpop.f32.mrb[0].mxu0
    %v752 = vadd.f32 %v527, %v751
    %v753 = vpop.f32.mrb[0].mxu0
    %754 = vdwg.mxu0
    %v755 = vld [vmem:[#allocation2 + $0x2] sm:$0xff]
    %v756 = vld [vmem:[#allocation2 + $0x12] sm:$0xff]
    %v757 = vld [vmem:[#allocation2 + $0x22] sm:$0xff]
    %v758 = vld [vmem:[#allocation2 + $0x32] sm:$0xff]
    %v759 = vld [vmem:[#allocation2 + $0x42] sm:$0xff]
    %v760 = vld [vmem:[#allocation2 + $0x52] sm:$0xff]
    %v761 = vld [vmem:[#allocation2 + $0x62] sm:$0xff]
    %v762 = vld [vmem:[#allocation2 + $0x72] sm:$0xff]
    %v763 = vld [vmem:[#allocation2 + $0x82] sm:$0xff]
    %v764 = vld [vmem:[#allocation2 + $0x92] sm:$0xff]
    %v765 = vld [vmem:[#allocation2 + $0xa2] sm:$0xff]
    %v766 = vld [vmem:[#allocation2 + $0xb2] sm:$0xff]
    %v767 = vld [vmem:[#allocation2 + $0xc2] sm:$0xff]
    %v768 = vld [vmem:[#allocation2 + $0xd2] sm:$0xff]
    %v769 = vld [vmem:[#allocation2 + $0xe2] sm:$0xff]
    %v770 = vld [vmem:[#allocation2 + $0xf2] sm:$0xff]
    %v771 = vld [vmem:[#allocation2 + $0x102] sm:$0xff]
    %v772 = vld [vmem:[#allocation2 + $0x112] sm:$0xff]
    %v773 = vld [vmem:[#allocation2 + $0x122] sm:$0xff]
    %v774 = vld [vmem:[#allocation2 + $0x132] sm:$0xff]
    %v775 = vld [vmem:[#allocation2 + $0x142] sm:$0xff]
    %v776 = vld [vmem:[#allocation2 + $0x152] sm:$0xff]
    %v777 = vld [vmem:[#allocation2 + $0x162] sm:$0xff]
    %v778 = vld [vmem:[#allocation2 + $0x172] sm:$0xff]
    %v779 = vld [vmem:[#allocation2 + $0x182] sm:$0xff]
    %v780 = vld [vmem:[#allocation2 + $0x192] sm:$0xff]
    %v781 = vld [vmem:[#allocation2 + $0x1a2] sm:$0xff]
    %v782 = vld [vmem:[#allocation2 + $0x1b2] sm:$0xff]
    %v783 = vld [vmem:[#allocation2 + $0x1c2] sm:$0xff]
    %v784 = vld [vmem:[#allocation2 + $0x1d2] sm:$0xff]
    %v785 = vld [vmem:[#allocation2 + $0x1e2] sm:$0xff]
    %v786 = vld [vmem:[#allocation2 + $0x1f2] sm:$0xff]
    %s787 = scalar_lea.vmem [#allocation9], 256
    %v788 = vld [vmem:[%s787] sm:$0xff]
    %v789 = vld [vmem:[%s787 + $0x8] sm:$0xff]
    %v790 = vld [vmem:[%s787 + $0x10] sm:$0xff]
    %v791 = vld [vmem:[%s787 + $0x18] sm:$0xff]
    %v792 = vld [vmem:[%s787 + $0x20] sm:$0xff]
    %v793 = vld [vmem:[%s787 + $0x28] sm:$0xff]
    %v794 = vld [vmem:[%s787 + $0x30] sm:$0xff]
    %v795 = vld [vmem:[%s787 + $0x38] sm:$0xff]
    %v796 = vld [vmem:[%s787 + $0x40] sm:$0xff]
    %v797 = vld [vmem:[%s787 + $0x48] sm:$0xff]
    %v798 = vld [vmem:[%s787 + $0x50] sm:$0xff]
    %v799 = vld [vmem:[%s787 + $0x58] sm:$0xff]
    %v800 = vld [vmem:[%s787 + $0x60] sm:$0xff]
    %v801 = vld [vmem:[%s787 + $0x68] sm:$0xff]
    %v802 = vld [vmem:[%s787 + $0x70] sm:$0xff]
    %v803 = vld [vmem:[%s787 + $0x78] sm:$0xff]
    %804 = vmatprep.subr.mxu0 0.0
    %805 = vmatpush1.msra.mxu0 %v788
    %806 = vmatprep.subr.mxu0 0.0
    %807 = vmatpush1.msra.mxu0 %v789
    %808 = vmatprep.subr.mxu0 0.0
    %809 = vmatpush1.msra.mxu0 %v790
    %810 = vmatprep.subr.mxu0 0.0
    %811 = vmatpush1.msra.mxu0 %v791
    %812 = vmatprep.subr.mxu0 0.0
    %813 = vmatpush1.msra.mxu0 %v792
    %814 = vmatprep.subr.mxu0 0.0
    %815 = vmatpush1.msra.mxu0 %v793
    %816 = vmatprep.subr.mxu0 0.0
    %817 = vmatpush1.msra.mxu0 %v794
    %818 = vmatprep.subr.mxu0 0.0
    %819 = vmatpush1.msra.mxu0 %v795
    %820 = vmatprep.subr.mxu0 0.0
    %821 = vmatpush1.msra.mxu0 %v796
    %822 = vmatprep.subr.mxu0 0.0
    %823 = vmatpush1.msra.mxu0 %v797
    %824 = vmatprep.subr.mxu0 0.0
    %825 = vmatpush1.msra.mxu0 %v798
    %826 = vmatprep.subr.mxu0 0.0
    %827 = vmatpush1.msra.mxu0 %v799
    %828 = vmatprep.subr.mxu0 0.0
    %829 = vmatpush1.msra.mxu0 %v800
    %830 = vmatprep.subr.mxu0 0.0
    %831 = vmatpush1.msra.mxu0 %v801
    %832 = vmatprep.subr.mxu0 0.0
    %833 = vmatpush1.msra.mxu0 %v802
    %834 = vmatprep.subr.mxu0 0.0
    %835 = vmatpush1.msra.mxu0 %v803
    %836 = vmatprep.subr.mxu0 0.0
    %837 = vmatpush1.msra.mxu0 0.0
    %838 = vmatprep.subr.mxu0 0.0
    %839 = vmatpush1.msra.mxu0 0.0
    %840 = vmatprep.subr.mxu0 0.0
    %841 = vmatpush1.msra.mxu0 0.0
    %842 = vmatprep.subr.mxu0 0.0
    %843 = vmatpush1.msra.mxu0 0.0
    %844 = vmatprep.subr.mxu0 0.0
    %845 = vmatpush1.msra.mxu0 0.0
    %846 = vmatprep.subr.mxu0 0.0
    %847 = vmatpush1.msra.mxu0 0.0
    %848 = vmatprep.subr.mxu0 0.0
    %849 = vmatpush1.msra.mxu0 0.0
    %850 = vmatprep.subr.mxu0 0.0
    %851 = vmatpush1.msra.mxu0 0.0
    %852 = vmatprep.subr.mxu0 0.0
    %853 = vmatpush1.msra.mxu0 0.0
    %854 = vmatprep.subr.mxu0 0.0
    %855 = vmatpush1.msra.mxu0 0.0
    %856 = vmatprep.subr.mxu0 0.0
    %857 = vmatpush1.msra.mxu0 0.0
    %858 = vmatprep.subr.mxu0 0.0
    %859 = vmatpush1.msra.mxu0 0.0
    %860 = vmatprep.subr.mxu0 0.0
    %861 = vmatpush1.msra.mxu0 0.0
    %862 = vmatprep.subr.mxu0 0.0
    %863 = vmatpush1.msra.mxu0 0.0
    %864 = vmatprep.subr.mxu0 0.0
    %865 = vmatpush1.msra.mxu0 0.0
    %866 = vmatprep.subr.mxu0 0.0
    %867 = vmatpush1.msra.mxu0 0.0
    %868 = vmatprep.mubr.f32.mxu0 0.0
    %869 = vmatmul.mubr.f32.gmra.mrb[0].mxu0 %v755
    %v870 = vpop.f32.mrb[0].mxu0
    %v871 = vadd.f32 0.0, %v870
    %v872 = vpop.f32.mrb[0].mxu0
    %873 = vmatprep.mubr.f32.mxu0 0.0
    %874 = vmatmul.mubr.f32.gmra.mrb[0].mxu0 %v756
    %v875 = vpop.f32.mrb[0].mxu0
    %v876 = vadd.f32 0.0, %v875
    %v877 = vpop.f32.mrb[0].mxu0
    %878 = vmatprep.mubr.f32.mxu0 0.0
    %879 = vmatmul.mubr.f32.gmra.mrb[0].mxu0 %v757
    %v880 = vpop.f32.mrb[0].mxu0
    %v881 = vadd.f32 0.0, %v880
    %v882 = vpop.f32.mrb[0].mxu0
    %883 = vmatprep.mubr.f32.mxu0 0.0
    %884 = vmatmul.mubr.f32.gmra.mrb[0].mxu0 %v758
    %v885 = vpop.f32.mrb[0].mxu0
    %v886 = vadd.f32 0.0, %v885
    %v887 = vpop.f32.mrb[0].mxu0
    %888 = vmatprep.mubr.f32.mxu0 0.0
    %889 = vmatmul.mubr.f32.gmra.mrb[0].mxu0 %v759
    %v890 = vpop.f32.mrb[0].mxu0
    %v891 = vadd.f32 0.0, %v890
    %v892 = vpop.f32.mrb[0].mxu0
    %893 = vmatprep.mubr.f32.mxu0 0.0
    %894 = vmatmul.mubr.f32.gmra.mrb[0].mxu0 %v760
    %v895 = vpop.f32.mrb[0].mxu0
    %v896 = vadd.f32 0.0, %v895
    %v897 = vpop.f32.mrb[0].mxu0
    %898 = vmatprep.mubr.f32.mxu0 0.0
    %899 = vmatmul.mubr.f32.gmra.mrb[0].mxu0 %v761
    %v900 = vpop.f32.mrb[0].mxu0
    %v901 = vadd.f32 0.0, %v900
    %v902 = vpop.f32.mrb[0].mxu0
    %903 = vmatprep.mubr.f32.mxu0 0.0
    %904 = vmatmul.mubr.f32.gmra.mrb[0].mxu0 %v762
    %v905 = vpop.f32.mrb[0].mxu0
    %v906 = vadd.f32 0.0, %v905
    %v907 = vpop.f32.mrb[0].mxu0
    %908 = vmatprep.mubr.f32.mxu0 0.0
    %909 = vmatmul.mubr.f32.gmra.mrb[0].mxu0 %v763
    %v910 = vpop.f32.mrb[0].mxu0
    %v911 = vadd.f32 0.0, %v910
    %v912 = vpop.f32.mrb[0].mxu0
    %913 = vmatprep.mubr.f32.mxu0 0.0
    %914 = vmatmul.mubr.f32.gmra.mrb[0].mxu0 %v764
    %v915 = vpop.f32.mrb[0].mxu0
    %v916 = vadd.f32 0.0, %v915
    %v917 = vpop.f32.mrb[0].mxu0
    %918 = vmatprep.mubr.f32.mxu0 0.0
    %919 = vmatmul.mubr.f32.gmra.mrb[0].mxu0 %v765
    %v920 = vpop.f32.mrb[0].mxu0
    %v921 = vadd.f32 0.0, %v920
    %v922 = vpop.f32.mrb[0].mxu0
    %923 = vmatprep.mubr.f32.mxu0 0.0
    %924 = vmatmul.mubr.f32.gmra.mrb[0].mxu0 %v766
    %v925 = vpop.f32.mrb[0].mxu0
    %v926 = vadd.f32 0.0, %v925
    %v927 = vpop.f32.mrb[0].mxu0
    %928 = vmatprep.mubr.f32.mxu0 0.0
    %929 = vmatmul.mubr.f32.gmra.mrb[0].mxu0 %v767
    %v930 = vpop.f32.mrb[0].mxu0
    %v931 = vadd.f32 0.0, %v930
    %v932 = vpop.f32.mrb[0].mxu0
    %933 = vmatprep.mubr.f32.mxu0 0.0
    %934 = vmatmul.mubr.f32.gmra.mrb[0].mxu0 %v768
    %v935 = vpop.f32.mrb[0].mxu0
    %v936 = vadd.f32 0.0, %v935
    %v937 = vpop.f32.mrb[0].mxu0
    %938 = vmatprep.mubr.f32.mxu0 0.0
    %939 = vmatmul.mubr.f32.gmra.mrb[0].mxu0 %v769
    %v940 = vpop.f32.mrb[0].mxu0
    %v941 = vadd.f32 0.0, %v940
    %v942 = vpop.f32.mrb[0].mxu0
    %943 = vmatprep.mubr.f32.mxu0 0.0
    %944 = vmatmul.mubr.f32.gmra.mrb[0].mxu0 %v770
    %v945 = vpop.f32.mrb[0].mxu0
    %v946 = vadd.f32 0.0, %v945
    %v947 = vpop.f32.mrb[0].mxu0
    %948 = vmatprep.mubr.f32.mxu0 0.0
    %949 = vmatmul.mubr.f32.gmra.mrb[0].mxu0 %v771
    %v950 = vpop.f32.mrb[0].mxu0
    %v951 = vadd.f32 0.0, %v950
    %v952 = vpop.f32.mrb[0].mxu0
    %953 = vmatprep.mubr.f32.mxu0 0.0
    %954 = vmatmul.mubr.f32.gmra.mrb[0].mxu0 %v772
    %v955 = vpop.f32.mrb[0].mxu0
    %v956 = vadd.f32 0.0, %v955
    %v957 = vpop.f32.mrb[0].mxu0
    %958 = vmatprep.mubr.f32.mxu0 0.0
    %959 = vmatmul.mubr.f32.gmra.mrb[0].mxu0 %v773
    %v960 = vpop.f32.mrb[0].mxu0
    %v961 = vadd.f32 0.0, %v960
    %v962 = vpop.f32.mrb[0].mxu0
    %963 = vmatprep.mubr.f32.mxu0 0.0
    %964 = vmatmul.mubr.f32.gmra.mrb[0].mxu0 %v774
    %v965 = vpop.f32.mrb[0].mxu0
    %v966 = vadd.f32 0.0, %v965
    %v967 = vpop.f32.mrb[0].mxu0
    %968 = vmatprep.mubr.f32.mxu0 0.0
    %969 = vmatmul.mubr.f32.gmra.mrb[0].mxu0 %v775
    %v970 = vpop.f32.mrb[0].mxu0
    %v971 = vadd.f32 0.0, %v970
    %v972 = vpop.f32.mrb[0].mxu0
    %973 = vmatprep.mubr.f32.mxu0 0.0
    %974 = vmatmul.mubr.f32.gmra.mrb[0].mxu0 %v776
    %v975 = vpop.f32.mrb[0].mxu0
    %v976 = vadd.f32 0.0, %v975
    %v977 = vpop.f32.mrb[0].mxu0
    %978 = vmatprep.mubr.f32.mxu0 0.0
    %979 = vmatmul.mubr.f32.gmra.mrb[0].mxu0 %v777
    %v980 = vpop.f32.mrb[0].mxu0
    %v981 = vadd.f32 0.0, %v980
    %v982 = vpop.f32.mrb[0].mxu0
    %983 = vmatprep.mubr.f32.mxu0 0.0
    %984 = vmatmul.mubr.f32.gmra.mrb[0].mxu0 %v778
    %v985 = vpop.f32.mrb[0].mxu0
    %v986 = vadd.f32 0.0, %v985
    %v987 = vpop.f32.mrb[0].mxu0
    %988 = vmatprep.mubr.f32.mxu0 0.0
    %989 = vmatmul.mubr.f32.gmra.mrb[0].mxu0 %v779
    %v990 = vpop.f32.mrb[0].mxu0
    %v991 = vadd.f32 0.0, %v990
    %v992 = vpop.f32.mrb[0].mxu0
    %993 = vmatprep.mubr.f32.mxu0 0.0
    %994 = vmatmul.mubr.f32.gmra.mrb[0].mxu0 %v780
    %v995 = vpop.f32.mrb[0].mxu0
    %v996 = vadd.f32 0.0, %v995
    %v997 = vpop.f32.mrb[0].mxu0
    %998 = vmatprep.mubr.f32.mxu0 0.0
    %999 = vmatmul.mubr.f32.gmra.mrb[0].mxu0 %v781
    %v1000 = vpop.f32.mrb[0].mxu0
    %v1001 = vadd.f32 0.0, %v1000
    %v1002 = vpop.f32.mrb[0].mxu0
    %1003 = vmatprep.mubr.f32.mxu0 0.0
    %1004 = vmatmul.mubr.f32.gmra.mrb[0].mxu0 %v782
    %v1005 = vpop.f32.mrb[0].mxu0
    %v1006 = vadd.f32 0.0, %v1005
    %v1007 = vpop.f32.mrb[0].mxu0
    %1008 = vmatprep.mubr.f32.mxu0 0.0
    %1009 = vmatmul.mubr.f32.gmra.mrb[0].mxu0 %v783
    %v1010 = vpop.f32.mrb[0].mxu0
    %v1011 = vadd.f32 0.0, %v1010
    %v1012 = vpop.f32.mrb[0].mxu0
    %1013 = vmatprep.mubr.f32.mxu0 0.0
    %1014 = vmatmul.mubr.f32.gmra.mrb[0].mxu0 %v784
    %v1015 = vpop.f32.mrb[0].mxu0
    %v1016 = vadd.f32 0.0, %v1015
    %v1017 = vpop.f32.mrb[0].mxu0
    %1018 = vmatprep.mubr.f32.mxu0 0.0
    %1019 = vmatmul.mubr.f32.gmra.mrb[0].mxu0 %v785
    %v1020 = vpop.f32.mrb[0].mxu0
    %v1021 = vadd.f32 0.0, %v1020
    %v1022 = vpop.f32.mrb[0].mxu0
    %1023 = vmatprep.mubr.f32.mxu0 0.0
    %1024 = vmatmul.mubr.f32.gmra.mrb[0].mxu0 %v786
    %v1025 = vpop.f32.mrb[0].mxu0
    %v1026 = vadd.f32 0.0, %v1025
    %v1027 = vpop.f32.mrb[0].mxu0
    %1028 = vdwg.mxu0
    %v1029 = vadd.f32 %v597, %v871
    %v1030 = vadd.f32 %v602, %v876
    %v1031 = vadd.f32 %v607, %v881
    %v1032 = vadd.f32 %v612, %v886
    %v1033 = vadd.f32 %v617, %v891
    %v1034 = vadd.f32 %v622, %v896
    %v1035 = vadd.f32 %v627, %v901
    %v1036 = vadd.f32 %v632, %v906
    %v1037 = vadd.f32 %v637, %v911
    %v1038 = vadd.f32 %v642, %v916
    %v1039 = vadd.f32 %v647, %v921
    %v1040 = vadd.f32 %v652, %v926
    %v1041 = vadd.f32 %v657, %v931
    %v1042 = vadd.f32 %v662, %v936
    %v1043 = vadd.f32 %v667, %v941
    %v1044 = vadd.f32 %v672, %v946
    %v1045 = vadd.f32 %v677, %v951
    %v1046 = vadd.f32 %v682, %v956
    %v1047 = vadd.f32 %v687, %v961
    %v1048 = vadd.f32 %v692, %v966
    %v1049 = vadd.f32 %v697, %v971
    %v1050 = vadd.f32 %v702, %v976
    %v1051 = vadd.f32 %v707, %v981
    %v1052 = vadd.f32 %v712, %v986
    %v1053 = vadd.f32 %v717, %v991
    %v1054 = vadd.f32 %v722, %v996
    %v1055 = vadd.f32 %v727, %v1001
    %v1056 = vadd.f32 %v732, %v1006
    %v1057 = vadd.f32 %v737, %v1011
    %v1058 = vadd.f32 %v742, %v1016
    %v1059 = vadd.f32 %v747, %v1021
    %v1060 = vadd.f32 %v752, %v1026
    %v1061 = vld [vmem:[%s3] sm:$0x1]
    %v1063 = vlaneseq
    %v1064 = vshrl.u32 %v1063, 7
    %v1065 = vsub.s32 0, %v1064
    %v1066 = vrot.slane %v1061, %v1065
    %v1068 = vadd.f32 %v1029, %v1066
    %v1069 = vadd.f32 %v1030, %v1066
    %v1070 = vadd.f32 %v1031, %v1066
    %v1071 = vadd.f32 %v1032, %v1066
    %v1072 = vadd.f32 %v1033, %v1066
    %v1073 = vadd.f32 %v1034, %v1066
    %v1074 = vadd.f32 %v1035, %v1066
    %v1075 = vadd.f32 %v1036, %v1066
    %v1076 = vadd.f32 %v1037, %v1066
    %v1077 = vadd.f32 %v1038, %v1066
    %v1078 = vadd.f32 %v1039, %v1066
    %v1079 = vadd.f32 %v1040, %v1066
    %v1080 = vadd.f32 %v1041, %v1066
    %v1081 = vadd.f32 %v1042, %v1066
    %v1082 = vadd.f32 %v1043, %v1066
    %v1083 = vadd.f32 %v1044, %v1066
    %v1084 = vadd.f32 %v1045, %v1066
    %v1085 = vadd.f32 %v1046, %v1066
    %v1086 = vadd.f32 %v1047, %v1066
    %v1087 = vadd.f32 %v1048, %v1066
    %v1088 = vadd.f32 %v1049, %v1066
    %v1089 = vadd.f32 %v1050, %v1066
    %v1090 = vadd.f32 %v1051, %v1066
    %v1091 = vadd.f32 %v1052, %v1066
    %v1092 = vadd.f32 %v1053, %v1066
    %v1093 = vadd.f32 %v1054, %v1066
    %v1094 = vadd.f32 %v1055, %v1066
    %v1095 = vadd.f32 %v1056, %v1066
    %v1096 = vadd.f32 %v1057, %v1066
    %v1097 = vadd.f32 %v1058, %v1066
    %v1098 = vadd.f32 %v1059, %v1066
    %v1099 = vadd.f32 %v1060, %v1066
    %v1100 = vmax.f32 %v1068, 0.0
    %v1101 = vmax.f32 %v1069, 0.0
    %v1102 = vmax.f32 %v1070, 0.0
    %v1103 = vmax.f32 %v1071, 0.0
    %v1104 = vmax.f32 %v1072, 0.0
    %v1105 = vmax.f32 %v1073, 0.0
    %v1106 = vmax.f32 %v1074, 0.0
    %v1107 = vmax.f32 %v1075, 0.0
    %v1108 = vmax.f32 %v1076, 0.0
    %v1109 = vmax.f32 %v1077, 0.0
    %v1110 = vmax.f32 %v1078, 0.0
    %v1111 = vmax.f32 %v1079, 0.0
    %v1112 = vmax.f32 %v1080, 0.0
    %v1113 = vmax.f32 %v1081, 0.0
    %v1114 = vmax.f32 %v1082, 0.0
    %v1115 = vmax.f32 %v1083, 0.0
    %v1116 = vmax.f32 %v1084, 0.0
    %v1117 = vmax.f32 %v1085, 0.0
    %v1118 = vmax.f32 %v1086, 0.0
    %v1119 = vmax.f32 %v1087, 0.0
    %v1120 = vmax.f32 %v1088, 0.0
    %v1121 = vmax.f32 %v1089, 0.0
    %v1122 = vmax.f32 %v1090, 0.0
    %v1123 = vmax.f32 %v1091, 0.0
    %v1124 = vmax.f32 %v1092, 0.0
    %v1125 = vmax.f32 %v1093, 0.0
    %v1126 = vmax.f32 %v1094, 0.0
    %v1127 = vmax.f32 %v1095, 0.0
    %v1128 = vmax.f32 %v1096, 0.0
    %v1129 = vmax.f32 %v1097, 0.0
    %v1130 = vmax.f32 %v1098, 0.0
    %v1131 = vmax.f32 %v1099, 0.0
    %v1164 = vrot.slane %v1100, 1
    %v1165 = vrot.slane %v1101, 1
    %v1166 = vrot.slane %v1102, 1
    %v1167 = vrot.slane %v1103, 1
    %v1168 = vrot.slane %v1104, 1
    %v1169 = vrot.slane %v1105, 1
    %v1170 = vrot.slane %v1106, 1
    %v1171 = vrot.slane %v1107, 1
    %v1172 = vrot.slane %v1108, 1
    %v1173 = vrot.slane %v1109, 1
    %v1174 = vrot.slane %v1110, 1
    %v1175 = vrot.slane %v1111, 1
    %v1176 = vrot.slane %v1112, 1
    %v1177 = vrot.slane %v1113, 1
    %v1178 = vrot.slane %v1114, 1
    %v1179 = vrot.slane %v1115, 1
    %v1180 = vrot.slane %v1116, 1
    %v1181 = vrot.slane %v1117, 1
    %v1182 = vrot.slane %v1118, 1
    %v1183 = vrot.slane %v1119, 1
    %v1184 = vrot.slane %v1120, 1
    %v1185 = vrot.slane %v1121, 1
    %v1186 = vrot.slane %v1122, 1
    %v1187 = vrot.slane %v1123, 1
    %v1188 = vrot.slane %v1124, 1
    %v1189 = vrot.slane %v1125, 1
    %v1190 = vrot.slane %v1126, 1
    %v1191 = vrot.slane %v1127, 1
    %v1192 = vrot.slane %v1128, 1
    %v1193 = vrot.slane %v1129, 1
    %v1194 = vrot.slane %v1130, 1
    %v1195 = vrot.slane %v1131, 1
    %v1228 = vmax.f32 %v1100, %v1164
    %v1229 = vmax.f32 %v1101, %v1165
    %v1230 = vmax.f32 %v1102, %v1166
    %v1231 = vmax.f32 %v1103, %v1167
    %v1232 = vmax.f32 %v1104, %v1168
    %v1233 = vmax.f32 %v1105, %v1169
    %v1234 = vmax.f32 %v1106, %v1170
    %v1235 = vmax.f32 %v1107, %v1171
    %v1236 = vmax.f32 %v1108, %v1172
    %v1237 = vmax.f32 %v1109, %v1173
    %v1238 = vmax.f32 %v1110, %v1174
    %v1239 = vmax.f32 %v1111, %v1175
    %v1240 = vmax.f32 %v1112, %v1176
    %v1241 = vmax.f32 %v1113, %v1177
    %v1242 = vmax.f32 %v1114, %v1178
    %v1243 = vmax.f32 %v1115, %v1179
    %v1244 = vmax.f32 %v1116, %v1180
    %v1245 = vmax.f32 %v1117, %v1181
    %v1246 = vmax.f32 %v1118, %v1182
    %v1247 = vmax.f32 %v1119, %v1183
    %v1248 = vmax.f32 %v1120, %v1184
    %v1249 = vmax.f32 %v1121, %v1185
    %v1250 = vmax.f32 %v1122, %v1186
    %v1251 = vmax.f32 %v1123, %v1187
    %v1252 = vmax.f32 %v1124, %v1188
    %v1253 = vmax.f32 %v1125, %v1189
    %v1254 = vmax.f32 %v1126, %v1190
    %v1255 = vmax.f32 %v1127, %v1191
    %v1256 = vmax.f32 %v1128, %v1192
    %v1257 = vmax.f32 %v1129, %v1193
    %v1258 = vmax.f32 %v1130, %v1194
    %v1259 = vmax.f32 %v1131, %v1195
    %1260 = vst [vmem:[#allocation3] sm:$0x1] 0.0
    %1261 = vst [vmem:[#allocation3 + $0x10] sm:$0x1] 0.0
    %1262 = vst [vmem:[#allocation3 + $0x20] sm:$0x1] 0.0
    %1263 = vst [vmem:[#allocation3 + $0x30] sm:$0x1] 0.0
    %1264 = vst [vmem:[#allocation3 + $0x40] sm:$0x1] 0.0
    %1265 = vst [vmem:[#allocation3 + $0x50] sm:$0x1] 0.0
    %1266 = vst [vmem:[#allocation3 + $0x60] sm:$0x1] 0.0
    %1267 = vst [vmem:[#allocation3 + $0x70] sm:$0x1] 0.0
    %1268 = vst [vmem:[#allocation3 + $0x80] sm:$0x1] 0.0
    %1269 = vst [vmem:[#allocation3 + $0x90] sm:$0x1] 0.0
    %1270 = vst [vmem:[#allocation3 + $0xa0] sm:$0x1] 0.0
    %1271 = vst [vmem:[#allocation3 + $0xb0] sm:$0x1] 0.0
    %1272 = vst [vmem:[#allocation3 + $0xc0] sm:$0x1] 0.0
    %1273 = vst [vmem:[#allocation3 + $0xd0] sm:$0x1] 0.0
    %1274 = vst [vmem:[#allocation3 + $0xe0] sm:$0x1] 0.0
    %1275 = vst [vmem:[#allocation3 + $0xf0] sm:$0x1] 0.0
    %1276 = vst [vmem:[#allocation3 + $0x100] sm:$0x1] 0.0
    %1277 = vst [vmem:[#allocation3 + $0x110] sm:$0x1] 0.0
    %1278 = vst [vmem:[#allocation3 + $0x120] sm:$0x1] 0.0
    %1279 = vst [vmem:[#allocation3 + $0x130] sm:$0x1] 0.0
    %1280 = vst [vmem:[#allocation3 + $0x140] sm:$0x1] 0.0
    %1281 = vst [vmem:[#allocation3 + $0x150] sm:$0x1] 0.0
    %1282 = vst [vmem:[#allocation3 + $0x160] sm:$0x1] 0.0
    %1283 = vst [vmem:[#allocation3 + $0x170] sm:$0x1] 0.0
    %1284 = vst [vmem:[#allocation3 + $0x180] sm:$0x1] 0.0
    %1285 = vst [vmem:[#allocation3 + $0x190] sm:$0x1] 0.0
    %1286 = vst [vmem:[#allocation3 + $0x1a0] sm:$0x1] 0.0
    %1287 = vst [vmem:[#allocation3 + $0x1b0] sm:$0x1] 0.0
    %1288 = vst [vmem:[#allocation3 + $0x1c0] sm:$0x1] 0.0
    %1289 = vst [vmem:[#allocation3 + $0x1d0] sm:$0x1] 0.0
    %1290 = vst [vmem:[#allocation3 + $0x1e0] sm:$0x1] 0.0
    %1291 = vst [vmem:[#allocation3 + $0x1f0] sm:$0x1] 0.0
    %1292 = vst [vmem:[#allocation3 + $0x8] sm:$0x3] 0.0
    %1293 = vst [vmem:[#allocation3 + $0x18] sm:$0x3] 0.0
    %1294 = vst [vmem:[#allocation3 + $0x28] sm:$0x3] 0.0
    %1295 = vst [vmem:[#allocation3 + $0x38] sm:$0x3] 0.0
    %1296 = vst [vmem:[#allocation3 + $0x48] sm:$0x3] 0.0
    %1297 = vst [vmem:[#allocation3 + $0x58] sm:$0x3] 0.0
    %1298 = vst [vmem:[#allocation3 + $0x68] sm:$0x3] 0.0
    %1299 = vst [vmem:[#allocation3 + $0x78] sm:$0x3] 0.0
    %1300 = vst [vmem:[#allocation3 + $0x88] sm:$0x3] 0.0
    %1301 = vst [vmem:[#allocation3 + $0x98] sm:$0x3] 0.0
    %1302 = vst [vmem:[#allocation3 + $0xa8] sm:$0x3] 0.0
    %1303 = vst [vmem:[#allocation3 + $0xb8] sm:$0x3] 0.0
    %1304 = vst [vmem:[#allocation3 + $0xc8] sm:$0x3] 0.0
    %1305 = vst [vmem:[#allocation3 + $0xd8] sm:$0x3] 0.0
    %1306 = vst [vmem:[#allocation3 + $0xe8] sm:$0x3] 0.0
    %1307 = vst [vmem:[#allocation3 + $0xf8] sm:$0x3] 0.0
    %1308 = vst [vmem:[#allocation3 + $0x108] sm:$0x3] 0.0
    %1309 = vst [vmem:[#allocation3 + $0x118] sm:$0x3] 0.0
    %1310 = vst [vmem:[#allocation3 + $0x128] sm:$0x3] 0.0
    %1311 = vst [vmem:[#allocation3 + $0x138] sm:$0x3] 0.0
    %1312 = vst [vmem:[#allocation3 + $0x148] sm:$0x3] 0.0
    %1313 = vst [vmem:[#allocation3 + $0x158] sm:$0x3] 0.0
    %1314 = vst [vmem:[#allocation3 + $0x168] sm:$0x3] 0.0
    %1315 = vst [vmem:[#allocation3 + $0x178] sm:$0x3] 0.0
    %1316 = vst [vmem:[#allocation3 + $0x188] sm:$0x3] 0.0
    %1317 = vst [vmem:[#allocation3 + $0x198] sm:$0x3] 0.0
    %1318 = vst [vmem:[#allocation3 + $0x1a8] sm:$0x3] 0.0
    %1319 = vst [vmem:[#allocation3 + $0x1b8] sm:$0x3] 0.0
    %1320 = vst [vmem:[#allocation3 + $0x1c8] sm:$0x3] 0.0
    %1321 = vst [vmem:[#allocation3 + $0x1d8] sm:$0x3] 0.0
    %1322 = vst [vmem:[#allocation3 + $0x1e8] sm:$0x3] 0.0
    %1323 = vst [vmem:[#allocation3 + $0x1f8] sm:$0x3] 0.0
    %1324 = vst [vmem:[#allocation3 + $0x1] sm:$0x7f] %v1228
    %1325 = vst [vmem:[#allocation3 + $0x11] sm:$0x7f] %v1229
    %1326 = vst [vmem:[#allocation3 + $0x21] sm:$0x7f] %v1230
    %1327 = vst [vmem:[#allocation3 + $0x31] sm:$0x7f] %v1231
    %1328 = vst [vmem:[#allocation3 + $0x41] sm:$0x7f] %v1232
    %1329 = vst [vmem:[#allocation3 + $0x51] sm:$0x7f] %v1233
    %1330 = vst [vmem:[#allocation3 + $0x61] sm:$0x7f] %v1234
    %1331 = vst [vmem:[#allocation3 + $0x71] sm:$0x7f] %v1235
    %1332 = vst [vmem:[#allocation3 + $0x81] sm:$0x7f] %v1236
    %1333 = vst [vmem:[#allocation3 + $0x91] sm:$0x7f] %v1237
    %1334 = vst [vmem:[#allocation3 + $0xa1] sm:$0x7f] %v1238
    %1335 = vst [vmem:[#allocation3 + $0xb1] sm:$0x7f] %v1239
    %1336 = vst [vmem:[#allocation3 + $0xc1] sm:$0x7f] %v1240
    %1337 = vst [vmem:[#allocation3 + $0xd1] sm:$0x7f] %v1241
    %1338 = vst [vmem:[#allocation3 + $0xe1] sm:$0x7f] %v1242
    %1339 = vst [vmem:[#allocation3 + $0xf1] sm:$0x7f] %v1243
    %1340 = vst [vmem:[#allocation3 + $0x101] sm:$0x7f] %v1244
    %1341 = vst [vmem:[#allocation3 + $0x111] sm:$0x7f] %v1245
    %1342 = vst [vmem:[#allocation3 + $0x121] sm:$0x7f] %v1246
    %1343 = vst [vmem:[#allocation3 + $0x131] sm:$0x7f] %v1247
    %1344 = vst [vmem:[#allocation3 + $0x141] sm:$0x7f] %v1248
    %1345 = vst [vmem:[#allocation3 + $0x151] sm:$0x7f] %v1249
    %1346 = vst [vmem:[#allocation3 + $0x161] sm:$0x7f] %v1250
    %1347 = vst [vmem:[#allocation3 + $0x171] sm:$0x7f] %v1251
    %1348 = vst [vmem:[#allocation3 + $0x181] sm:$0x7f] %v1252
    %1349 = vst [vmem:[#allocation3 + $0x191] sm:$0x7f] %v1253
    %1350 = vst [vmem:[#allocation3 + $0x1a1] sm:$0x7f] %v1254
    %1351 = vst [vmem:[#allocation3 + $0x1b1] sm:$0x7f] %v1255
    %1352 = vst [vmem:[#allocation3 + $0x1c1] sm:$0x7f] %v1256
    %1353 = vst [vmem:[#allocation3 + $0x1d1] sm:$0x7f] %v1257
    %1354 = vst [vmem:[#allocation3 + $0x1e1] sm:$0x7f] %v1258
    %1355 = vst [vmem:[#allocation3 + $0x1f1] sm:$0x7f] %v1259
    %v1356 = vld [vmem:[#allocation3] sm:$0xff]
    %v1357 = vld [vmem:[#allocation3 + $0x10] sm:$0xff]
    %v1358 = vld [vmem:[#allocation3 + $0x20] sm:$0xff]
    %v1359 = vld [vmem:[#allocation3 + $0x30] sm:$0xff]
    %v1360 = vld [vmem:[#allocation3 + $0x40] sm:$0xff]
    %v1361 = vld [vmem:[#allocation3 + $0x50] sm:$0xff]
    %v1362 = vld [vmem:[#allocation3 + $0x60] sm:$0xff]
    %v1363 = vld [vmem:[#allocation3 + $0x70] sm:$0xff]
    %v1364 = vld [vmem:[#allocation3 + $0x80] sm:$0xff]
    %v1365 = vld [vmem:[#allocation3 + $0x90] sm:$0xff]
    %v1366 = vld [vmem:[#allocation3 + $0xa0] sm:$0xff]
    %v1367 = vld [vmem:[#allocation3 + $0xb0] sm:$0xff]
    %v1368 = vld [vmem:[#allocation3 + $0xc0] sm:$0xff]
    %v1369 = vld [vmem:[#allocation3 + $0xd0] sm:$0xff]
    %v1370 = vld [vmem:[#allocation3 + $0xe0] sm:$0xff]
    %v1371 = vld [vmem:[#allocation3 + $0xf0] sm:$0xff]
    %v1372 = vld [vmem:[#allocation3 + $0x100] sm:$0xff]
    %v1373 = vld [vmem:[#allocation3 + $0x110] sm:$0xff]
    %v1374 = vld [vmem:[#allocation3 + $0x120] sm:$0xff]
    %v1375 = vld [vmem:[#allocation3 + $0x130] sm:$0xff]
    %v1376 = vld [vmem:[#allocation3 + $0x140] sm:$0xff]
    %v1377 = vld [vmem:[#allocation3 + $0x150] sm:$0xff]
    %v1378 = vld [vmem:[#allocation3 + $0x160] sm:$0xff]
    %v1379 = vld [vmem:[#allocation3 + $0x170] sm:$0xff]
    %v1380 = vld [vmem:[#allocation3 + $0x180] sm:$0xff]
    %v1381 = vld [vmem:[#allocation3 + $0x190] sm:$0xff]
    %v1382 = vld [vmem:[#allocation3 + $0x1a0] sm:$0xff]
    %v1383 = vld [vmem:[#allocation3 + $0x1b0] sm:$0xff]
    %v1384 = vld [vmem:[#allocation3 + $0x1c0] sm:$0xff]
    %v1385 = vld [vmem:[#allocation3 + $0x1d0] sm:$0xff]
    %v1386 = vld [vmem:[#allocation3 + $0x1e0] sm:$0xff]
    %v1387 = vld [vmem:[#allocation3 + $0x1f0] sm:$0xff]
    %v1388 = vld [vmem:[#allocation10] sm:$0xff]
    %v1389 = vld [vmem:[#allocation10 + $0x8] sm:$0xff]
    %v1390 = vld [vmem:[#allocation10 + $0x10] sm:$0xff]
    %v1391 = vld [vmem:[#allocation10 + $0x18] sm:$0xff]
    %v1392 = vld [vmem:[#allocation10 + $0x20] sm:$0xff]
    %v1393 = vld [vmem:[#allocation10 + $0x28] sm:$0xff]
    %v1394 = vld [vmem:[#allocation10 + $0x30] sm:$0xff]
    %v1395 = vld [vmem:[#allocation10 + $0x38] sm:$0xff]
    %v1396 = vld [vmem:[#allocation10 + $0x40] sm:$0xff]
    %v1397 = vld [vmem:[#allocation10 + $0x48] sm:$0xff]
    %v1398 = vld [vmem:[#allocation10 + $0x50] sm:$0xff]
    %v1399 = vld [vmem:[#allocation10 + $0x58] sm:$0xff]
    %v1400 = vld [vmem:[#allocation10 + $0x60] sm:$0xff]
    %v1401 = vld [vmem:[#allocation10 + $0x68] sm:$0xff]
    %v1402 = vld [vmem:[#allocation10 + $0x70] sm:$0xff]
    %v1403 = vld [vmem:[#allocation10 + $0x78] sm:$0xff]
    %v1404 = vld [vmem:[#allocation3 + $0x1] sm:$0xff]
    %v1405 = vld [vmem:[#allocation3 + $0x11] sm:$0xff]
    %v1406 = vld [vmem:[#allocation3 + $0x21] sm:$0xff]
    %v1407 = vld [vmem:[#allocation3 + $0x31] sm:$0xff]
    %v1408 = vld [vmem:[#allocation3 + $0x41] sm:$0xff]
    %v1409 = vld [vmem:[#allocation3 + $0x51] sm:$0xff]
    %v1410 = vld [vmem:[#allocation3 + $0x61] sm:$0xff]
    %v1411 = vld [vmem:[#allocation3 + $0x71] sm:$0xff]
    %v1412 = vld [vmem:[#allocation3 + $0x81] sm:$0xff]
    %v1413 = vld [vmem:[#allocation3 + $0x91] sm:$0xff]
    %v1414 = vld [vmem:[#allocation3 + $0xa1] sm:$0xff]
    %v1415 = vld [vmem:[#allocation3 + $0xb1] sm:$0xff]
    %v1416 = vld [vmem:[#allocation3 + $0xc1] sm:$0xff]
    %v1417 = vld [vmem:[#allocation3 + $0xd1] sm:$0xff]
    %v1418 = vld [vmem:[#allocation3 + $0xe1] sm:$0xff]
    %v1419 = vld [vmem:[#allocation3 + $0xf1] sm:$0xff]
    %v1420 = vld [vmem:[#allocation3 + $0x101] sm:$0xff]
    %v1421 = vld [vmem:[#allocation3 + $0x111] sm:$0xff]
    %v1422 = vld [vmem:[#allocation3 + $0x121] sm:$0xff]
    %v1423 = vld [vmem:[#allocation3 + $0x131] sm:$0xff]
    %v1424 = vld [vmem:[#allocation3 + $0x141] sm:$0xff]
    %v1425 = vld [vmem:[#allocation3 + $0x151] sm:$0xff]
    %v1426 = vld [vmem:[#allocation3 + $0x161] sm:$0xff]
    %v1427 = vld [vmem:[#allocation3 + $0x171] sm:$0xff]
    %v1428 = vld [vmem:[#allocation3 + $0x181] sm:$0xff]
    %v1429 = vld [vmem:[#allocation3 + $0x191] sm:$0xff]
    %v1430 = vld [vmem:[#allocation3 + $0x1a1] sm:$0xff]
    %v1431 = vld [vmem:[#allocation3 + $0x1b1] sm:$0xff]
    %v1432 = vld [vmem:[#allocation3 + $0x1c1] sm:$0xff]
    %v1433 = vld [vmem:[#allocation3 + $0x1d1] sm:$0xff]
    %v1434 = vld [vmem:[#allocation3 + $0x1e1] sm:$0xff]
    %v1435 = vld [vmem:[#allocation3 + $0x1f1] sm:$0xff]
    %s1436 = scalar_lea.vmem [#allocation10], 128
    %v1437 = vld [vmem:[%s1436] sm:$0xff]
    %v1438 = vld [vmem:[%s1436 + $0x8] sm:$0xff]
    %v1439 = vld [vmem:[%s1436 + $0x10] sm:$0xff]
    %v1440 = vld [vmem:[%s1436 + $0x18] sm:$0xff]
    %v1441 = vld [vmem:[%s1436 + $0x20] sm:$0xff]
    %v1442 = vld [vmem:[%s1436 + $0x28] sm:$0xff]
    %v1443 = vld [vmem:[%s1436 + $0x30] sm:$0xff]
    %v1444 = vld [vmem:[%s1436 + $0x38] sm:$0xff]
    %v1445 = vld [vmem:[%s1436 + $0x40] sm:$0xff]
    %v1446 = vld [vmem:[%s1436 + $0x48] sm:$0xff]
    %v1447 = vld [vmem:[%s1436 + $0x50] sm:$0xff]
    %v1448 = vld [vmem:[%s1436 + $0x58] sm:$0xff]
    %v1449 = vld [vmem:[%s1436 + $0x60] sm:$0xff]
    %v1450 = vld [vmem:[%s1436 + $0x68] sm:$0xff]
    %v1451 = vld [vmem:[%s1436 + $0x70] sm:$0xff]
    %v1452 = vld [vmem:[%s1436 + $0x78] sm:$0xff]
    %1453 = vmatprep.subr.mxu0 0.0
    %1454 = vmatpush1.msra.mxu0 %v1437
    %1455 = vmatprep.subr.mxu0 0.0
    %1456 = vmatpush1.msra.mxu0 %v1438
    %1457 = vmatprep.subr.mxu0 0.0
    %1458 = vmatpush1.msra.mxu0 %v1439
    %1459 = vmatprep.subr.mxu0 0.0
    %1460 = vmatpush1.msra.mxu0 %v1440
    %1461 = vmatprep.subr.mxu0 0.0
    %1462 = vmatpush1.msra.mxu0 %v1441
    %1463 = vmatprep.subr.mxu0 0.0
    %1464 = vmatpush1.msra.mxu0 %v1442
    %1465 = vmatprep.subr.mxu0 0.0
    %1466 = vmatpush1.msra.mxu0 %v1443
    %1467 = vmatprep.subr.mxu0 0.0
    %1468 = vmatpush1.msra.mxu0 %v1444
    %1469 = vmatprep.subr.mxu0 0.0
    %1470 = vmatpush1.msra.mxu0 %v1445
    %1471 = vmatprep.subr.mxu0 0.0
    %1472 = vmatpush1.msra.mxu0 %v1446
    %1473 = vmatprep.subr.mxu0 0.0
    %1474 = vmatpush1.msra.mxu0 %v1447
    %1475 = vmatprep.subr.mxu0 0.0
    %1476 = vmatpush1.msra.mxu0 %v1448
    %1477 = vmatprep.subr.mxu0 0.0
    %1478 = vmatpush1.msra.mxu0 %v1449
    %1479 = vmatprep.subr.mxu0 0.0
    %1480 = vmatpush1.msra.mxu0 %v1450
    %1481 = vmatprep.subr.mxu0 0.0
    %1482 = vmatpush1.msra.mxu0 %v1451
    %1483 = vmatprep.subr.mxu0 0.0
    %1484 = vmatpush1.msra.mxu0 %v1452
    %1485 = vmatprep.subr.mxu0 0.0
    %1486 = vmatpush1.msra.mxu0 0.0
    %1487 = vmatprep.subr.mxu0 0.0
    %1488 = vmatpush1.msra.mxu0 0.0
    %1489 = vmatprep.subr.mxu0 0.0
    %1490 = vmatpush1.msra.mxu0 0.0
    %1491 = vmatprep.subr.mxu0 0.0
    %1492 = vmatpush1.msra.mxu0 0.0
    %1493 = vmatprep.subr.mxu0 0.0
    %1494 = vmatpush1.msra.mxu0 0.0
    %1495 = vmatprep.subr.mxu0 0.0
    %1496 = vmatpush1.msra.mxu0 0.0
    %1497 = vmatprep.subr.mxu0 0.0
    %1498 = vmatpush1.msra.mxu0 0.0
    %1499 = vmatprep.subr.mxu0 0.0
    %1500 = vmatpush1.msra.mxu0 0.0
    %1501 = vmatprep.subr.mxu0 0.0
    %1502 = vmatpush1.msra.mxu0 0.0
    %1503 = vmatprep.subr.mxu0 0.0
    %1504 = vmatpush1.msra.mxu0 0.0
    %1505 = vmatprep.subr.mxu0 0.0
    %1506 = vmatpush1.msra.mxu0 0.0
    %1507 = vmatprep.subr.mxu0 0.0
    %1508 = vmatpush1.msra.mxu0 0.0
    %1509 = vmatprep.subr.mxu0 0.0
    %1510 = vmatpush1.msra.mxu0 0.0
    %1511 = vmatprep.subr.mxu0 0.0
    %1512 = vmatpush1.msra.mxu0 0.0
    %1513 = vmatprep.subr.mxu0 0.0
    %1514 = vmatpush1.msra.mxu0 0.0
    %1515 = vmatprep.subr.mxu0 0.0
    %1516 = vmatpush1.msra.mxu0 0.0
    %1517 = vmatprep.mubr.f32.mxu0 0.0
    %1518 = vmatmul.mubr.f32.gmra.mrb[0].mxu0 %v1404
    %v1519 = vpop.f32.mrb[0].mxu0
    %v1520 = vadd.f32 0.0, %v1519
    %v1521 = vpop.f32.mrb[0].mxu0
    %1522 = vmatprep.mubr.f32.mxu0 0.0
    %1523 = vmatmul.mubr.f32.gmra.mrb[0].mxu0 %v1405
    %v1524 = vpop.f32.mrb[0].mxu0
    %v1525 = vadd.f32 0.0, %v1524
    %v1526 = vpop.f32.mrb[0].mxu0
    %1527 = vmatprep.mubr.f32.mxu0 0.0
    %1528 = vmatmul.mubr.f32.gmra.mrb[0].mxu0 %v1406
    %v1529 = vpop.f32.mrb[0].mxu0
    %v1530 = vadd.f32 0.0, %v1529
    %v1531 = vpop.f32.mrb[0].mxu0
    %1532 = vmatprep.mubr.f32.mxu0 0.0
    %1533 = vmatmul.mubr.f32.gmra.mrb[0].mxu0 %v1407
    %v1534 = vpop.f32.mrb[0].mxu0
    %v1535 = vadd.f32 0.0, %v1534
    %v1536 = vpop.f32.mrb[0].mxu0
    %1537 = vmatprep.mubr.f32.mxu0 0.0
    %1538 = vmatmul.mubr.f32.gmra.mrb[0].mxu0 %v1408
    %v1539 = vpop.f32.mrb[0].mxu0
    %v1540 = vadd.f32 0.0, %v1539
    %v1541 = vpop.f32.mrb[0].mxu0
    %1542 = vmatprep.mubr.f32.mxu0 0.0
    %1543 = vmatmul.mubr.f32.gmra.mrb[0].mxu0 %v1409
    %v1544 = vpop.f32.mrb[0].mxu0
    %v1545 = vadd.f32 0.0, %v1544
    %v1546 = vpop.f32.mrb[0].mxu0
    %1547 = vmatprep.mubr.f32.mxu0 0.0
    %1548 = vmatmul.mubr.f32.gmra.mrb[0].mxu0 %v1410
    %v1549 = vpop.f32.mrb[0].mxu0
    %v1550 = vadd.f32 0.0, %v1549
    %v1551 = vpop.f32.mrb[0].mxu0
    %1552 = vmatprep.mubr.f32.mxu0 0.0
    %1553 = vmatmul.mubr.f32.gmra.mrb[0].mxu0 %v1411
    %v1554 = vpop.f32.mrb[0].mxu0
    %v1555 = vadd.f32 0.0, %v1554
    %v1556 = vpop.f32.mrb[0].mxu0
    %1557 = vmatprep.mubr.f32.mxu0 0.0
    %1558 = vmatmul.mubr.f32.gmra.mrb[0].mxu0 %v1412
    %v1559 = vpop.f32.mrb[0].mxu0
    %v1560 = vadd.f32 0.0, %v1559
    %v1561 = vpop.f32.mrb[0].mxu0
    %1562 = vmatprep.mubr.f32.mxu0 0.0
    %1563 = vmatmul.mubr.f32.gmra.mrb[0].mxu0 %v1413
    %v1564 = vpop.f32.mrb[0].mxu0
    %v1565 = vadd.f32 0.0, %v1564
    %v1566 = vpop.f32.mrb[0].mxu0
    %1567 = vmatprep.mubr.f32.mxu0 0.0
    %1568 = vmatmul.mubr.f32.gmra.mrb[0].mxu0 %v1414
    %v1569 = vpop.f32.mrb[0].mxu0
    %v1570 = vadd.f32 0.0, %v1569
    %v1571 = vpop.f32.mrb[0].mxu0
    %1572 = vmatprep.mubr.f32.mxu0 0.0
    %1573 = vmatmul.mubr.f32.gmra.mrb[0].mxu0 %v1415
    %v1574 = vpop.f32.mrb[0].mxu0
    %v1575 = vadd.f32 0.0, %v1574
    %v1576 = vpop.f32.mrb[0].mxu0
    %1577 = vmatprep.mubr.f32.mxu0 0.0
    %1578 = vmatmul.mubr.f32.gmra.mrb[0].mxu0 %v1416
    %v1579 = vpop.f32.mrb[0].mxu0
    %v1580 = vadd.f32 0.0, %v1579
    %v1581 = vpop.f32.mrb[0].mxu0
    %1582 = vmatprep.mubr.f32.mxu0 0.0
    %1583 = vmatmul.mubr.f32.gmra.mrb[0].mxu0 %v1417
    %v1584 = vpop.f32.mrb[0].mxu0
    %v1585 = vadd.f32 0.0, %v1584
    %v1586 = vpop.f32.mrb[0].mxu0
    %1587 = vmatprep.mubr.f32.mxu0 0.0
    %1588 = vmatmul.mubr.f32.gmra.mrb[0].mxu0 %v1418
    %v1589 = vpop.f32.mrb[0].mxu0
    %v1590 = vadd.f32 0.0, %v1589
    %v1591 = vpop.f32.mrb[0].mxu0
    %1592 = vmatprep.mubr.f32.mxu0 0.0
    %1593 = vmatmul.mubr.f32.gmra.mrb[0].mxu0 %v1419
    %v1594 = vpop.f32.mrb[0].mxu0
    %v1595 = vadd.f32 0.0, %v1594
    %v1596 = vpop.f32.mrb[0].mxu0
    %1597 = vmatprep.mubr.f32.mxu0 0.0
    %1598 = vmatmul.mubr.f32.gmra.mrb[0].mxu0 %v1420
    %v1599 = vpop.f32.mrb[0].mxu0
    %v1600 = vadd.f32 0.0, %v1599
    %v1601 = vpop.f32.mrb[0].mxu0
    %1602 = vmatprep.mubr.f32.mxu0 0.0
    %1603 = vmatmul.mubr.f32.gmra.mrb[0].mxu0 %v1421
    %v1604 = vpop.f32.mrb[0].mxu0
    %v1605 = vadd.f32 0.0, %v1604
    %v1606 = vpop.f32.mrb[0].mxu0
    %1607 = vmatprep.mubr.f32.mxu0 0.0
    %1608 = vmatmul.mubr.f32.gmra.mrb[0].mxu0 %v1422
    %v1609 = vpop.f32.mrb[0].mxu0
    %v1610 = vadd.f32 0.0, %v1609
    %v1611 = vpop.f32.mrb[0].mxu0
    %1612 = vmatprep.mubr.f32.mxu0 0.0
    %1613 = vmatmul.mubr.f32.gmra.mrb[0].mxu0 %v1423
    %v1614 = vpop.f32.mrb[0].mxu0
    %v1615 = vadd.f32 0.0, %v1614
    %v1616 = vpop.f32.mrb[0].mxu0
    %1617 = vmatprep.mubr.f32.mxu0 0.0
    %1618 = vmatmul.mubr.f32.gmra.mrb[0].mxu0 %v1424
    %v1619 = vpop.f32.mrb[0].mxu0
    %v1620 = vadd.f32 0.0, %v1619
    %v1621 = vpop.f32.mrb[0].mxu0
    %1622 = vmatprep.mubr.f32.mxu0 0.0
    %1623 = vmatmul.mubr.f32.gmra.mrb[0].mxu0 %v1425
    %v1624 = vpop.f32.mrb[0].mxu0
    %v1625 = vadd.f32 0.0, %v1624
    %v1626 = vpop.f32.mrb[0].mxu0
    %1627 = vmatprep.mubr.f32.mxu0 0.0
    %1628 = vmatmul.mubr.f32.gmra.mrb[0].mxu0 %v1426
    %v1629 = vpop.f32.mrb[0].mxu0
    %v1630 = vadd.f32 0.0, %v1629
    %v1631 = vpop.f32.mrb[0].mxu0
    %1632 = vmatprep.mubr.f32.mxu0 0.0
    %1633 = vmatmul.mubr.f32.gmra.mrb[0].mxu0 %v1427
    %v1634 = vpop.f32.mrb[0].mxu0
    %v1635 = vadd.f32 0.0, %v1634
    %v1636 = vpop.f32.mrb[0].mxu0
    %1637 = vmatprep.mubr.f32.mxu0 0.0
    %1638 = vmatmul.mubr.f32.gmra.mrb[0].mxu0 %v1428
    %v1639 = vpop.f32.mrb[0].mxu0
    %v1640 = vadd.f32 0.0, %v1639
    %v1641 = vpop.f32.mrb[0].mxu0
    %1642 = vmatprep.mubr.f32.mxu0 0.0
    %1643 = vmatmul.mubr.f32.gmra.mrb[0].mxu0 %v1429
    %v1644 = vpop.f32.mrb[0].mxu0
    %v1645 = vadd.f32 0.0, %v1644
    %v1646 = vpop.f32.mrb[0].mxu0
    %1647 = vmatprep.mubr.f32.mxu0 0.0
    %1648 = vmatmul.mubr.f32.gmra.mrb[0].mxu0 %v1430
    %v1649 = vpop.f32.mrb[0].mxu0
    %v1650 = vadd.f32 0.0, %v1649
    %v1651 = vpop.f32.mrb[0].mxu0
    %1652 = vmatprep.mubr.f32.mxu0 0.0
    %1653 = vmatmul.mubr.f32.gmra.mrb[0].mxu0 %v1431
    %v1654 = vpop.f32.mrb[0].mxu0
    %v1655 = vadd.f32 0.0, %v1654
    %v1656 = vpop.f32.mrb[0].mxu0
    %1657 = vmatprep.mubr.f32.mxu0 0.0
    %1658 = vmatmul.mubr.f32.gmra.mrb[0].mxu0 %v1432
    %v1659 = vpop.f32.mrb[0].mxu0
    %v1660 = vadd.f32 0.0, %v1659
    %v1661 = vpop.f32.mrb[0].mxu0
    %1662 = vmatprep.mubr.f32.mxu0 0.0
    %1663 = vmatmul.mubr.f32.gmra.mrb[0].mxu0 %v1433
    %v1664 = vpop.f32.mrb[0].mxu0
    %v1665 = vadd.f32 0.0, %v1664
    %v1666 = vpop.f32.mrb[0].mxu0
    %1667 = vmatprep.mubr.f32.mxu0 0.0
    %1668 = vmatmul.mubr.f32.gmra.mrb[0].mxu0 %v1434
    %v1669 = vpop.f32.mrb[0].mxu0
    %v1670 = vadd.f32 0.0, %v1669
    %v1671 = vpop.f32.mrb[0].mxu0
    %1672 = vmatprep.mubr.f32.mxu0 0.0
    %1673 = vmatmul.mubr.f32.gmra.mrb[0].mxu0 %v1435
    %v1674 = vpop.f32.mrb[0].mxu0
    %v1675 = vadd.f32 0.0, %v1674
    %v1676 = vpop.f32.mrb[0].mxu0
    %1677 = vdwg.mxu0
    %1678 = vmatprep.subr.mxu0 0.0
    %1679 = vmatpush1.msra.mxu0 %v1388
    %1680 = vmatprep.subr.mxu0 0.0
    %1681 = vmatpush1.msra.mxu0 %v1389
    %1682 = vmatprep.subr.mxu0 0.0
    %1683 = vmatpush1.msra.mxu0 %v1390
    %1684 = vmatprep.subr.mxu0 0.0
    %1685 = vmatpush1.msra.mxu0 %v1391
    %1686 = vmatprep.subr.mxu0 0.0
    %1687 = vmatpush1.msra.mxu0 %v1392
    %1688 = vmatprep.subr.mxu0 0.0
    %1689 = vmatpush1.msra.mxu0 %v1393
    %1690 = vmatprep.subr.mxu0 0.0
    %1691 = vmatpush1.msra.mxu0 %v1394
    %1692 = vmatprep.subr.mxu0 0.0
    %1693 = vmatpush1.msra.mxu0 %v1395
    %1694 = vmatprep.subr.mxu0 0.0
    %1695 = vmatpush1.msra.mxu0 %v1396
    %1696 = vmatprep.subr.mxu0 0.0
    %1697 = vmatpush1.msra.mxu0 %v1397
    %1698 = vmatprep.subr.mxu0 0.0
    %1699 = vmatpush1.msra.mxu0 %v1398
    %1700 = vmatprep.subr.mxu0 0.0
    %1701 = vmatpush1.msra.mxu0 %v1399
    %1702 = vmatprep.subr.mxu0 0.0
    %1703 = vmatpush1.msra.mxu0 %v1400
    %1704 = vmatprep.subr.mxu0 0.0
    %1705 = vmatpush1.msra.mxu0 %v1401
    %1706 = vmatprep.subr.mxu0 0.0
    %1707 = vmatpush1.msra.mxu0 %v1402
    %1708 = vmatprep.subr.mxu0 0.0
    %1709 = vmatpush1.msra.mxu0 %v1403
    %1710 = vmatprep.subr.mxu0 0.0
    %1711 = vmatpush1.msra.mxu0 0.0
    %1712 = vmatprep.subr.mxu0 0.0
    %1713 = vmatpush1.msra.mxu0 0.0
    %1714 = vmatprep.subr.mxu0 0.0
    %1715 = vmatpush1.msra.mxu0 0.0
    %1716 = vmatprep.subr.mxu0 0.0
    %1717 = vmatpush1.msra.mxu0 0.0
    %1718 = vmatprep.subr.mxu0 0.0
    %1719 = vmatpush1.msra.mxu0 0.0
    %1720 = vmatprep.subr.mxu0 0.0
    %1721 = vmatpush1.msra.mxu0 0.0
    %1722 = vmatprep.subr.mxu0 0.0
    %1723 = vmatpush1.msra.mxu0 0.0
    %1724 = vmatprep.subr.mxu0 0.0
    %1725 = vmatpush1.msra.mxu0 0.0
    %1726 = vmatprep.subr.mxu0 0.0
    %1727 = vmatpush1.msra.mxu0 0.0
    %1728 = vmatprep.subr.mxu0 0.0
    %1729 = vmatpush1.msra.mxu0 0.0
    %1730 = vmatprep.subr.mxu0 0.0
    %1731 = vmatpush1.msra.mxu0 0.0
    %1732 = vmatprep.subr.mxu0 0.0
    %1733 = vmatpush1.msra.mxu0 0.0
    %1734 = vmatprep.subr.mxu0 0.0
    %1735 = vmatpush1.msra.mxu0 0.0
    %1736 = vmatprep.subr.mxu0 0.0
    %1737 = vmatpush1.msra.mxu0 0.0
    %1738 = vmatprep.subr.mxu0 0.0
    %1739 = vmatpush1.msra.mxu0 0.0
    %1740 = vmatprep.subr.mxu0 0.0
    %1741 = vmatpush1.msra.mxu0 0.0
    %1742 = vmatprep.mubr.f32.mxu0 0.0
    %1743 = vmatmul.mubr.f32.gmra.mrb[0].mxu0 %v1356
    %v1744 = vpop.f32.mrb[0].mxu0
    %v1745 = vadd.f32 %v1520, %v1744
    %v1746 = vpop.f32.mrb[0].mxu0
    %1747 = vmatprep.mubr.f32.mxu0 0.0
    %1748 = vmatmul.mubr.f32.gmra.mrb[0].mxu0 %v1357
    %v1749 = vpop.f32.mrb[0].mxu0
    %v1750 = vadd.f32 %v1525, %v1749
    %v1751 = vpop.f32.mrb[0].mxu0
    %1752 = vmatprep.mubr.f32.mxu0 0.0
    %1753 = vmatmul.mubr.f32.gmra.mrb[0].mxu0 %v1358
    %v1754 = vpop.f32.mrb[0].mxu0
    %v1755 = vadd.f32 %v1530, %v1754
    %v1756 = vpop.f32.mrb[0].mxu0
    %1757 = vmatprep.mubr.f32.mxu0 0.0
    %1758 = vmatmul.mubr.f32.gmra.mrb[0].mxu0 %v1359
    %v1759 = vpop.f32.mrb[0].mxu0
    %v1760 = vadd.f32 %v1535, %v1759
    %v1761 = vpop.f32.mrb[0].mxu0
    %1762 = vmatprep.mubr.f32.mxu0 0.0
    %1763 = vmatmul.mubr.f32.gmra.mrb[0].mxu0 %v1360
    %v1764 = vpop.f32.mrb[0].mxu0
    %v1765 = vadd.f32 %v1540, %v1764
    %v1766 = vpop.f32.mrb[0].mxu0
    %1767 = vmatprep.mubr.f32.mxu0 0.0
    %1768 = vmatmul.mubr.f32.gmra.mrb[0].mxu0 %v1361
    %v1769 = vpop.f32.mrb[0].mxu0
    %v1770 = vadd.f32 %v1545, %v1769
    %v1771 = vpop.f32.mrb[0].mxu0
    %1772 = vmatprep.mubr.f32.mxu0 0.0
    %1773 = vmatmul.mubr.f32.gmra.mrb[0].mxu0 %v1362
    %v1774 = vpop.f32.mrb[0].mxu0
    %v1775 = vadd.f32 %v1550, %v1774
    %v1776 = vpop.f32.mrb[0].mxu0
    %1777 = vmatprep.mubr.f32.mxu0 0.0
    %1778 = vmatmul.mubr.f32.gmra.mrb[0].mxu0 %v1363
    %v1779 = vpop.f32.mrb[0].mxu0
    %v1780 = vadd.f32 %v1555, %v1779
    %v1781 = vpop.f32.mrb[0].mxu0
    %1782 = vmatprep.mubr.f32.mxu0 0.0
    %1783 = vmatmul.mubr.f32.gmra.mrb[0].mxu0 %v1364
    %v1784 = vpop.f32.mrb[0].mxu0
    %v1785 = vadd.f32 %v1560, %v1784
    %v1786 = vpop.f32.mrb[0].mxu0
    %1787 = vmatprep.mubr.f32.mxu0 0.0
    %1788 = vmatmul.mubr.f32.gmra.mrb[0].mxu0 %v1365
    %v1789 = vpop.f32.mrb[0].mxu0
    %v1790 = vadd.f32 %v1565, %v1789
    %v1791 = vpop.f32.mrb[0].mxu0
    %1792 = vmatprep.mubr.f32.mxu0 0.0
    %1793 = vmatmul.mubr.f32.gmra.mrb[0].mxu0 %v1366
    %v1794 = vpop.f32.mrb[0].mxu0
    %v1795 = vadd.f32 %v1570, %v1794
    %v1796 = vpop.f32.mrb[0].mxu0
    %1797 = vmatprep.mubr.f32.mxu0 0.0
    %1798 = vmatmul.mubr.f32.gmra.mrb[0].mxu0 %v1367
    %v1799 = vpop.f32.mrb[0].mxu0
    %v1800 = vadd.f32 %v1575, %v1799
    %v1801 = vpop.f32.mrb[0].mxu0
    %1802 = vmatprep.mubr.f32.mxu0 0.0
    %1803 = vmatmul.mubr.f32.gmra.mrb[0].mxu0 %v1368
    %v1804 = vpop.f32.mrb[0].mxu0
    %v1805 = vadd.f32 %v1580, %v1804
    %v1806 = vpop.f32.mrb[0].mxu0
    %1807 = vmatprep.mubr.f32.mxu0 0.0
    %1808 = vmatmul.mubr.f32.gmra.mrb[0].mxu0 %v1369
    %v1809 = vpop.f32.mrb[0].mxu0
    %v1810 = vadd.f32 %v1585, %v1809
    %v1811 = vpop.f32.mrb[0].mxu0
    %1812 = vmatprep.mubr.f32.mxu0 0.0
    %1813 = vmatmul.mubr.f32.gmra.mrb[0].mxu0 %v1370
    %v1814 = vpop.f32.mrb[0].mxu0
    %v1815 = vadd.f32 %v1590, %v1814
    %v1816 = vpop.f32.mrb[0].mxu0
    %1817 = vmatprep.mubr.f32.mxu0 0.0
    %1818 = vmatmul.mubr.f32.gmra.mrb[0].mxu0 %v1371
    %v1819 = vpop.f32.mrb[0].mxu0
    %v1820 = vadd.f32 %v1595, %v1819
    %v1821 = vpop.f32.mrb[0].mxu0
    %1822 = vmatprep.mubr.f32.mxu0 0.0
    %1823 = vmatmul.mubr.f32.gmra.mrb[0].mxu0 %v1372
    %v1824 = vpop.f32.mrb[0].mxu0
    %v1825 = vadd.f32 %v1600, %v1824
    %v1826 = vpop.f32.mrb[0].mxu0
    %1827 = vmatprep.mubr.f32.mxu0 0.0
    %1828 = vmatmul.mubr.f32.gmra.mrb[0].mxu0 %v1373
    %v1829 = vpop.f32.mrb[0].mxu0
    %v1830 = vadd.f32 %v1605, %v1829
    %v1831 = vpop.f32.mrb[0].mxu0
    %1832 = vmatprep.mubr.f32.mxu0 0.0
    %1833 = vmatmul.mubr.f32.gmra.mrb[0].mxu0 %v1374
    %v1834 = vpop.f32.mrb[0].mxu0
    %v1835 = vadd.f32 %v1610, %v1834
    %v1836 = vpop.f32.mrb[0].mxu0
    %1837 = vmatprep.mubr.f32.mxu0 0.0
    %1838 = vmatmul.mubr.f32.gmra.mrb[0].mxu0 %v1375
    %v1839 = vpop.f32.mrb[0].mxu0
    %v1840 = vadd.f32 %v1615, %v1839
    %v1841 = vpop.f32.mrb[0].mxu0
    %1842 = vmatprep.mubr.f32.mxu0 0.0
    %1843 = vmatmul.mubr.f32.gmra.mrb[0].mxu0 %v1376
    %v1844 = vpop.f32.mrb[0].mxu0
    %v1845 = vadd.f32 %v1620, %v1844
    %v1846 = vpop.f32.mrb[0].mxu0
    %1847 = vmatprep.mubr.f32.mxu0 0.0
    %1848 = vmatmul.mubr.f32.gmra.mrb[0].mxu0 %v1377
    %v1849 = vpop.f32.mrb[0].mxu0
    %v1850 = vadd.f32 %v1625, %v1849
    %v1851 = vpop.f32.mrb[0].mxu0
    %1852 = vmatprep.mubr.f32.mxu0 0.0
    %1853 = vmatmul.mubr.f32.gmra.mrb[0].mxu0 %v1378
    %v1854 = vpop.f32.mrb[0].mxu0
    %v1855 = vadd.f32 %v1630, %v1854
    %v1856 = vpop.f32.mrb[0].mxu0
    %1857 = vmatprep.mubr.f32.mxu0 0.0
    %1858 = vmatmul.mubr.f32.gmra.mrb[0].mxu0 %v1379
    %v1859 = vpop.f32.mrb[0].mxu0
    %v1860 = vadd.f32 %v1635, %v1859
    %v1861 = vpop.f32.mrb[0].mxu0
    %1862 = vmatprep.mubr.f32.mxu0 0.0
    %1863 = vmatmul.mubr.f32.gmra.mrb[0].mxu0 %v1380
    %v1864 = vpop.f32.mrb[0].mxu0
    %v1865 = vadd.f32 %v1640, %v1864
    %v1866 = vpop.f32.mrb[0].mxu0
    %1867 = vmatprep.mubr.f32.mxu0 0.0
    %1868 = vmatmul.mubr.f32.gmra.mrb[0].mxu0 %v1381
    %v1869 = vpop.f32.mrb[0].mxu0
    %v1870 = vadd.f32 %v1645, %v1869
    %v1871 = vpop.f32.mrb[0].mxu0
    %1872 = vmatprep.mubr.f32.mxu0 0.0
    %1873 = vmatmul.mubr.f32.gmra.mrb[0].mxu0 %v1382
    %v1874 = vpop.f32.mrb[0].mxu0
    %v1875 = vadd.f32 %v1650, %v1874
    %v1876 = vpop.f32.mrb[0].mxu0
    %1877 = vmatprep.mubr.f32.mxu0 0.0
    %1878 = vmatmul.mubr.f32.gmra.mrb[0].mxu0 %v1383
    %v1879 = vpop.f32.mrb[0].mxu0
    %v1880 = vadd.f32 %v1655, %v1879
    %v1881 = vpop.f32.mrb[0].mxu0
    %1882 = vmatprep.mubr.f32.mxu0 0.0
    %1883 = vmatmul.mubr.f32.gmra.mrb[0].mxu0 %v1384
    %v1884 = vpop.f32.mrb[0].mxu0
    %v1885 = vadd.f32 %v1660, %v1884
    %v1886 = vpop.f32.mrb[0].mxu0
    %1887 = vmatprep.mubr.f32.mxu0 0.0
    %1888 = vmatmul.mubr.f32.gmra.mrb[0].mxu0 %v1385
    %v1889 = vpop.f32.mrb[0].mxu0
    %v1890 = vadd.f32 %v1665, %v1889
    %v1891 = vpop.f32.mrb[0].mxu0
    %1892 = vmatprep.mubr.f32.mxu0 0.0
    %1893 = vmatmul.mubr.f32.gmra.mrb[0].mxu0 %v1386
    %v1894 = vpop.f32.mrb[0].mxu0
    %v1895 = vadd.f32 %v1670, %v1894
    %v1896 = vpop.f32.mrb[0].mxu0
    %1897 = vmatprep.mubr.f32.mxu0 0.0
    %1898 = vmatmul.mubr.f32.gmra.mrb[0].mxu0 %v1387
    %v1899 = vpop.f32.mrb[0].mxu0
    %v1900 = vadd.f32 %v1675, %v1899
    %v1901 = vpop.f32.mrb[0].mxu0
    %1902 = vdwg.mxu0
    %v1903 = vld [vmem:[#allocation3 + $0x2] sm:$0xff]
    %v1904 = vld [vmem:[#allocation3 + $0x12] sm:$0xff]
    %v1905 = vld [vmem:[#allocation3 + $0x22] sm:$0xff]
    %v1906 = vld [vmem:[#allocation3 + $0x32] sm:$0xff]
    %v1907 = vld [vmem:[#allocation3 + $0x42] sm:$0xff]
    %v1908 = vld [vmem:[#allocation3 + $0x52] sm:$0xff]
    %v1909 = vld [vmem:[#allocation3 + $0x62] sm:$0xff]
    %v1910 = vld [vmem:[#allocation3 + $0x72] sm:$0xff]
    %v1911 = vld [vmem:[#allocation3 + $0x82] sm:$0xff]
    %v1912 = vld [vmem:[#allocation3 + $0x92] sm:$0xff]
    %v1913 = vld [vmem:[#allocation3 + $0xa2] sm:$0xff]
    %v1914 = vld [vmem:[#allocation3 + $0xb2] sm:$0xff]
    %v1915 = vld [vmem:[#allocation3 + $0xc2] sm:$0xff]
    %v1916 = vld [vmem:[#allocation3 + $0xd2] sm:$0xff]
    %v1917 = vld [vmem:[#allocation3 + $0xe2] sm:$0xff]
    %v1918 = vld [vmem:[#allocation3 + $0xf2] sm:$0xff]
    %v1919 = vld [vmem:[#allocation3 + $0x102] sm:$0xff]
    %v1920 = vld [vmem:[#allocation3 + $0x112] sm:$0xff]
    %v1921 = vld [vmem:[#allocation3 + $0x122] sm:$0xff]
    %v1922 = vld [vmem:[#allocation3 + $0x132] sm:$0xff]
    %v1923 = vld [vmem:[#allocation3 + $0x142] sm:$0xff]
    %v1924 = vld [vmem:[#allocation3 + $0x152] sm:$0xff]
    %v1925 = vld [vmem:[#allocation3 + $0x162] sm:$0xff]
    %v1926 = vld [vmem:[#allocation3 + $0x172] sm:$0xff]
    %v1927 = vld [vmem:[#allocation3 + $0x182] sm:$0xff]
    %v1928 = vld [vmem:[#allocation3 + $0x192] sm:$0xff]
    %v1929 = vld [vmem:[#allocation3 + $0x1a2] sm:$0xff]
    %v1930 = vld [vmem:[#allocation3 + $0x1b2] sm:$0xff]
    %v1931 = vld [vmem:[#allocation3 + $0x1c2] sm:$0xff]
    %v1932 = vld [vmem:[#allocation3 + $0x1d2] sm:$0xff]
    %v1933 = vld [vmem:[#allocation3 + $0x1e2] sm:$0xff]
    %v1934 = vld [vmem:[#allocation3 + $0x1f2] sm:$0xff]
    %s1935 = scalar_lea.vmem [#allocation10], 256
    %v1936 = vld [vmem:[%s1935] sm:$0xff]
    %v1937 = vld [vmem:[%s1935 + $0x8] sm:$0xff]
    %v1938 = vld [vmem:[%s1935 + $0x10] sm:$0xff]
    %v1939 = vld [vmem:[%s1935 + $0x18] sm:$0xff]
    %v1940 = vld [vmem:[%s1935 + $0x20] sm:$0xff]
    %v1941 = vld [vmem:[%s1935 + $0x28] sm:$0xff]
    %v1942 = vld [vmem:[%s1935 + $0x30] sm:$0xff]
    %v1943 = vld [vmem:[%s1935 + $0x38] sm:$0xff]
    %v1944 = vld [vmem:[%s1935 + $0x40] sm:$0xff]
    %v1945 = vld [vmem:[%s1935 + $0x48] sm:$0xff]
    %v1946 = vld [vmem:[%s1935 + $0x50] sm:$0xff]
    %v1947 = vld [vmem:[%s1935 + $0x58] sm:$0xff]
    %v1948 = vld [vmem:[%s1935 + $0x60] sm:$0xff]
    %v1949 = vld [vmem:[%s1935 + $0x68] sm:$0xff]
    %v1950 = vld [vmem:[%s1935 + $0x70] sm:$0xff]
    %v1951 = vld [vmem:[%s1935 + $0x78] sm:$0xff]
    %1952 = vmatprep.subr.mxu0 0.0
    %1953 = vmatpush1.msra.mxu0 %v1936
    %1954 = vmatprep.subr.mxu0 0.0
    %1955 = vmatpush1.msra.mxu0 %v1937
    %1956 = vmatprep.subr.mxu0 0.0
    %1957 = vmatpush1.msra.mxu0 %v1938
    %1958 = vmatprep.subr.mxu0 0.0
    %1959 = vmatpush1.msra.mxu0 %v1939
    %1960 = vmatprep.subr.mxu0 0.0
    %1961 = vmatpush1.msra.mxu0 %v1940
    %1962 = vmatprep.subr.mxu0 0.0
    %1963 = vmatpush1.msra.mxu0 %v1941
    %1964 = vmatprep.subr.mxu0 0.0
    %1965 = vmatpush1.msra.mxu0 %v1942
    %1966 = vmatprep.subr.mxu0 0.0
    %1967 = vmatpush1.msra.mxu0 %v1943
    %1968 = vmatprep.subr.mxu0 0.0
    %1969 = vmatpush1.msra.mxu0 %v1944
    %1970 = vmatprep.subr.mxu0 0.0
    %1971 = vmatpush1.msra.mxu0 %v1945
    %1972 = vmatprep.subr.mxu0 0.0
    %1973 = vmatpush1.msra.mxu0 %v1946
    %1974 = vmatprep.subr.mxu0 0.0
    %1975 = vmatpush1.msra.mxu0 %v1947
    %1976 = vmatprep.subr.mxu0 0.0
    %1977 = vmatpush1.msra.mxu0 %v1948
    %1978 = vmatprep.subr.mxu0 0.0
    %1979 = vmatpush1.msra.mxu0 %v1949
    %1980 = vmatprep.subr.mxu0 0.0
    %1981 = vmatpush1.msra.mxu0 %v1950
    %1982 = vmatprep.subr.mxu0 0.0
    %1983 = vmatpush1.msra.mxu0 %v1951
    %1984 = vmatprep.subr.mxu0 0.0
    %1985 = vmatpush1.msra.mxu0 0.0
    %1986 = vmatprep.subr.mxu0 0.0
    %1987 = vmatpush1.msra.mxu0 0.0
    %1988 = vmatprep.subr.mxu0 0.0
    %1989 = vmatpush1.msra.mxu0 0.0
    %1990 = vmatprep.subr.mxu0 0.0
    %1991 = vmatpush1.msra.mxu0 0.0
    %1992 = vmatprep.subr.mxu0 0.0
    %1993 = vmatpush1.msra.mxu0 0.0
    %1994 = vmatprep.subr.mxu0 0.0
    %1995 = vmatpush1.msra.mxu0 0.0
    %1996 = vmatprep.subr.mxu0 0.0
    %1997 = vmatpush1.msra.mxu0 0.0
    %1998 = vmatprep.subr.mxu0 0.0
    %1999 = vmatpush1.msra.mxu0 0.0
    %2000 = vmatprep.subr.mxu0 0.0
    %2001 = vmatpush1.msra.mxu0 0.0
    %2002 = vmatprep.subr.mxu0 0.0
    %2003 = vmatpush1.msra.mxu0 0.0
    %2004 = vmatprep.subr.mxu0 0.0
    %2005 = vmatpush1.msra.mxu0 0.0
    %2006 = vmatprep.subr.mxu0 0.0
    %2007 = vmatpush1.msra.mxu0 0.0
    %2008 = vmatprep.subr.mxu0 0.0
    %2009 = vmatpush1.msra.mxu0 0.0
    %2010 = vmatprep.subr.mxu0 0.0
    %2011 = vmatpush1.msra.mxu0 0.0
    %2012 = vmatprep.subr.mxu0 0.0
    %2013 = vmatpush1.msra.mxu0 0.0
    %2014 = vmatprep.subr.mxu0 0.0
    %2015 = vmatpush1.msra.mxu0 0.0
    %2016 = vmatprep.mubr.f32.mxu0 0.0
    %2017 = vmatmul.mubr.f32.gmra.mrb[0].mxu0 %v1903
    %v2018 = vpop.f32.mrb[0].mxu0
    %v2019 = vadd.f32 0.0, %v2018
    %v2020 = vpop.f32.mrb[0].mxu0
    %2021 = vmatprep.mubr.f32.mxu0 0.0
    %2022 = vmatmul.mubr.f32.gmra.mrb[0].mxu0 %v1904
    %v2023 = vpop.f32.mrb[0].mxu0
    %v2024 = vadd.f32 0.0, %v2023
    %v2025 = vpop.f32.mrb[0].mxu0
    %2026 = vmatprep.mubr.f32.mxu0 0.0
    %2027 = vmatmul.mubr.f32.gmra.mrb[0].mxu0 %v1905
    %v2028 = vpop.f32.mrb[0].mxu0
    %v2029 = vadd.f32 0.0, %v2028
    %v2030 = vpop.f32.mrb[0].mxu0
    %2031 = vmatprep.mubr.f32.mxu0 0.0
    %2032 = vmatmul.mubr.f32.gmra.mrb[0].mxu0 %v1906
    %v2033 = vpop.f32.mrb[0].mxu0
    %v2034 = vadd.f32 0.0, %v2033
    %v2035 = vpop.f32.mrb[0].mxu0
    %2036 = vmatprep.mubr.f32.mxu0 0.0
    %2037 = vmatmul.mubr.f32.gmra.mrb[0].mxu0 %v1907
    %v2038 = vpop.f32.mrb[0].mxu0
    %v2039 = vadd.f32 0.0, %v2038
    %v2040 = vpop.f32.mrb[0].mxu0
    %2041 = vmatprep.mubr.f32.mxu0 0.0
    %2042 = vmatmul.mubr.f32.gmra.mrb[0].mxu0 %v1908
    %v2043 = vpop.f32.mrb[0].mxu0
    %v2044 = vadd.f32 0.0, %v2043
    %v2045 = vpop.f32.mrb[0].mxu0
    %2046 = vmatprep.mubr.f32.mxu0 0.0
    %2047 = vmatmul.mubr.f32.gmra.mrb[0].mxu0 %v1909
    %v2048 = vpop.f32.mrb[0].mxu0
    %v2049 = vadd.f32 0.0, %v2048
    %v2050 = vpop.f32.mrb[0].mxu0
    %2051 = vmatprep.mubr.f32.mxu0 0.0
    %2052 = vmatmul.mubr.f32.gmra.mrb[0].mxu0 %v1910
    %v2053 = vpop.f32.mrb[0].mxu0
    %v2054 = vadd.f32 0.0, %v2053
    %v2055 = vpop.f32.mrb[0].mxu0
    %2056 = vmatprep.mubr.f32.mxu0 0.0
    %2057 = vmatmul.mubr.f32.gmra.mrb[0].mxu0 %v1911
    %v2058 = vpop.f32.mrb[0].mxu0
    %v2059 = vadd.f32 0.0, %v2058
    %v2060 = vpop.f32.mrb[0].mxu0
    %2061 = vmatprep.mubr.f32.mxu0 0.0
    %2062 = vmatmul.mubr.f32.gmra.mrb[0].mxu0 %v1912
    %v2063 = vpop.f32.mrb[0].mxu0
    %v2064 = vadd.f32 0.0, %v2063
    %v2065 = vpop.f32.mrb[0].mxu0
    %2066 = vmatprep.mubr.f32.mxu0 0.0
    %2067 = vmatmul.mubr.f32.gmra.mrb[0].mxu0 %v1913
    %v2068 = vpop.f32.mrb[0].mxu0
    %v2069 = vadd.f32 0.0, %v2068
    %v2070 = vpop.f32.mrb[0].mxu0
    %2071 = vmatprep.mubr.f32.mxu0 0.0
    %2072 = vmatmul.mubr.f32.gmra.mrb[0].mxu0 %v1914
    %v2073 = vpop.f32.mrb[0].mxu0
    %v2074 = vadd.f32 0.0, %v2073
    %v2075 = vpop.f32.mrb[0].mxu0
    %2076 = vmatprep.mubr.f32.mxu0 0.0
    %2077 = vmatmul.mubr.f32.gmra.mrb[0].mxu0 %v1915
    %v2078 = vpop.f32.mrb[0].mxu0
    %v2079 = vadd.f32 0.0, %v2078
    %v2080 = vpop.f32.mrb[0].mxu0
    %2081 = vmatprep.mubr.f32.mxu0 0.0
    %2082 = vmatmul.mubr.f32.gmra.mrb[0].mxu0 %v1916
    %v2083 = vpop.f32.mrb[0].mxu0
    %v2084 = vadd.f32 0.0, %v2083
    %v2085 = vpop.f32.mrb[0].mxu0
    %2086 = vmatprep.mubr.f32.mxu0 0.0
    %2087 = vmatmul.mubr.f32.gmra.mrb[0].mxu0 %v1917
    %v2088 = vpop.f32.mrb[0].mxu0
    %v2089 = vadd.f32 0.0, %v2088
    %v2090 = vpop.f32.mrb[0].mxu0
    %2091 = vmatprep.mubr.f32.mxu0 0.0
    %2092 = vmatmul.mubr.f32.gmra.mrb[0].mxu0 %v1918
    %v2093 = vpop.f32.mrb[0].mxu0
    %v2094 = vadd.f32 0.0, %v2093
    %v2095 = vpop.f32.mrb[0].mxu0
    %2096 = vmatprep.mubr.f32.mxu0 0.0
    %2097 = vmatmul.mubr.f32.gmra.mrb[0].mxu0 %v1919
    %v2098 = vpop.f32.mrb[0].mxu0
    %v2099 = vadd.f32 0.0, %v2098
    %v2100 = vpop.f32.mrb[0].mxu0
    %2101 = vmatprep.mubr.f32.mxu0 0.0
    %2102 = vmatmul.mubr.f32.gmra.mrb[0].mxu0 %v1920
    %v2103 = vpop.f32.mrb[0].mxu0
    %v2104 = vadd.f32 0.0, %v2103
    %v2105 = vpop.f32.mrb[0].mxu0
    %2106 = vmatprep.mubr.f32.mxu0 0.0
    %2107 = vmatmul.mubr.f32.gmra.mrb[0].mxu0 %v1921
    %v2108 = vpop.f32.mrb[0].mxu0
    %v2109 = vadd.f32 0.0, %v2108
    %v2110 = vpop.f32.mrb[0].mxu0
    %2111 = vmatprep.mubr.f32.mxu0 0.0
    %2112 = vmatmul.mubr.f32.gmra.mrb[0].mxu0 %v1922
    %v2113 = vpop.f32.mrb[0].mxu0
    %v2114 = vadd.f32 0.0, %v2113
    %v2115 = vpop.f32.mrb[0].mxu0
    %2116 = vmatprep.mubr.f32.mxu0 0.0
    %2117 = vmatmul.mubr.f32.gmra.mrb[0].mxu0 %v1923
    %v2118 = vpop.f32.mrb[0].mxu0
    %v2119 = vadd.f32 0.0, %v2118
    %v2120 = vpop.f32.mrb[0].mxu0
    %2121 = vmatprep.mubr.f32.mxu0 0.0
    %2122 = vmatmul.mubr.f32.gmra.mrb[0].mxu0 %v1924
    %v2123 = vpop.f32.mrb[0].mxu0
    %v2124 = vadd.f32 0.0, %v2123
    %v2125 = vpop.f32.mrb[0].mxu0
    %2126 = vmatprep.mubr.f32.mxu0 0.0
    %2127 = vmatmul.mubr.f32.gmra.mrb[0].mxu0 %v1925
    %v2128 = vpop.f32.mrb[0].mxu0
    %v2129 = vadd.f32 0.0, %v2128
    %v2130 = vpop.f32.mrb[0].mxu0
    %2131 = vmatprep.mubr.f32.mxu0 0.0
    %2132 = vmatmul.mubr.f32.gmra.mrb[0].mxu0 %v1926
    %v2133 = vpop.f32.mrb[0].mxu0
    %v2134 = vadd.f32 0.0, %v2133
    %v2135 = vpop.f32.mrb[0].mxu0
    %2136 = vmatprep.mubr.f32.mxu0 0.0
    %2137 = vmatmul.mubr.f32.gmra.mrb[0].mxu0 %v1927
    %v2138 = vpop.f32.mrb[0].mxu0
    %v2139 = vadd.f32 0.0, %v2138
    %v2140 = vpop.f32.mrb[0].mxu0
    %2141 = vmatprep.mubr.f32.mxu0 0.0
    %2142 = vmatmul.mubr.f32.gmra.mrb[0].mxu0 %v1928
    %v2143 = vpop.f32.mrb[0].mxu0
    %v2144 = vadd.f32 0.0, %v2143
    %v2145 = vpop.f32.mrb[0].mxu0
    %2146 = vmatprep.mubr.f32.mxu0 0.0
    %2147 = vmatmul.mubr.f32.gmra.mrb[0].mxu0 %v1929
    %v2148 = vpop.f32.mrb[0].mxu0
    %v2149 = vadd.f32 0.0, %v2148
    %v2150 = vpop.f32.mrb[0].mxu0
    %2151 = vmatprep.mubr.f32.mxu0 0.0
    %2152 = vmatmul.mubr.f32.gmra.mrb[0].mxu0 %v1930
    %v2153 = vpop.f32.mrb[0].mxu0
    %v2154 = vadd.f32 0.0, %v2153
    %v2155 = vpop.f32.mrb[0].mxu0
    %2156 = vmatprep.mubr.f32.mxu0 0.0
    %2157 = vmatmul.mubr.f32.gmra.mrb[0].mxu0 %v1931
    %v2158 = vpop.f32.mrb[0].mxu0
    %v2159 = vadd.f32 0.0, %v2158
    %v2160 = vpop.f32.mrb[0].mxu0
    %2161 = vmatprep.mubr.f32.mxu0 0.0
    %2162 = vmatmul.mubr.f32.gmra.mrb[0].mxu0 %v1932
    %v2163 = vpop.f32.mrb[0].mxu0
    %v2164 = vadd.f32 0.0, %v2163
    %v2165 = vpop.f32.mrb[0].mxu0
    %2166 = vmatprep.mubr.f32.mxu0 0.0
    %2167 = vmatmul.mubr.f32.gmra.mrb[0].mxu0 %v1933
    %v2168 = vpop.f32.mrb[0].mxu0
    %v2169 = vadd.f32 0.0, %v2168
    %v2170 = vpop.f32.mrb[0].mxu0
    %2171 = vmatprep.mubr.f32.mxu0 0.0
    %2172 = vmatmul.mubr.f32.gmra.mrb[0].mxu0 %v1934
    %v2173 = vpop.f32.mrb[0].mxu0
    %v2174 = vadd.f32 0.0, %v2173
    %v2175 = vpop.f32.mrb[0].mxu0
    %2176 = vdwg.mxu0
    %v2177 = vadd.f32 %v1745, %v2019
    %v2178 = vadd.f32 %v1750, %v2024
    %v2179 = vadd.f32 %v1755, %v2029
    %v2180 = vadd.f32 %v1760, %v2034
    %v2181 = vadd.f32 %v1765, %v2039
    %v2182 = vadd.f32 %v1770, %v2044
    %v2183 = vadd.f32 %v1775, %v2049
    %v2184 = vadd.f32 %v1780, %v2054
    %v2185 = vadd.f32 %v1785, %v2059
    %v2186 = vadd.f32 %v1790, %v2064
    %v2187 = vadd.f32 %v1795, %v2069
    %v2188 = vadd.f32 %v1800, %v2074
    %v2189 = vadd.f32 %v1805, %v2079
    %v2190 = vadd.f32 %v1810, %v2084
    %v2191 = vadd.f32 %v1815, %v2089
    %v2192 = vadd.f32 %v1820, %v2094
    %v2193 = vadd.f32 %v1825, %v2099
    %v2194 = vadd.f32 %v1830, %v2104
    %v2195 = vadd.f32 %v1835, %v2109
    %v2196 = vadd.f32 %v1840, %v2114
    %v2197 = vadd.f32 %v1845, %v2119
    %v2198 = vadd.f32 %v1850, %v2124
    %v2199 = vadd.f32 %v1855, %v2129
    %v2200 = vadd.f32 %v1860, %v2134
    %v2201 = vadd.f32 %v1865, %v2139
    %v2202 = vadd.f32 %v1870, %v2144
    %v2203 = vadd.f32 %v1875, %v2149
    %v2204 = vadd.f32 %v1880, %v2154
    %v2205 = vadd.f32 %v1885, %v2159
    %v2206 = vadd.f32 %v1890, %v2164
    %v2207 = vadd.f32 %v1895, %v2169
    %v2208 = vadd.f32 %v1900, %v2174
    %v2209 = vld [vmem:[%s5] sm:$0x1]
    %v2211 = vlaneseq
    %v2212 = vshrl.u32 %v2211, 7
    %v2213 = vsub.s32 0, %v2212
    %v2214 = vrot.slane %v2209, %v2213
    %v2216 = vadd.f32 %v2177, %v2214
    %v2217 = vadd.f32 %v2178, %v2214
    %v2218 = vadd.f32 %v2179, %v2214
    %v2219 = vadd.f32 %v2180, %v2214
    %v2220 = vadd.f32 %v2181, %v2214
    %v2221 = vadd.f32 %v2182, %v2214
    %v2222 = vadd.f32 %v2183, %v2214
    %v2223 = vadd.f32 %v2184, %v2214
    %v2224 = vadd.f32 %v2185, %v2214
    %v2225 = vadd.f32 %v2186, %v2214
    %v2226 = vadd.f32 %v2187, %v2214
    %v2227 = vadd.f32 %v2188, %v2214
    %v2228 = vadd.f32 %v2189, %v2214
    %v2229 = vadd.f32 %v2190, %v2214
    %v2230 = vadd.f32 %v2191, %v2214
    %v2231 = vadd.f32 %v2192, %v2214
    %v2232 = vadd.f32 %v2193, %v2214
    %v2233 = vadd.f32 %v2194, %v2214
    %v2234 = vadd.f32 %v2195, %v2214
    %v2235 = vadd.f32 %v2196, %v2214
    %v2236 = vadd.f32 %v2197, %v2214
    %v2237 = vadd.f32 %v2198, %v2214
    %v2238 = vadd.f32 %v2199, %v2214
    %v2239 = vadd.f32 %v2200, %v2214
    %v2240 = vadd.f32 %v2201, %v2214
    %v2241 = vadd.f32 %v2202, %v2214
    %v2242 = vadd.f32 %v2203, %v2214
    %v2243 = vadd.f32 %v2204, %v2214
    %v2244 = vadd.f32 %v2205, %v2214
    %v2245 = vadd.f32 %v2206, %v2214
    %v2246 = vadd.f32 %v2207, %v2214
    %v2247 = vadd.f32 %v2208, %v2214
    %v2248 = vmax.f32 %v2216, 0.0
    %v2249 = vmax.f32 %v2217, 0.0
    %v2250 = vmax.f32 %v2218, 0.0
    %v2251 = vmax.f32 %v2219, 0.0
    %v2252 = vmax.f32 %v2220, 0.0
    %v2253 = vmax.f32 %v2221, 0.0
    %v2254 = vmax.f32 %v2222, 0.0
    %v2255 = vmax.f32 %v2223, 0.0
    %v2256 = vmax.f32 %v2224, 0.0
    %v2257 = vmax.f32 %v2225, 0.0
    %v2258 = vmax.f32 %v2226, 0.0
    %v2259 = vmax.f32 %v2227, 0.0
    %v2260 = vmax.f32 %v2228, 0.0
    %v2261 = vmax.f32 %v2229, 0.0
    %v2262 = vmax.f32 %v2230, 0.0
    %v2263 = vmax.f32 %v2231, 0.0
    %v2264 = vmax.f32 %v2232, 0.0
    %v2265 = vmax.f32 %v2233, 0.0
    %v2266 = vmax.f32 %v2234, 0.0
    %v2267 = vmax.f32 %v2235, 0.0
    %v2268 = vmax.f32 %v2236, 0.0
    %v2269 = vmax.f32 %v2237, 0.0
    %v2270 = vmax.f32 %v2238, 0.0
    %v2271 = vmax.f32 %v2239, 0.0
    %v2272 = vmax.f32 %v2240, 0.0
    %v2273 = vmax.f32 %v2241, 0.0
    %v2274 = vmax.f32 %v2242, 0.0
    %v2275 = vmax.f32 %v2243, 0.0
    %v2276 = vmax.f32 %v2244, 0.0
    %v2277 = vmax.f32 %v2245, 0.0
    %v2278 = vmax.f32 %v2246, 0.0
    %v2279 = vmax.f32 %v2247, 0.0
    %vm2280 = vcmask 1046528
    %v2281 = vsel %vm2280, %v2248, -inf
    %v2282 = vrot.slane %v2281, 4
    %v2283 = vmax.f32 %v2281, %v2282
    %v2284 = vrot.slane %v2283, 2
    %v2285 = vmax.f32 %v2283, %v2284
    %v2286 = vrot.slane %v2285, 1
    %v2287 = vmax.f32 %v2285, %v2286
    %v2288 = vsel %vm2280, %v2249, -inf
    %v2289 = vrot.slane %v2288, 4
    %v2290 = vmax.f32 %v2288, %v2289
    %v2291 = vrot.slane %v2290, 2
    %v2292 = vmax.f32 %v2290, %v2291
    %v2293 = vrot.slane %v2292, 1
    %v2294 = vmax.f32 %v2292, %v2293
    %v2295 = vsel %vm2280, %v2250, -inf
    %v2296 = vrot.slane %v2295, 4
    %v2297 = vmax.f32 %v2295, %v2296
    %v2298 = vrot.slane %v2297, 2
    %v2299 = vmax.f32 %v2297, %v2298
    %v2300 = vrot.slane %v2299, 1
    %v2301 = vmax.f32 %v2299, %v2300
    %v2302 = vsel %vm2280, %v2251, -inf
    %v2303 = vrot.slane %v2302, 4
    %v2304 = vmax.f32 %v2302, %v2303
    %v2305 = vrot.slane %v2304, 2
    %v2306 = vmax.f32 %v2304, %v2305
    %v2307 = vrot.slane %v2306, 1
    %v2308 = vmax.f32 %v2306, %v2307
    %v2309 = vsel %vm2280, %v2252, -inf
    %v2310 = vrot.slane %v2309, 4
    %v2311 = vmax.f32 %v2309, %v2310
    %v2312 = vrot.slane %v2311, 2
    %v2313 = vmax.f32 %v2311, %v2312
    %v2314 = vrot.slane %v2313, 1
    %v2315 = vmax.f32 %v2313, %v2314
    %v2316 = vsel %vm2280, %v2253, -inf
    %v2317 = vrot.slane %v2316, 4
    %v2318 = vmax.f32 %v2316, %v2317
    %v2319 = vrot.slane %v2318, 2
    %v2320 = vmax.f32 %v2318, %v2319
    %v2321 = vrot.slane %v2320, 1
    %v2322 = vmax.f32 %v2320, %v2321
    %v2323 = vsel %vm2280, %v2254, -inf
    %v2324 = vrot.slane %v2323, 4
    %v2325 = vmax.f32 %v2323, %v2324
    %v2326 = vrot.slane %v2325, 2
    %v2327 = vmax.f32 %v2325, %v2326
    %v2328 = vrot.slane %v2327, 1
    %v2329 = vmax.f32 %v2327, %v2328
    %v2330 = vsel %vm2280, %v2255, -inf
    %v2331 = vrot.slane %v2330, 4
    %v2332 = vmax.f32 %v2330, %v2331
    %v2333 = vrot.slane %v2332, 2
    %v2334 = vmax.f32 %v2332, %v2333
    %v2335 = vrot.slane %v2334, 1
    %v2336 = vmax.f32 %v2334, %v2335
    %v2337 = vsel %vm2280, %v2256, -inf
    %v2338 = vrot.slane %v2337, 4
    %v2339 = vmax.f32 %v2337, %v2338
    %v2340 = vrot.slane %v2339, 2
    %v2341 = vmax.f32 %v2339, %v2340
    %v2342 = vrot.slane %v2341, 1
    %v2343 = vmax.f32 %v2341, %v2342
    %v2344 = vsel %vm2280, %v2257, -inf
    %v2345 = vrot.slane %v2344, 4
    %v2346 = vmax.f32 %v2344, %v2345
    %v2347 = vrot.slane %v2346, 2
    %v2348 = vmax.f32 %v2346, %v2347
    %v2349 = vrot.slane %v2348, 1
    %v2350 = vmax.f32 %v2348, %v2349
    %v2351 = vsel %vm2280, %v2258, -inf
    %v2352 = vrot.slane %v2351, 4
    %v2353 = vmax.f32 %v2351, %v2352
    %v2354 = vrot.slane %v2353, 2
    %v2355 = vmax.f32 %v2353, %v2354
    %v2356 = vrot.slane %v2355, 1
    %v2357 = vmax.f32 %v2355, %v2356
    %v2358 = vsel %vm2280, %v2259, -inf
    %v2359 = vrot.slane %v2358, 4
    %v2360 = vmax.f32 %v2358, %v2359
    %v2361 = vrot.slane %v2360, 2
    %v2362 = vmax.f32 %v2360, %v2361
    %v2363 = vrot.slane %v2362, 1
    %v2364 = vmax.f32 %v2362, %v2363
    %v2365 = vsel %vm2280, %v2260, -inf
    %v2366 = vrot.slane %v2365, 4
    %v2367 = vmax.f32 %v2365, %v2366
    %v2368 = vrot.slane %v2367, 2
    %v2369 = vmax.f32 %v2367, %v2368
    %v2370 = vrot.slane %v2369, 1
    %v2371 = vmax.f32 %v2369, %v2370
    %v2372 = vsel %vm2280, %v2261, -inf
    %v2373 = vrot.slane %v2372, 4
    %v2374 = vmax.f32 %v2372, %v2373
    %v2375 = vrot.slane %v2374, 2
    %v2376 = vmax.f32 %v2374, %v2375
    %v2377 = vrot.slane %v2376, 1
    %v2378 = vmax.f32 %v2376, %v2377
    %v2379 = vsel %vm2280, %v2262, -inf
    %v2380 = vrot.slane %v2379, 4
    %v2381 = vmax.f32 %v2379, %v2380
    %v2382 = vrot.slane %v2381, 2
    %v2383 = vmax.f32 %v2381, %v2382
    %v2384 = vrot.slane %v2383, 1
    %v2385 = vmax.f32 %v2383, %v2384
    %v2386 = vsel %vm2280, %v2263, -inf
    %v2387 = vrot.slane %v2386, 4
    %v2388 = vmax.f32 %v2386, %v2387
    %v2389 = vrot.slane %v2388, 2
    %v2390 = vmax.f32 %v2388, %v2389
    %v2391 = vrot.slane %v2390, 1
    %v2392 = vmax.f32 %v2390, %v2391
    %v2393 = vsel %vm2280, %v2264, -inf
    %v2394 = vrot.slane %v2393, 4
    %v2395 = vmax.f32 %v2393, %v2394
    %v2396 = vrot.slane %v2395, 2
    %v2397 = vmax.f32 %v2395, %v2396
    %v2398 = vrot.slane %v2397, 1
    %v2399 = vmax.f32 %v2397, %v2398
    %v2400 = vsel %vm2280, %v2265, -inf
    %v2401 = vrot.slane %v2400, 4
    %v2402 = vmax.f32 %v2400, %v2401
    %v2403 = vrot.slane %v2402, 2
    %v2404 = vmax.f32 %v2402, %v2403
    %v2405 = vrot.slane %v2404, 1
    %v2406 = vmax.f32 %v2404, %v2405
    %v2407 = vsel %vm2280, %v2266, -inf
    %v2408 = vrot.slane %v2407, 4
    %v2409 = vmax.f32 %v2407, %v2408
    %v2410 = vrot.slane %v2409, 2
    %v2411 = vmax.f32 %v2409, %v2410
    %v2412 = vrot.slane %v2411, 1
    %v2413 = vmax.f32 %v2411, %v2412
    %v2414 = vsel %vm2280, %v2267, -inf
    %v2415 = vrot.slane %v2414, 4
    %v2416 = vmax.f32 %v2414, %v2415
    %v2417 = vrot.slane %v2416, 2
    %v2418 = vmax.f32 %v2416, %v2417
    %v2419 = vrot.slane %v2418, 1
    %v2420 = vmax.f32 %v2418, %v2419
    %v2421 = vsel %vm2280, %v2268, -inf
    %v2422 = vrot.slane %v2421, 4
    %v2423 = vmax.f32 %v2421, %v2422
    %v2424 = vrot.slane %v2423, 2
    %v2425 = vmax.f32 %v2423, %v2424
    %v2426 = vrot.slane %v2425, 1
    %v2427 = vmax.f32 %v2425, %v2426
    %v2428 = vsel %vm2280, %v2269, -inf
    %v2429 = vrot.slane %v2428, 4
    %v2430 = vmax.f32 %v2428, %v2429
    %v2431 = vrot.slane %v2430, 2
    %v2432 = vmax.f32 %v2430, %v2431
    %v2433 = vrot.slane %v2432, 1
    %v2434 = vmax.f32 %v2432, %v2433
    %v2435 = vsel %vm2280, %v2270, -inf
    %v2436 = vrot.slane %v2435, 4
    %v2437 = vmax.f32 %v2435, %v2436
    %v2438 = vrot.slane %v2437, 2
    %v2439 = vmax.f32 %v2437, %v2438
    %v2440 = vrot.slane %v2439, 1
    %v2441 = vmax.f32 %v2439, %v2440
    %v2442 = vsel %vm2280, %v2271, -inf
    %v2443 = vrot.slane %v2442, 4
    %v2444 = vmax.f32 %v2442, %v2443
    %v2445 = vrot.slane %v2444, 2
    %v2446 = vmax.f32 %v2444, %v2445
    %v2447 = vrot.slane %v2446, 1
    %v2448 = vmax.f32 %v2446, %v2447
    %v2449 = vsel %vm2280, %v2272, -inf
    %v2450 = vrot.slane %v2449, 4
    %v2451 = vmax.f32 %v2449, %v2450
    %v2452 = vrot.slane %v2451, 2
    %v2453 = vmax.f32 %v2451, %v2452
    %v2454 = vrot.slane %v2453, 1
    %v2455 = vmax.f32 %v2453, %v2454
    %v2456 = vsel %vm2280, %v2273, -inf
    %v2457 = vrot.slane %v2456, 4
    %v2458 = vmax.f32 %v2456, %v2457
    %v2459 = vrot.slane %v2458, 2
    %v2460 = vmax.f32 %v2458, %v2459
    %v2461 = vrot.slane %v2460, 1
    %v2462 = vmax.f32 %v2460, %v2461
    %v2463 = vsel %vm2280, %v2274, -inf
    %v2464 = vrot.slane %v2463, 4
    %v2465 = vmax.f32 %v2463, %v2464
    %v2466 = vrot.slane %v2465, 2
    %v2467 = vmax.f32 %v2465, %v2466
    %v2468 = vrot.slane %v2467, 1
    %v2469 = vmax.f32 %v2467, %v2468
    %v2470 = vsel %vm2280, %v2275, -inf
    %v2471 = vrot.slane %v2470, 4
    %v2472 = vmax.f32 %v2470, %v2471
    %v2473 = vrot.slane %v2472, 2
    %v2474 = vmax.f32 %v2472, %v2473
    %v2475 = vrot.slane %v2474, 1
    %v2476 = vmax.f32 %v2474, %v2475
    %v2477 = vsel %vm2280, %v2276, -inf
    %v2478 = vrot.slane %v2477, 4
    %v2479 = vmax.f32 %v2477, %v2478
    %v2480 = vrot.slane %v2479, 2
    %v2481 = vmax.f32 %v2479, %v2480
    %v2482 = vrot.slane %v2481, 1
    %v2483 = vmax.f32 %v2481, %v2482
    %v2484 = vsel %vm2280, %v2277, -inf
    %v2485 = vrot.slane %v2484, 4
    %v2486 = vmax.f32 %v2484, %v2485
    %v2487 = vrot.slane %v2486, 2
    %v2488 = vmax.f32 %v2486, %v2487
    %v2489 = vrot.slane %v2488, 1
    %v2490 = vmax.f32 %v2488, %v2489
    %v2491 = vsel %vm2280, %v2278, -inf
    %v2492 = vrot.slane %v2491, 4
    %v2493 = vmax.f32 %v2491, %v2492
    %v2494 = vrot.slane %v2493, 2
    %v2495 = vmax.f32 %v2493, %v2494
    %v2496 = vrot.slane %v2495, 1
    %v2497 = vmax.f32 %v2495, %v2496
    %v2498 = vsel %vm2280, %v2279, -inf
    %v2499 = vrot.slane %v2498, 4
    %v2500 = vmax.f32 %v2498, %v2499
    %v2501 = vrot.slane %v2500, 2
    %v2502 = vmax.f32 %v2500, %v2501
    %v2503 = vrot.slane %v2502, 1
    %v2504 = vmax.f32 %v2502, %v2503
    %v2505 = vmul.f32 %v2287, %v2399
    %v2506 = vmul.f32 %v2294, %v2406
    %v2507 = vmul.f32 %v2301, %v2413
    %v2508 = vmul.f32 %v2308, %v2420
    %v2509 = vmul.f32 %v2315, %v2427
    %v2510 = vmul.f32 %v2322, %v2434
    %v2511 = vmul.f32 %v2329, %v2441
    %v2512 = vmul.f32 %v2336, %v2448
    %v2513 = vmul.f32 %v2343, %v2455
    %v2514 = vmul.f32 %v2350, %v2462
    %v2515 = vmul.f32 %v2357, %v2469
    %v2516 = vmul.f32 %v2364, %v2476
    %v2517 = vmul.f32 %v2371, %v2483
    %v2518 = vmul.f32 %v2378, %v2490
    %v2519 = vmul.f32 %v2385, %v2497
    %v2520 = vmul.f32 %v2392, %v2504
    %vm2537 = vcmask 1041409
    %v2538 = vsel %vm2537, %v2506, %v2505
    %vm2539 = vcmask 1042434
    %v2540 = vsel %vm2539, %v2507, %v2538
    %vm2541 = vcmask 1043459
    %v2542 = vsel %vm2541, %v2508, %v2540
    %vm2543 = vcmask 1044484
    %v2544 = vsel %vm2543, %v2509, %v2542
    %vm2545 = vcmask 1045509
    %v2546 = vsel %vm2545, %v2510, %v2544
    %vm2547 = vcmask 1046534
    %v2548 = vsel %vm2547, %v2511, %v2546
    %vm2549 = vcmask 1047559
    %v2550 = vsel %vm2549, %v2512, %v2548
    %v2551 = vsel %vm2537, %v2514, %v2513
    %v2552 = vsel %vm2539, %v2515, %v2551
    %v2553 = vsel %vm2541, %v2516, %v2552
    %v2554 = vsel %vm2543, %v2517, %v2553
    %v2555 = vsel %vm2545, %v2518, %v2554
    %v2556 = vsel %vm2547, %v2519, %v2555
    %v2557 = vsel %vm2549, %v2520, %v2556
    %2560 = vadd.xlane.f32.xlu0 %v2550
    %v2561 = vpop.xlane.xlu0 %2560
    %2562 = vadd.xlane.f32.xlu0 %v2557
    %v2563 = vpop.xlane.xlu0 %2562
    %v2564 = vmul.f32 %v2287, %v2287
    %v2565 = vmul.f32 %v2294, %v2294
    %v2566 = vmul.f32 %v2301, %v2301
    %v2567 = vmul.f32 %v2308, %v2308
    %v2568 = vmul.f32 %v2315, %v2315
    %v2569 = vmul.f32 %v2322, %v2322
    %v2570 = vmul.f32 %v2329, %v2329
    %v2571 = vmul.f32 %v2336, %v2336
    %v2572 = vmul.f32 %v2343, %v2343
    %v2573 = vmul.f32 %v2350, %v2350
    %v2574 = vmul.f32 %v2357, %v2357
    %v2575 = vmul.f32 %v2364, %v2364
    %v2576 = vmul.f32 %v2371, %v2371
    %v2577 = vmul.f32 %v2378, %v2378
    %v2578 = vmul.f32 %v2385, %v2385
    %v2579 = vmul.f32 %v2392, %v2392
    %v2596 = vsel %vm2537, %v2565, %v2564
    %v2597 = vsel %vm2539, %v2566, %v2596
    %v2598 = vsel %vm2541, %v2567, %v2597
    %v2599 = vsel %vm2543, %v2568, %v2598
    %v2600 = vsel %vm2545, %v2569, %v2599
    %v2601 = vsel %vm2547, %v2570, %v2600
    %v2602 = vsel %vm2549, %v2571, %v2601
    %v2603 = vsel %vm2537, %v2573, %v2572
    %v2604 = vsel %vm2539, %v2574, %v2603
    %v2605 = vsel %vm2541, %v2575, %v2604
    %v2606 = vsel %vm2543, %v2576, %v2605
    %v2607 = vsel %vm2545, %v2577, %v2606
    %v2608 = vsel %vm2547, %v2578, %v2607
    %v2609 = vsel %vm2549, %v2579, %v2608
    %2612 = vadd.xlane.f32.xlu0 %v2602
    %v2613 = vpop.xlane.xlu0 %2612
    %2614 = vadd.xlane.f32.xlu0 %v2609
    %v2615 = vpop.xlane.xlu0 %2614
    %v2616 = vmax.f32 %v2613, 1e-16
    %v2617 = vmax.f32 %v2615, 1e-16
    %v2618 = vmul.f32 %v2399, %v2399
    %v2619 = vmul.f32 %v2406, %v2406
    %v2620 = vmul.f32 %v2413, %v2413
    %v2621 = vmul.f32 %v2420, %v2420
    %v2622 = vmul.f32 %v2427, %v2427
    %v2623 = vmul.f32 %v2434, %v2434
    %v2624 = vmul.f32 %v2441, %v2441
    %v2625 = vmul.f32 %v2448, %v2448
    %v2626 = vmul.f32 %v2455, %v2455
    %v2627 = vmul.f32 %v2462, %v2462
    %v2628 = vmul.f32 %v2469, %v2469
    %v2629 = vmul.f32 %v2476, %v2476
    %v2630 = vmul.f32 %v2483, %v2483
    %v2631 = vmul.f32 %v2490, %v2490
    %v2632 = vmul.f32 %v2497, %v2497
    %v2633 = vmul.f32 %v2504, %v2504
    %v2650 = vsel %vm2537, %v2619, %v2618
    %v2651 = vsel %vm2539, %v2620, %v2650
    %v2652 = vsel %vm2541, %v2621, %v2651
    %v2653 = vsel %vm2543, %v2622, %v2652
    %v2654 = vsel %vm2545, %v2623, %v2653
    %v2655 = vsel %vm2547, %v2624, %v2654
    %v2656 = vsel %vm2549, %v2625, %v2655
    %v2657 = vsel %vm2537, %v2627, %v2626
    %v2658 = vsel %vm2539, %v2628, %v2657
    %v2659 = vsel %vm2541, %v2629, %v2658
    %v2660 = vsel %vm2543, %v2630, %v2659
    %v2661 = vsel %vm2545, %v2631, %v2660
    %v2662 = vsel %vm2547, %v2632, %v2661
    %v2663 = vsel %vm2549, %v2633, %v2662
    %2666 = vadd.xlane.f32.xlu0 %v2656
    %v2667 = vpop.xlane.xlu0 %2666
    %2668 = vadd.xlane.f32.xlu0 %v2663
    %v2669 = vpop.xlane.xlu0 %2668
    %v2670 = vmax.f32 %v2667, 1e-16
    %v2671 = vmax.f32 %v2669, 1e-16
    %v2672 = vmul.f32 %v2616, %v2670
    %v2673 = vmul.f32 %v2617, %v2671
    %v2674 = vrsqrt.pop %v2672
    %v2675 = vrsqrt.pop %v2673
    %v2676 = vmul.f32 %v2561, %v2674
    %v2677 = vmul.f32 %v2563, %v2675
    %v2678 = vmax.f32 %v2676, 0.0
    %v2679 = vmax.f32 %v2677, 0.0
    %v2680 = vmin.f32 %v2678, 1.0
    %v2681 = vmin.f32 %v2679, 1.0
    %v2684 = vlaneseq
    %v2685 = vand.u32 %v2684, 127
    %v2686 = vlaneseq
    %v2687 = vshrl.u32 %v2686, 7
    %v2688 = vsub.s32 %v2685, %v2687
    %v2689 = vrot.slane %v2680, %v2688
    %v2690 = vadd.s32 %v2685, 4294967288
    %v2691 = vlaneseq
    %v2692 = vshrl.u32 %v2691, 7
    %v2693 = vsub.s32 %v2690, %v2692
    %v2694 = vrot.slane %v2681, %v2693
    %vm2695 = vcmask 130112
    %v2696 = vsel %vm2695, %v2694, %v2689
    %vm2698 = vcmask 122880
    %2699 = vst.msk [vmem:[#allocation12] sm:$0x1] %vm2698, %v2696
    // Predicated region
    $region42: #{tpu_custom_call.1} parent=1 // pred_check
      _
    $region43: #{tpu_custom_call.1} parent=1 // pred_check_branch
      %2701 = sbr.rel (0) target = $region45
    $region44: #{tpu_custom_call.1} parent=1 // pred_region
      %s2703 = ssub.s32 16, 16
      %2704 = vsyncadd [#allocation6], %s2703
      %s2706 = sshll.u32 [#allocation12], 4
      %s2707 = int_to_ptr.vmem [resolvable:$true] %s2706
      %2709 = dma.vmem_to_hbm [thread:$0]  %s2707, 16, %s6, [#allocation6]
    $region45: #{tpu_custom_call.1} parent=1 // pred_fallthru
      _
    // Predicated region
    $region46: #{tpu_custom_call.1} parent=1 // pred_check
      _
    $region47: #{tpu_custom_call.1} parent=1 // pred_check_branch
      %2711 = sbr.rel (0) target = $region49
    $region48: #{tpu_custom_call.1} parent=1 // pred_region
      %2712 = dma.done [#allocation6], 16
    $region49: #{tpu_custom_call.1} parent=1 // pred_fallthru
      _
    %2713 = vsyncpa [#allocation5], 1
    %2714 = vsyncpa [#allocation8], 1
    %2715 = vsyncpa [#allocation11], 1
    %2716 = vsyncpa [#allocation6], 1

</llo_original>
